<compile_context>
chip_gen: v7x
topology: tpu7x:2x2x1
jax: 0.10.0
libtpu: 0.0.40
codegen_flags: <defaults>
</compile_context>

<pallas_src>
import functools

import jax
import jax.numpy as jnp
from jax import lax
from jax.experimental import pallas as pl
from jax.experimental.pallas import tpu as pltpu


def _hashnet_kernel(coeff_ref, x_ref, table_ref, out_ref, *, output_bits, num_hashes):
    # coeff_ref: (H,)       int32 (SMEM) -- multiply-shift coefficients (uint32 bit pattern)
    # x_ref:     (1, TN)    int32 (VMEM) -- lane-dense tile of flattened input ids
    # table_ref: (NB, 128)  f32   (VMEM) -- reachable table entries, row r = slots [128r, 128(r+1))
    # out_ref:   (H, TN)    f32   (VMEM) -- out[j, n] = table[h_j(x[n])]
    shift = 32 - output_bits
    nb = table_ref.shape[0]

    x = x_ref[...]                                              # (1, TN) int32
    tbl = table_ref[...]                                        # (NB, 128) f32
    shift_v = jnp.full(x.shape, shift, dtype=jnp.int32)         # splat constant (folded)
    lane_iota = lax.broadcasted_iota(jnp.int32, (128, 1), 0)    # (128, 1): broadcasts over lanes

    for j in range(num_hashes):                                 # static, small loop over hashes
        a_j = coeff_ref[j]                                      # int32 scalar from SMEM
        # int32 multiply wraps mod 2^32 -> same bit pattern as the uint32 product; the
        # logical right shift then reproduces the unsigned multiply-shift hash exactly.
        prod = x * a_j                                          # (1, TN) int32
        h = lax.shift_right_logical(prod, shift_v)              # (1, TN), in [0, 2**output_bits)
        lo = h & 127                                            # lane index within a table row
        hi = h >> 7                                             # table row index, in [0, NB)

        # Gather-as-matmul on the MXU (K=128): partials[r, n] = table2d[r, lo[n]].
        onehot = jnp.where(lo == lane_iota, jnp.float32(1.0), jnp.float32(0.0))   # (128, TN)
        partials = jnp.dot(tbl, onehot,
                           preferred_element_type=jnp.float32,
                           precision=lax.Precision.HIGHEST)                        # (NB, TN)

        # Pick the right row per lane with an NB-way compare/select on hi.
        res = partials[0:1, :]
        for r in range(1, nb):
            res = jnp.where(hi == r, partials[r:r + 1, :], res)

        # Lane-dense store of this hash's row (no concatenate relayout).
        out_ref[j:j + 1, :] = res.astype(out_ref.dtype)


def _auto_lane_tile(n, *, max_tile=4096, min_tile=256, target_steps=4):
    # Aim for >= target_steps grid steps (megacore balance on v7x), cap the tile so the
    # in-kernel (128, TN) one-hot temporaries stay well under the scoped VMEM budget.
    t = -(-n // target_steps)                 # cdiv
    t = ((t + 127) // 128) * 128              # lane-width multiple
    return int(max(min_tile, min(max_tile, t)))


def hashnet_embedding(x, hash_coeffs, table, *, output_bits, lane_tile=None):
    """x: (B, F) int ids; hash_coeffs: (H,) uint32; table: (size,) f32 -> (B, F, H) f32."""
    B, F = x.shape
    H = int(hash_coeffs.shape[0])
    size = int(table.shape[0])
    hash_range = 1 << output_bits
    assert hash_range <= size, "hash.range must be <= table size"

    n_blocks = max(1, hash_range // 128)
    # TODO(synk): for n_blocks > 64 (hash_range > 8192) the hi-select loop and VMEM-resident
    #             table stop making sense -- switch to the HBM/DMA-gather path instead.
    assert n_blocks <= 64, "two-level VMEM gather targets hash ranges <= 8192"

    N = B * F
    if lane_tile is None:
        lane_tile = _auto_lane_tile(N)
    assert lane_tile % 128 == 0, "lane_tile must be a multiple of 128 (lane width)"

    n_pad = (-N) % lane_tile
    x_flat = x.reshape(-1).astype(jnp.int32)
    if n_pad:
        # Padded ids hash to valid slots; the padded outputs are sliced off below.
        x_flat = jnp.pad(x_flat, (0, n_pad))
    n_total = N + n_pad

    x2 = x_flat.reshape(1, n_total)                                   # lane-dense input layout
    coeffs_i32 = lax.bitcast_convert_type(hash_coeffs.astype(jnp.uint32), jnp.int32)

    padded_range = n_blocks * 128
    tbl_rows = table[:hash_range].astype(jnp.float32)                 # only the reachable slots
    if padded_range > hash_range:                                     # output_bits < 7 case
        tbl_rows = jnp.pad(tbl_rows, (0, padded_range - hash_range))
    tbl2 = tbl_rows.reshape(n_blocks, 128)                            # (RANGE/128, 128) in VMEM

    out = pl.pallas_call(
        functools.partial(_hashnet_kernel, output_bits=output_bits, num_hashes=H),
        out_shape=jax.ShapeDtypeStruct((H, n_total), jnp.float32),
        grid_spec=pltpu.PrefetchScalarGridSpec(
            num_scalar_prefetch=1,                                    # hash coefficients -> SMEM
            grid=(n_total // lane_tile,),
            in_specs=[
                pl.BlockSpec((1, lane_tile), lambda i, c: (0, i)),    # id tile (lane-dense)
                pl.BlockSpec((n_blocks, 128), lambda i, c: (0, 0)),   # table (replicated, VMEM)
            ],
            out_specs=pl.BlockSpec((H, lane_tile), lambda i, c: (0, i)),
        ),
        compiler_params=pltpu.CompilerParams(
            dimension_semantics=("parallel",),
            vmem_limit_bytes=32 * 1024 * 1024,                        # safe on v7x's 64 MiB VMEM
        ),
    )(coeffs_i32, x2, tbl2)

    out = out[:, :N]                    # drop padding
    # TODO(synk): layout plumbing back to torch's hs.shape; consumers taking (H, B, F) can skip.
    return out.T.reshape(B, F, H).astype(table.dtype)


if __name__ == "__main__":
    # Module hyper-parameters (small, consistent with HashNetEmbedding.__init__)
    num_hashes = 4            # hash.num_hashes
    output_bits = 10          # hash.range = 1024  -> table2d is (8, 128)
    size = 1024               # table size, hash.range <= size
    batch, features = 8, 128  # 1024 flattened lookups -> 4 grid steps of 256 lanes

    key = jax.random.PRNGKey(0)
    k_x, k_a, k_t = jax.random.split(key, 3)

    # Inputs: integer ids
    x = jax.random.randint(k_x, (batch, features), 0, 1_000_000, dtype=jnp.int32)
    # Hash coefficients: random odd 32-bit ints (deterministic)
    hash_coeffs = jax.random.bits(k_a, (num_hashes,), dtype=jnp.uint32) | jnp.uint32(1)
    # Table: nn.init.uniform_(table, -num_hashes**-0.5, num_hashes**-0.5)
    bound = num_hashes ** (-0.5)
    table = jax.random.uniform(k_t, (size,), dtype=jnp.float32, minval=-bound, maxval=bound)

    out = hashnet_embedding(x, hash_coeffs, table, output_bits=output_bits)
    out = jax.block_until_ready(out)

    # Pure-JAX reference (same unsigned 32-bit multiply-shift hash, jnp.take gather)
    shift = 32 - output_bits
    hs_ref = ((x.astype(jnp.uint32)[..., None] * hash_coeffs[None, None, :]) >> shift).astype(jnp.int32)
    expected = jnp.take(table, hs_ref.reshape(-1), axis=0).reshape(hs_ref.shape)

    assert out.shape == (batch, features, num_hashes)
    assert out.dtype == jnp.float32
    assert jnp.allclose(out, expected, atol=1e-6, rtol=1e-6), "mismatch vs reference"

    print("KERNEL_OK")
</pallas_src>

<mosaic_0001>
module attributes {stable_mosaic.version = 11 : i64} {
  func.func @_hashnet_kernel(%arg0: i32, %arg1: memref<4xi32, #tpu.memory_space<smem>>, %arg2: memref<1x256xi32, #tpu.memory_space<vmem>>, %arg3: memref<8x128xf32, #tpu.memory_space<vmem>>, %arg4: memref<4x256xf32, #tpu.memory_space<vmem>>) attributes {dimension_semantics = [#tpu.dimension_semantics<parallel>], iteration_bounds = array<i64: 4>, scalar_prefetch = 1 : i64, scratch_operands = 0 : i64, tpu.core_type = #tpu.core_type<tc>, window_params = [{transform_indices = @transform_0, window_bounds = array<i64: 1, 256>}, {pipeline_mode = #tpu.pipeline_mode<synchronous>, transform_indices = @transform_1, window_bounds = array<i64: 8, 128>}, {transform_indices = @transform_2, window_bounds = array<i64: 4, 256>}]} {
    %c0 = arith.constant 0 : index
    %c0_0 = arith.constant 0 : index
    %0 = vector.load %arg2[%c0, %c0_0] : memref<1x256xi32, #tpu.memory_space<vmem>>, vector<1x256xi32>
    %c0_1 = arith.constant 0 : index
    %c0_2 = arith.constant 0 : index
    %1 = vector.load %arg3[%c0_1, %c0_2] : memref<8x128xf32, #tpu.memory_space<vmem>>, vector<8x128xf32>
    %c22_i32 = arith.constant 22 : i32
    %2 = vector.broadcast %c22_i32 : i32 to vector<1x256xi32>
    %3 = tpu.iota {dimensions = array<i32: 0>} : vector<128x1xi32>
    %c0_3 = arith.constant 0 : index
    %4 = memref.load %arg1[%c0_3] : memref<4xi32, #tpu.memory_space<smem>>
    %5 = vector.broadcast %4 : i32 to vector<1x256xi32>
    %6 = arith.muli %0, %5 : vector<1x256xi32>
    %7 = arith.shrui %6, %2 : vector<1x256xi32>
    %c127_i32 = arith.constant 127 : i32
    %8 = vector.broadcast %c127_i32 : i32 to vector<1x256xi32>
    %9 = arith.andi %7, %8 : vector<1x256xi32>
    %c7_i32 = arith.constant 7 : i32
    %10 = vector.broadcast %c7_i32 : i32 to vector<1x256xi32>
    %11 = arith.shrsi %7, %10 : vector<1x256xi32>
    %12 = vector.broadcast %9 : vector<1x256xi32> to vector<128x256xi32>
    %13 = vector.broadcast %3 : vector<128x1xi32> to vector<128x256xi32>
    %14 = arith.cmpi eq, %12, %13 : vector<128x256xi32>
    %cst = arith.constant 1.000000e+00 : f32
    %cst_4 = arith.constant 0.000000e+00 : f32
    %15 = vector.broadcast %cst : f32 to vector<128x256xf32>
    %16 = vector.broadcast %cst_4 : f32 to vector<128x256xf32>
    %17 = arith.select %14, %15, %16 : vector<128x256xi1>, vector<128x256xf32>
    %cst_5 = arith.constant dense<0.000000e+00> : vector<8x256xf32>
    %18 = tpu.matmul %1, %17, %cst_5 {dimension_numbers = #tpu.dot_dimension_numbers<[1], [0], [0], [1], [0, 0, 1, 1], [], []>, precision = #tpu.contract_precision<fp32>} : vector<8x128xf32>, vector<128x256xf32>, vector<8x256xf32> -> vector<8x256xf32>
    %19 = vector.extract_strided_slice %18 {offsets = [0, 0], sizes = [1, 256], strides = [1, 1]} : vector<8x256xf32> to vector<1x256xf32>
    %c1_i32 = arith.constant 1 : i32
    %20 = vector.broadcast %c1_i32 : i32 to vector<1x256xi32>
    %21 = arith.cmpi eq, %11, %20 : vector<1x256xi32>
    %22 = vector.extract_strided_slice %18 {offsets = [1, 0], sizes = [1, 256], strides = [1, 1]} : vector<8x256xf32> to vector<1x256xf32>
    %23 = arith.select %21, %22, %19 : vector<1x256xi1>, vector<1x256xf32>
    %c2_i32 = arith.constant 2 : i32
    %24 = vector.broadcast %c2_i32 : i32 to vector<1x256xi32>
    %25 = arith.cmpi eq, %11, %24 : vector<1x256xi32>
    %26 = vector.extract_strided_slice %18 {offsets = [2, 0], sizes = [1, 256], strides = [1, 1]} : vector<8x256xf32> to vector<1x256xf32>
    %27 = arith.select %25, %26, %23 : vector<1x256xi1>, vector<1x256xf32>
    %c3_i32 = arith.constant 3 : i32
    %28 = vector.broadcast %c3_i32 : i32 to vector<1x256xi32>
    %29 = arith.cmpi eq, %11, %28 : vector<1x256xi32>
    %30 = vector.extract_strided_slice %18 {offsets = [3, 0], sizes = [1, 256], strides = [1, 1]} : vector<8x256xf32> to vector<1x256xf32>
    %31 = arith.select %29, %30, %27 : vector<1x256xi1>, vector<1x256xf32>
    %c4_i32 = arith.constant 4 : i32
    %32 = vector.broadcast %c4_i32 : i32 to vector<1x256xi32>
    %33 = arith.cmpi eq, %11, %32 : vector<1x256xi32>
    %34 = vector.extract_strided_slice %18 {offsets = [4, 0], sizes = [1, 256], strides = [1, 1]} : vector<8x256xf32> to vector<1x256xf32>
    %35 = arith.select %33, %34, %31 : vector<1x256xi1>, vector<1x256xf32>
    %c5_i32 = arith.constant 5 : i32
    %36 = vector.broadcast %c5_i32 : i32 to vector<1x256xi32>
    %37 = arith.cmpi eq, %11, %36 : vector<1x256xi32>
    %38 = vector.extract_strided_slice %18 {offsets = [5, 0], sizes = [1, 256], strides = [1, 1]} : vector<8x256xf32> to vector<1x256xf32>
    %39 = arith.select %37, %38, %35 : vector<1x256xi1>, vector<1x256xf32>
    %c6_i32 = arith.constant 6 : i32
    %40 = vector.broadcast %c6_i32 : i32 to vector<1x256xi32>
    %41 = arith.cmpi eq, %11, %40 : vector<1x256xi32>
    %42 = vector.extract_strided_slice %18 {offsets = [6, 0], sizes = [1, 256], strides = [1, 1]} : vector<8x256xf32> to vector<1x256xf32>
    %43 = arith.select %41, %42, %39 : vector<1x256xi1>, vector<1x256xf32>
    %c7_i32_6 = arith.constant 7 : i32
    %44 = vector.broadcast %c7_i32_6 : i32 to vector<1x256xi32>
    %45 = arith.cmpi eq, %11, %44 : vector<1x256xi32>
    %46 = vector.extract_strided_slice %18 {offsets = [7, 0], sizes = [1, 256], strides = [1, 1]} : vector<8x256xf32> to vector<1x256xf32>
    %47 = arith.select %45, %46, %43 : vector<1x256xi1>, vector<1x256xf32>
    %c0_7 = arith.constant 0 : index
    %c0_8 = arith.constant 0 : index
    %48 = vector.load %arg4[%c0_7, %c0_8] : memref<4x256xf32, #tpu.memory_space<vmem>>, vector<1x256xf32>
    tpu.vector_store %arg4[%c0_7, %c0_8], %47 {strides = array<i32>} : memref<4x256xf32, #tpu.memory_space<vmem>>, vector<1x256xf32>,
    %c1 = arith.constant 1 : index
    %49 = memref.load %arg1[%c1] : memref<4xi32, #tpu.memory_space<smem>>
    %50 = vector.broadcast %49 : i32 to vector<1x256xi32>
    %51 = arith.muli %0, %50 : vector<1x256xi32>
    %52 = arith.shrui %51, %2 : vector<1x256xi32>
    %c127_i32_9 = arith.constant 127 : i32
    %53 = vector.broadcast %c127_i32_9 : i32 to vector<1x256xi32>
    %54 = arith.andi %52, %53 : vector<1x256xi32>
    %c7_i32_10 = arith.constant 7 : i32
    %55 = vector.broadcast %c7_i32_10 : i32 to vector<1x256xi32>
    %56 = arith.shrsi %52, %55 : vector<1x256xi32>
    %57 = vector.broadcast %54 : vector<1x256xi32> to vector<128x256xi32>
    %58 = vector.broadcast %3 : vector<128x1xi32> to vector<128x256xi32>
    %59 = arith.cmpi eq, %57, %58 : vector<128x256xi32>
    %cst_11 = arith.constant 1.000000e+00 : f32
    %cst_12 = arith.constant 0.000000e+00 : f32
    %60 = vector.broadcast %cst_11 : f32 to vector<128x256xf32>
    %61 = vector.broadcast %cst_12 : f32 to vector<128x256xf32>
    %62 = arith.select %59, %60, %61 : vector<128x256xi1>, vector<128x256xf32>
    %cst_13 = arith.constant dense<0.000000e+00> : vector<8x256xf32>
    %63 = tpu.matmul %1, %62, %cst_13 {dimension_numbers = #tpu.dot_dimension_numbers<[1], [0], [0], [1], [0, 0, 1, 1], [], []>, precision = #tpu.contract_precision<fp32>} : vector<8x128xf32>, vector<128x256xf32>, vector<8x256xf32> -> vector<8x256xf32>
    %64 = vector.extract_strided_slice %63 {offsets = [0, 0], sizes = [1, 256], strides = [1, 1]} : vector<8x256xf32> to vector<1x256xf32>
    %c1_i32_14 = arith.constant 1 : i32
    %65 = vector.broadcast %c1_i32_14 : i32 to vector<1x256xi32>
    %66 = arith.cmpi eq, %56, %65 : vector<1x256xi32>
    %67 = vector.extract_strided_slice %63 {offsets = [1, 0], sizes = [1, 256], strides = [1, 1]} : vector<8x256xf32> to vector<1x256xf32>
    %68 = arith.select %66, %67, %64 : vector<1x256xi1>, vector<1x256xf32>
    %c2_i32_15 = arith.constant 2 : i32
    %69 = vector.broadcast %c2_i32_15 : i32 to vector<1x256xi32>
    %70 = arith.cmpi eq, %56, %69 : vector<1x256xi32>
    %71 = vector.extract_strided_slice %63 {offsets = [2, 0], sizes = [1, 256], strides = [1, 1]} : vector<8x256xf32> to vector<1x256xf32>
    %72 = arith.select %70, %71, %68 : vector<1x256xi1>, vector<1x256xf32>
    %c3_i32_16 = arith.constant 3 : i32
    %73 = vector.broadcast %c3_i32_16 : i32 to vector<1x256xi32>
    %74 = arith.cmpi eq, %56, %73 : vector<1x256xi32>
    %75 = vector.extract_strided_slice %63 {offsets = [3, 0], sizes = [1, 256], strides = [1, 1]} : vector<8x256xf32> to vector<1x256xf32>
    %76 = arith.select %74, %75, %72 : vector<1x256xi1>, vector<1x256xf32>
    %c4_i32_17 = arith.constant 4 : i32
    %77 = vector.broadcast %c4_i32_17 : i32 to vector<1x256xi32>
    %78 = arith.cmpi eq, %56, %77 : vector<1x256xi32>
    %79 = vector.extract_strided_slice %63 {offsets = [4, 0], sizes = [1, 256], strides = [1, 1]} : vector<8x256xf32> to vector<1x256xf32>
    %80 = arith.select %78, %79, %76 : vector<1x256xi1>, vector<1x256xf32>
    %c5_i32_18 = arith.constant 5 : i32
    %81 = vector.broadcast %c5_i32_18 : i32 to vector<1x256xi32>
    %82 = arith.cmpi eq, %56, %81 : vector<1x256xi32>
    %83 = vector.extract_strided_slice %63 {offsets = [5, 0], sizes = [1, 256], strides = [1, 1]} : vector<8x256xf32> to vector<1x256xf32>
    %84 = arith.select %82, %83, %80 : vector<1x256xi1>, vector<1x256xf32>
    %c6_i32_19 = arith.constant 6 : i32
    %85 = vector.broadcast %c6_i32_19 : i32 to vector<1x256xi32>
    %86 = arith.cmpi eq, %56, %85 : vector<1x256xi32>
    %87 = vector.extract_strided_slice %63 {offsets = [6, 0], sizes = [1, 256], strides = [1, 1]} : vector<8x256xf32> to vector<1x256xf32>
    %88 = arith.select %86, %87, %84 : vector<1x256xi1>, vector<1x256xf32>
    %c7_i32_20 = arith.constant 7 : i32
    %89 = vector.broadcast %c7_i32_20 : i32 to vector<1x256xi32>
    %90 = arith.cmpi eq, %56, %89 : vector<1x256xi32>
    %91 = vector.extract_strided_slice %63 {offsets = [7, 0], sizes = [1, 256], strides = [1, 1]} : vector<8x256xf32> to vector<1x256xf32>
    %92 = arith.select %90, %91, %88 : vector<1x256xi1>, vector<1x256xf32>
    %c1_21 = arith.constant 1 : index
    %c0_22 = arith.constant 0 : index
    %93 = vector.load %arg4[%c1_21, %c0_22] : memref<4x256xf32, #tpu.memory_space<vmem>>, vector<1x256xf32>
    tpu.vector_store %arg4[%c1_21, %c0_22], %92 {strides = array<i32>} : memref<4x256xf32, #tpu.memory_space<vmem>>, vector<1x256xf32>,
    %c2 = arith.constant 2 : index
    %94 = memref.load %arg1[%c2] : memref<4xi32, #tpu.memory_space<smem>>
    %95 = vector.broadcast %94 : i32 to vector<1x256xi32>
    %96 = arith.muli %0, %95 : vector<1x256xi32>
    %97 = arith.shrui %96, %2 : vector<1x256xi32>
    %c127_i32_23 = arith.constant 127 : i32
    %98 = vector.broadcast %c127_i32_23 : i32 to vector<1x256xi32>
    %99 = arith.andi %97, %98 : vector<1x256xi32>
    %c7_i32_24 = arith.constant 7 : i32
    %100 = vector.broadcast %c7_i32_24 : i32 to vector<1x256xi32>
    %101 = arith.shrsi %97, %100 : vector<1x256xi32>
    %102 = vector.broadcast %99 : vector<1x256xi32> to vector<128x256xi32>
    %103 = vector.broadcast %3 : vector<128x1xi32> to vector<128x256xi32>
    %104 = arith.cmpi eq, %102, %103 : vector<128x256xi32>
    %cst_25 = arith.constant 1.000000e+00 : f32
    %cst_26 = arith.constant 0.000000e+00 : f32
    %105 = vector.broadcast %cst_25 : f32 to vector<128x256xf32>
    %106 = vector.broadcast %cst_26 : f32 to vector<128x256xf32>
    %107 = arith.select %104, %105, %106 : vector<128x256xi1>, vector<128x256xf32>
    %cst_27 = arith.constant dense<0.000000e+00> : vector<8x256xf32>
    %108 = tpu.matmul %1, %107, %cst_27 {dimension_numbers = #tpu.dot_dimension_numbers<[1], [0], [0], [1], [0, 0, 1, 1], [], []>, precision = #tpu.contract_precision<fp32>} : vector<8x128xf32>, vector<128x256xf32>, vector<8x256xf32> -> vector<8x256xf32>
    %109 = vector.extract_strided_slice %108 {offsets = [0, 0], sizes = [1, 256], strides = [1, 1]} : vector<8x256xf32> to vector<1x256xf32>
    %c1_i32_28 = arith.constant 1 : i32
    %110 = vector.broadcast %c1_i32_28 : i32 to vector<1x256xi32>
    %111 = arith.cmpi eq, %101, %110 : vector<1x256xi32>
    %112 = vector.extract_strided_slice %108 {offsets = [1, 0], sizes = [1, 256], strides = [1, 1]} : vector<8x256xf32> to vector<1x256xf32>
    %113 = arith.select %111, %112, %109 : vector<1x256xi1>, vector<1x256xf32>
    %c2_i32_29 = arith.constant 2 : i32
    %114 = vector.broadcast %c2_i32_29 : i32 to vector<1x256xi32>
    %115 = arith.cmpi eq, %101, %114 : vector<1x256xi32>
    %116 = vector.extract_strided_slice %108 {offsets = [2, 0], sizes = [1, 256], strides = [1, 1]} : vector<8x256xf32> to vector<1x256xf32>
    %117 = arith.select %115, %116, %113 : vector<1x256xi1>, vector<1x256xf32>
    %c3_i32_30 = arith.constant 3 : i32
    %118 = vector.broadcast %c3_i32_30 : i32 to vector<1x256xi32>
    %119 = arith.cmpi eq, %101, %118 : vector<1x256xi32>
    %120 = vector.extract_strided_slice %108 {offsets = [3, 0], sizes = [1, 256], strides = [1, 1]} : vector<8x256xf32> to vector<1x256xf32>
    %121 = arith.select %119, %120, %117 : vector<1x256xi1>, vector<1x256xf32>
    %c4_i32_31 = arith.constant 4 : i32
    %122 = vector.broadcast %c4_i32_31 : i32 to vector<1x256xi32>
    %123 = arith.cmpi eq, %101, %122 : vector<1x256xi32>
    %124 = vector.extract_strided_slice %108 {offsets = [4, 0], sizes = [1, 256], strides = [1, 1]} : vector<8x256xf32> to vector<1x256xf32>
    %125 = arith.select %123, %124, %121 : vector<1x256xi1>, vector<1x256xf32>
    %c5_i32_32 = arith.constant 5 : i32
    %126 = vector.broadcast %c5_i32_32 : i32 to vector<1x256xi32>
    %127 = arith.cmpi eq, %101, %126 : vector<1x256xi32>
    %128 = vector.extract_strided_slice %108 {offsets = [5, 0], sizes = [1, 256], strides = [1, 1]} : vector<8x256xf32> to vector<1x256xf32>
    %129 = arith.select %127, %128, %125 : vector<1x256xi1>, vector<1x256xf32>
    %c6_i32_33 = arith.constant 6 : i32
    %130 = vector.broadcast %c6_i32_33 : i32 to vector<1x256xi32>
    %131 = arith.cmpi eq, %101, %130 : vector<1x256xi32>
    %132 = vector.extract_strided_slice %108 {offsets = [6, 0], sizes = [1, 256], strides = [1, 1]} : vector<8x256xf32> to vector<1x256xf32>
    %133 = arith.select %131, %132, %129 : vector<1x256xi1>, vector<1x256xf32>
    %c7_i32_34 = arith.constant 7 : i32
    %134 = vector.broadcast %c7_i32_34 : i32 to vector<1x256xi32>
    %135 = arith.cmpi eq, %101, %134 : vector<1x256xi32>
    %136 = vector.extract_strided_slice %108 {offsets = [7, 0], sizes = [1, 256], strides = [1, 1]} : vector<8x256xf32> to vector<1x256xf32>
    %137 = arith.select %135, %136, %133 : vector<1x256xi1>, vector<1x256xf32>
    %c2_35 = arith.constant 2 : index
    %c0_36 = arith.constant 0 : index
    %138 = vector.load %arg4[%c2_35, %c0_36] : memref<4x256xf32, #tpu.memory_space<vmem>>, vector<1x256xf32>
    tpu.vector_store %arg4[%c2_35, %c0_36], %137 {strides = array<i32>} : memref<4x256xf32, #tpu.memory_space<vmem>>, vector<1x256xf32>,
    %c3 = arith.constant 3 : index
    %139 = memref.load %arg1[%c3] : memref<4xi32, #tpu.memory_space<smem>>
    %140 = vector.broadcast %139 : i32 to vector<1x256xi32>
    %141 = arith.muli %0, %140 : vector<1x256xi32>
    %142 = arith.shrui %141, %2 : vector<1x256xi32>
    %c127_i32_37 = arith.constant 127 : i32
    %143 = vector.broadcast %c127_i32_37 : i32 to vector<1x256xi32>
    %144 = arith.andi %142, %143 : vector<1x256xi32>
    %c7_i32_38 = arith.constant 7 : i32
    %145 = vector.broadcast %c7_i32_38 : i32 to vector<1x256xi32>
    %146 = arith.shrsi %142, %145 : vector<1x256xi32>
    %147 = vector.broadcast %144 : vector<1x256xi32> to vector<128x256xi32>
    %148 = vector.broadcast %3 : vector<128x1xi32> to vector<128x256xi32>
    %149 = arith.cmpi eq, %147, %148 : vector<128x256xi32>
    %cst_39 = arith.constant 1.000000e+00 : f32
    %cst_40 = arith.constant 0.000000e+00 : f32
    %150 = vector.broadcast %cst_39 : f32 to vector<128x256xf32>
    %151 = vector.broadcast %cst_40 : f32 to vector<128x256xf32>
    %152 = arith.select %149, %150, %151 : vector<128x256xi1>, vector<128x256xf32>
    %cst_41 = arith.constant dense<0.000000e+00> : vector<8x256xf32>
    %153 = tpu.matmul %1, %152, %cst_41 {dimension_numbers = #tpu.dot_dimension_numbers<[1], [0], [0], [1], [0, 0, 1, 1], [], []>, precision = #tpu.contract_precision<fp32>} : vector<8x128xf32>, vector<128x256xf32>, vector<8x256xf32> -> vector<8x256xf32>
    %154 = vector.extract_strided_slice %153 {offsets = [0, 0], sizes = [1, 256], strides = [1, 1]} : vector<8x256xf32> to vector<1x256xf32>
    %c1_i32_42 = arith.constant 1 : i32
    %155 = vector.broadcast %c1_i32_42 : i32 to vector<1x256xi32>
    %156 = arith.cmpi eq, %146, %155 : vector<1x256xi32>
    %157 = vector.extract_strided_slice %153 {offsets = [1, 0], sizes = [1, 256], strides = [1, 1]} : vector<8x256xf32> to vector<1x256xf32>
    %158 = arith.select %156, %157, %154 : vector<1x256xi1>, vector<1x256xf32>
    %c2_i32_43 = arith.constant 2 : i32
    %159 = vector.broadcast %c2_i32_43 : i32 to vector<1x256xi32>
    %160 = arith.cmpi eq, %146, %159 : vector<1x256xi32>
    %161 = vector.extract_strided_slice %153 {offsets = [2, 0], sizes = [1, 256], strides = [1, 1]} : vector<8x256xf32> to vector<1x256xf32>
    %162 = arith.select %160, %161, %158 : vector<1x256xi1>, vector<1x256xf32>
    %c3_i32_44 = arith.constant 3 : i32
    %163 = vector.broadcast %c3_i32_44 : i32 to vector<1x256xi32>
    %164 = arith.cmpi eq, %146, %163 : vector<1x256xi32>
    %165 = vector.extract_strided_slice %153 {offsets = [3, 0], sizes = [1, 256], strides = [1, 1]} : vector<8x256xf32> to vector<1x256xf32>
    %166 = arith.select %164, %165, %162 : vector<1x256xi1>, vector<1x256xf32>
    %c4_i32_45 = arith.constant 4 : i32
    %167 = vector.broadcast %c4_i32_45 : i32 to vector<1x256xi32>
    %168 = arith.cmpi eq, %146, %167 : vector<1x256xi32>
    %169 = vector.extract_strided_slice %153 {offsets = [4, 0], sizes = [1, 256], strides = [1, 1]} : vector<8x256xf32> to vector<1x256xf32>
    %170 = arith.select %168, %169, %166 : vector<1x256xi1>, vector<1x256xf32>
    %c5_i32_46 = arith.constant 5 : i32
    %171 = vector.broadcast %c5_i32_46 : i32 to vector<1x256xi32>
    %172 = arith.cmpi eq, %146, %171 : vector<1x256xi32>
    %173 = vector.extract_strided_slice %153 {offsets = [5, 0], sizes = [1, 256], strides = [1, 1]} : vector<8x256xf32> to vector<1x256xf32>
    %174 = arith.select %172, %173, %170 : vector<1x256xi1>, vector<1x256xf32>
    %c6_i32_47 = arith.constant 6 : i32
    %175 = vector.broadcast %c6_i32_47 : i32 to vector<1x256xi32>
    %176 = arith.cmpi eq, %146, %175 : vector<1x256xi32>
    %177 = vector.extract_strided_slice %153 {offsets = [6, 0], sizes = [1, 256], strides = [1, 1]} : vector<8x256xf32> to vector<1x256xf32>
    %178 = arith.select %176, %177, %174 : vector<1x256xi1>, vector<1x256xf32>
    %c7_i32_48 = arith.constant 7 : i32
    %179 = vector.broadcast %c7_i32_48 : i32 to vector<1x256xi32>
    %180 = arith.cmpi eq, %146, %179 : vector<1x256xi32>
    %181 = vector.extract_strided_slice %153 {offsets = [7, 0], sizes = [1, 256], strides = [1, 1]} : vector<8x256xf32> to vector<1x256xf32>
    %182 = arith.select %180, %181, %178 : vector<1x256xi1>, vector<1x256xf32>
    %c3_49 = arith.constant 3 : index
    %c0_50 = arith.constant 0 : index
    %183 = vector.load %arg4[%c3_49, %c0_50] : memref<4x256xf32, #tpu.memory_space<vmem>>, vector<1x256xf32>
    tpu.vector_store %arg4[%c3_49, %c0_50], %182 {strides = array<i32>} : memref<4x256xf32, #tpu.memory_space<vmem>>, vector<1x256xf32>,
    return
  }
  func.func @transform_0(%arg0: i32, %arg1: memref<4xi32, #tpu.memory_space<smem>>) -> (i32, i32) {
    %c0_i32 = arith.constant 0 : i32
    %c0_i32_0 = arith.constant 0 : i32
    return %c0_i32, %arg0 : i32, i32
  }
  func.func @transform_1(%arg0: i32, %arg1: memref<4xi32, #tpu.memory_space<smem>>) -> (i32, i32) {
    %c0_i32 = arith.constant 0 : i32
    %c0_i32_0 = arith.constant 0 : i32
    %c0_i32_1 = arith.constant 0 : i32
    return %c0_i32, %c0_i32_0 : i32, i32
  }
  func.func @transform_2(%arg0: i32, %arg1: memref<4xi32, #tpu.memory_space<smem>>) -> (i32, i32) {
    %c0_i32 = arith.constant 0 : i32
    %c0_i32_0 = arith.constant 0 : i32
    return %c0_i32, %arg0 : i32, i32
  }
}

</mosaic_0001>

<llo_original>
// kernel: tpu_custom_call.1
$region0: #{tpu_custom_call.1}
  #allocation0 [shape = 'u32[]', space=smem, size = 0x4, offset = 0x4, fixed_abs, tag = 'smem constant byte address 0x4 - core index']
  #allocation1 [shape = 'u32[144,128]{1,0:T(1,128)}', space=vmem, size = 0x12000, scoped, tag = 'internal scratch']
  #allocation2 [shape = 's32[1]{0}', space=sflag, size = 0x4, scoped, tag = 'scoped memory for tpu_custom_call.1']
  #allocation3 [shape = 'u8[512]{0}', space=smem, size = 0x200, scoped, tag = 'prefetched SMEM operand 0']
  %s0 = inlined_call_operand.hbm [shape: s32[4], index: 0, kind: input, shape index: {}]
  %s1 = inlined_call_operand.hbm [shape: s32[1,1024], index: 1, kind: input, shape index: {}]
  %s2 = inlined_call_operand.hbm [shape: f32[8,128], index: 2, kind: input, shape index: {}]
  %s3 = inlined_call_operand.hbm [shape: f32[4,1024], index: 3, kind: output, shape index: {}]
  %s4 = sld [smem:[#allocation0]]
  $region49: #{tpu_custom_call.1} parent=0
    _
  %s6 = ssub.s32 1, %s4
  %s7 = scalar_select 0, %s6, %s4
  %9 = dma.hbm_to_smem %s0, 16, [#allocation3], [#allocation2]
  %10 = dma.done [#allocation2], 16
  %11 = sfence
  $region1: #{tpu_custom_call.1} parent=0
    #allocation4 [shape = 'u8[2048]{0}', space=vmem, size = 0x800, scoped, tag = 'input window, operand 1']
    #allocation5 [shape = 's32[2]{0}', space=sflag, size = 0x8, scoped, tag = 'scoped memory for tpu_custom_call.1']
    #allocation6 [shape = 's32[2]{0}', space=sflag, size = 0x8, scoped, tag = 'scoped memory for tpu_custom_call.1']
    #allocation7 [shape = 'u8[4096]{0}', space=vmem, size = 0x1000, scoped, tag = 'input window, operand 2, single buffered']
    #allocation8 [shape = 's32[1]{0}', space=sflag, size = 0x4, scoped, tag = 'scoped memory for tpu_custom_call.1']
    #allocation9 [shape = 'u8[8192]{0}', space=vmem, size = 0x2000, scoped, tag = 'output window, operand 0']
    %12 = vsyncpa [#allocation5], 0
    %s13 = scalar_lea.sflag [#allocation5], 1
    %14 = vsyncpa %s13, 0
    %15 = vsyncpa [#allocation8], 0
    %16 = vsyncpa [#allocation6], 0
    %s17 = scalar_lea.sflag [#allocation6], 1
    %18 = vsyncpa %s17, 0
    loop: start=0, step=1, limit=6
    $region2: #{tpu_custom_call.1} parent=1 // loop_pre_header
      _
    $region3: #{tpu_custom_call.1} parent=1 // loop_header
      %s20 = sphi 0, %s24
      %p21 = scmp.ge.s32.totalorder %s20, 6
      %s30 = sphi 0, %s32
      %s33 = sphi 0, %s30
      %s34 = sphi 0, %s33
      %s50 = sphi 0, %s34
      %s54 = sphi 0, %s54
      %s56 = sphi 0, %s54
      %s57 = sphi 0, %s56
      %s71 = sphi 0, %s57
      %s77 = sphi 0, %s79
      %s80 = sphi 0, %s77
      %s81 = sphi 0, %s80
      %s97 = sphi 0, %s81
    $region4: #{tpu_custom_call.1} parent=1 // loop_header_branch
      %23 = sbr.rel (%p21) target = $region8
    $region5: #{tpu_custom_call.1} parent=1 // loop_body
      %s25 = ssub.s32 %s20, 1
      %s26 = ssub.s32 %s20, 2
      %s27 = sadd.s32 %s20, 1
      %s28 = ssub.s32 %s20, %s27
      %p29 = scmp.eq.s32.totalorder %s28, 0
      %s31 = sadd.s32 %s30, 1
      %s32 = scalar_select %p29, %s30, %s31
      %p35 = pneg %p29
      %p36 = scmp.eq.s32.totalorder %s20, 3
      %p37 = por %p35, %p36
      %p38 = scmp.ne.s32.totalorder %s30, %s33
      %p39 = scmp.eq.s32.totalorder %s20, 0
      %p40 = por %p38, %p39
      %p41 = scmp.ne.s32.totalorder %s30, %s33
      %p42 = scmp.eq.s32.totalorder %s25, 3
      %p43 = por %p41, %p42
      %p44 = scmp.ne.s32.totalorder %s33, %s34
      %p45 = scmp.eq.s32.totalorder %s25, 0
      %p46 = por %p44, %p45
      %p47 = scmp.ne.s32.totalorder %s33, %s34
      %p48 = scmp.eq.s32.totalorder %s26, 3
      %p49 = por %p47, %p48
      %p51 = scmp.ne.s32.totalorder %s34, %s50
      %p52 = scmp.eq.s32.totalorder %s26, 0
      %p53 = por %p51, %p52
      %s55 = sadd.s32 %s54, 1
      %p58 = scmp.eq.s32.totalorder %s20, 3
      %p59 = scmp.ne.s32.totalorder %s54, %s56
      %p60 = scmp.eq.s32.totalorder %s20, 0
      %p61 = por %p59, %p60
      %p62 = scmp.ne.s32.totalorder %s54, %s56
      %p63 = scmp.eq.s32.totalorder %s25, 3
      %p64 = por %p62, %p63
      %p65 = scmp.ne.s32.totalorder %s56, %s57
      %p66 = scmp.eq.s32.totalorder %s25, 0
      %p67 = por %p65, %p66
      %p68 = scmp.ne.s32.totalorder %s56, %s57
      %p69 = scmp.eq.s32.totalorder %s26, 3
      %p70 = por %p68, %p69
      %p72 = scmp.ne.s32.totalorder %s57, %s71
      %p73 = scmp.eq.s32.totalorder %s26, 0
      %p74 = por %p72, %p73
      %s75 = ssub.s32 %s20, %s27
      %p76 = scmp.eq.s32.totalorder %s75, 0
      %s78 = sadd.s32 %s77, 1
      %s79 = scalar_select %p76, %s77, %s78
      %p82 = pneg %p76
      %p83 = scmp.eq.s32.totalorder %s20, 3
      %p84 = por %p82, %p83
      %p85 = scmp.ne.s32.totalorder %s77, %s80
      %p86 = scmp.eq.s32.totalorder %s20, 0
      %p87 = por %p85, %p86
      %p88 = scmp.ne.s32.totalorder %s77, %s80
      %p89 = scmp.eq.s32.totalorder %s25, 3
      %p90 = por %p88, %p89
      %p91 = scmp.ne.s32.totalorder %s80, %s81
      %p92 = scmp.eq.s32.totalorder %s25, 0
      %p93 = por %p91, %p92
      %p94 = scmp.ne.s32.totalorder %s80, %s81
      %p95 = scmp.eq.s32.totalorder %s26, 3
      %p96 = por %p94, %p95
      %p98 = scmp.ne.s32.totalorder %s81, %s97
      %p99 = scmp.eq.s32.totalorder %s26, 0
      %p100 = por %p98, %p99
      %p101 = scmp.le.s32.totalorder 1, %s20
      %p102 = scmp.lt.s32.totalorder %s20, 5
      %p103 = pnand %p101, %p102
      %p104 = pneg %p103
      // Predicated region
      $region9: #{tpu_custom_call.1} parent=5 // pred_check
        _
      $region10: #{tpu_custom_call.1} parent=5 // pred_check_branch
        %106 = sbr.rel (%p103) target = $region12
      $region11: #{tpu_custom_call.1} parent=5 // pred_region
        %s107 = ssub.s32 %s20, 1
        // Predicated region
        $region13: #{tpu_custom_call.1} parent=11 // pred_check
          %p108 = pneg %p67
        $region14: #{tpu_custom_call.1} parent=11 // pred_check_branch
          %110 = sbr.rel (%p108) target = $region16
        $region15: #{tpu_custom_call.1} parent=11 // pred_region
          %s112 = ssub.s32 128, 128
          %113 = vsyncadd [#allocation8], %s112
          %s115 = sshll.u32 [#allocation7], 4
          %s116 = int_to_ptr.vmem [resolvable:$true] %s115
          %118 = dma.hbm_to_vmem [thread:$0]  %s2, 128, %s116, [#allocation8]
        $region16: #{tpu_custom_call.1} parent=11 // pred_fallthru
          _
      $region12: #{tpu_custom_call.1} parent=5 // pred_fallthru
        _
      %p119 = scmp.lt.s32.totalorder %s20, 4
      // Predicated region
      $region17: #{tpu_custom_call.1} parent=5 // pred_check
        %p120 = pneg %p119
      $region18: #{tpu_custom_call.1} parent=5 // pred_check_branch
        %122 = sbr.rel (%p120) target = $region20
      $region19: #{tpu_custom_call.1} parent=5 // pred_region
        // Predicated region
        $region21: #{tpu_custom_call.1} parent=19 // pred_check
          %p123 = pneg %p40
        $region22: #{tpu_custom_call.1} parent=19 // pred_check_branch
          %125 = sbr.rel (%p123) target = $region24
        $region23: #{tpu_custom_call.1} parent=19 // pred_region
          %s126 = sand.u32 %s30, 1
          %s127 = scalar_lea.sflag [#allocation5], %s126
          %s128 = sand.u32 %s30, 1
          %s129 = smul.addr %s128, 2
          %s130 = scalar_lea.vmem [#allocation4], %s129
          %s131 = smul.u32 2, %s20
          %s133 = ssub.s32 32, 32
          %134 = vsyncadd %s127, %s133
          %s135 = smul.addr %s131, 16
          %s136 = scalar_lea.hbm %s1, %s135
          %s138 = sshll.u32 %s130, 4
          %s139 = int_to_ptr.vmem [resolvable:$true] %s138
          %141 = dma.hbm_to_vmem [thread:$0]  %s136, 32, %s139, %s127
        $region24: #{tpu_custom_call.1} parent=19 // pred_fallthru
          _
      $region20: #{tpu_custom_call.1} parent=5 // pred_fallthru
        _
      %p142 = scmp.le.s32.totalorder 1, %s20
      %p143 = scmp.lt.s32.totalorder %s20, 5
      %p144 = pnand %p142, %p143
      %p145 = pneg %p144
      // Predicated region
      $region25: #{tpu_custom_call.1} parent=5 // pred_check
        _
      $region26: #{tpu_custom_call.1} parent=5 // pred_check_branch
        %147 = sbr.rel (%p144) target = $region28
      $region27: #{tpu_custom_call.1} parent=5 // pred_region
        %s148 = ssub.s32 %s20, 1
        %s149 = sand.u32 %s33, 1
        %s150 = scalar_lea.sflag [#allocation5], %s149
        %s151 = sand.u32 %s33, 1
        %s152 = smul.addr %s151, 2
        %s153 = scalar_lea.vmem [#allocation4], %s152
        // Predicated region
        $region29: #{tpu_custom_call.1} parent=27 // pred_check
          %p154 = pneg %p46
        $region30: #{tpu_custom_call.1} parent=27 // pred_check_branch
          %156 = sbr.rel (%p154) target = $region32
        $region31: #{tpu_custom_call.1} parent=27 // pred_region
          %157 = dma.done %s150, 32
        $region32: #{tpu_custom_call.1} parent=27 // pred_fallthru
          _
        // Predicated region
        $region33: #{tpu_custom_call.1} parent=27 // pred_check
          %p158 = pneg %p67
        $region34: #{tpu_custom_call.1} parent=27 // pred_check_branch
          %160 = sbr.rel (%p158) target = $region36
        $region35: #{tpu_custom_call.1} parent=27 // pred_region
          %161 = dma.done [#allocation8], 128
        $region36: #{tpu_custom_call.1} parent=27 // pred_fallthru
          _
        %s162 = sand.u32 %s33, 1
        %s163 = scalar_lea.sflag [#allocation5], %s162
        %s164 = sand.u32 %s33, 1
        %s165 = smul.addr %s164, 2
        %s166 = scalar_lea.vmem [#allocation4], %s165
        %p167 = pneg %p46
        %p168 = pneg %p43
        %p169 = pneg %p67
        %p170 = pneg %p64
        %p171 = pneg %p93
        %p172 = pneg %p90
        %s173 = sand.u32 %s80, 1
        %s174 = scalar_lea.sflag [#allocation6], %s173
        %s175 = sand.u32 %s80, 1
        %s176 = smul.addr %s175, 8
        %s177 = scalar_lea.vmem [#allocation9], %s176
        %s178 = smul.u32 2, %s25
        %s179 = smul.u32 2, %s25
        %v180 = vld [vmem:[%s153] sm:$0x3]
        %v181 = vld [vmem:[#allocation7] sm:$0xff]
        %v182 = vlaneseq
        %v183 = vshrl.u32 %v182, 7
        %v184 = vadd.s32 %v183, 8
        %v185 = vadd.s32 %v183, 16
        %v186 = vadd.s32 %v183, 24
        %v187 = vadd.s32 %v183, 32
        %v188 = vadd.s32 %v183, 40
        %v189 = vadd.s32 %v183, 48
        %v190 = vadd.s32 %v183, 56
        %v191 = vadd.s32 %v183, 64
        %v192 = vadd.s32 %v183, 72
        %v193 = vadd.s32 %v183, 80
        %v194 = vadd.s32 %v183, 88
        %v195 = vadd.s32 %v183, 96
        %v196 = vadd.s32 %v183, 104
        %v197 = vadd.s32 %v183, 112
        %v198 = vadd.s32 %v183, 120
        %s199 = sld [smem:[#allocation3]]
        %v200 = vstv %s199
        %v201 = vmul.u32 %v180, %v200
        %v202 = vshrl.u32 %v201, 22
        %v203 = vand.u32 %v202, 127
        %v204 = vshra.s32 %v202, 7
        %v205 = vlaneseq
        %v206 = vshrl.u32 %v205, 7
        %v207 = vsub.s32 0, %v206
        %v208 = vrot.slane %v203, %v207
        %v209 = vlaneseq
        %v210 = vshrl.u32 %v209, 7
        %v211 = vsub.s32 1, %v210
        %v212 = vrot.slane %v203, %v211
        %vm213 = vcmp.eq.s32.totalorder %v208, %v183
        %vm214 = vcmp.eq.s32.totalorder %v212, %v183
        %vm215 = vcmp.eq.s32.totalorder %v208, %v184
        %vm216 = vcmp.eq.s32.totalorder %v212, %v184
        %vm217 = vcmp.eq.s32.totalorder %v208, %v185
        %vm218 = vcmp.eq.s32.totalorder %v212, %v185
        %vm219 = vcmp.eq.s32.totalorder %v208, %v186
        %vm220 = vcmp.eq.s32.totalorder %v212, %v186
        %vm221 = vcmp.eq.s32.totalorder %v208, %v187
        %vm222 = vcmp.eq.s32.totalorder %v212, %v187
        %vm223 = vcmp.eq.s32.totalorder %v208, %v188
        %vm224 = vcmp.eq.s32.totalorder %v212, %v188
        %vm225 = vcmp.eq.s32.totalorder %v208, %v189
        %vm226 = vcmp.eq.s32.totalorder %v212, %v189
        %vm227 = vcmp.eq.s32.totalorder %v208, %v190
        %vm228 = vcmp.eq.s32.totalorder %v212, %v190
        %vm229 = vcmp.eq.s32.totalorder %v208, %v191
        %vm230 = vcmp.eq.s32.totalorder %v212, %v191
        %vm231 = vcmp.eq.s32.totalorder %v208, %v192
        %vm232 = vcmp.eq.s32.totalorder %v212, %v192
        %vm233 = vcmp.eq.s32.totalorder %v208, %v193
        %vm234 = vcmp.eq.s32.totalorder %v212, %v193
        %vm235 = vcmp.eq.s32.totalorder %v208, %v194
        %vm236 = vcmp.eq.s32.totalorder %v212, %v194
        %vm237 = vcmp.eq.s32.totalorder %v208, %v195
        %vm238 = vcmp.eq.s32.totalorder %v212, %v195
        %vm239 = vcmp.eq.s32.totalorder %v208, %v196
        %vm240 = vcmp.eq.s32.totalorder %v212, %v196
        %vm241 = vcmp.eq.s32.totalorder %v208, %v197
        %vm242 = vcmp.eq.s32.totalorder %v212, %v197
        %vm243 = vcmp.eq.s32.totalorder %v208, %v198
        %vm244 = vcmp.eq.s32.totalorder %v212, %v198
        %v245 = vsel %vm213, 1.0, 0.0
        %v246 = vsel %vm214, 1.0, 0.0
        %v247 = vsel %vm215, 1.0, 0.0
        %v248 = vsel %vm216, 1.0, 0.0
        %v249 = vsel %vm217, 1.0, 0.0
        %v250 = vsel %vm218, 1.0, 0.0
        %v251 = vsel %vm219, 1.0, 0.0
        %v252 = vsel %vm220, 1.0, 0.0
        %v253 = vsel %vm221, 1.0, 0.0
        %v254 = vsel %vm222, 1.0, 0.0
        %v255 = vsel %vm223, 1.0, 0.0
        %v256 = vsel %vm224, 1.0, 0.0
        %v257 = vsel %vm225, 1.0, 0.0
        %v258 = vsel %vm226, 1.0, 0.0
        %v259 = vsel %vm227, 1.0, 0.0
        %v260 = vsel %vm228, 1.0, 0.0
        %v261 = vsel %vm229, 1.0, 0.0
        %v262 = vsel %vm230, 1.0, 0.0
        %v263 = vsel %vm231, 1.0, 0.0
        %v264 = vsel %vm232, 1.0, 0.0
        %v265 = vsel %vm233, 1.0, 0.0
        %v266 = vsel %vm234, 1.0, 0.0
        %v267 = vsel %vm235, 1.0, 0.0
        %v268 = vsel %vm236, 1.0, 0.0
        %v269 = vsel %vm237, 1.0, 0.0
        %v270 = vsel %vm238, 1.0, 0.0
        %v271 = vsel %vm239, 1.0, 0.0
        %v272 = vsel %vm240, 1.0, 0.0
        %v273 = vsel %vm241, 1.0, 0.0
        %v274 = vsel %vm242, 1.0, 0.0
        %v275 = vsel %vm243, 1.0, 0.0
        %v276 = vsel %vm244, 1.0, 0.0
        %277 = vmatprep.subr.mxu0 %v246
        %278 = vmatpush1.msra.mxu0 %v245
        %279 = vmatprep.subr.mxu0 %v248
        %280 = vmatpush1.msra.mxu0 %v247
        %281 = vmatprep.subr.mxu0 %v250
        %282 = vmatpush1.msra.mxu0 %v249
        %283 = vmatprep.subr.mxu0 %v252
        %284 = vmatpush1.msra.mxu0 %v251
        %285 = vmatprep.subr.mxu0 %v254
        %286 = vmatpush1.msra.mxu0 %v253
        %287 = vmatprep.subr.mxu0 %v256
        %288 = vmatpush1.msra.mxu0 %v255
        %289 = vmatprep.subr.mxu0 %v258
        %290 = vmatpush1.msra.mxu0 %v257
        %291 = vmatprep.subr.mxu0 %v260
        %292 = vmatpush1.msra.mxu0 %v259
        %293 = vmatprep.subr.mxu0 %v262
        %294 = vmatpush1.msra.mxu0 %v261
        %295 = vmatprep.subr.mxu0 %v264
        %296 = vmatpush1.msra.mxu0 %v263
        %297 = vmatprep.subr.mxu0 %v266
        %298 = vmatpush1.msra.mxu0 %v265
        %299 = vmatprep.subr.mxu0 %v268
        %300 = vmatpush1.msra.mxu0 %v267
        %301 = vmatprep.subr.mxu0 %v270
        %302 = vmatpush1.msra.mxu0 %v269
        %303 = vmatprep.subr.mxu0 %v272
        %304 = vmatpush1.msra.mxu0 %v271
        %305 = vmatprep.subr.mxu0 %v274
        %306 = vmatpush1.msra.mxu0 %v273
        %307 = vmatprep.subr.mxu0 %v276
        %308 = vmatpush1.msra.mxu0 %v275
        %309 = vmatprep.subr.mxu0 0.0
        %310 = vmatpush1.msra.mxu0 0.0
        %311 = vmatprep.subr.mxu0 0.0
        %312 = vmatpush1.msra.mxu0 0.0
        %313 = vmatprep.subr.mxu0 0.0
        %314 = vmatpush1.msra.mxu0 0.0
        %315 = vmatprep.subr.mxu0 0.0
        %316 = vmatpush1.msra.mxu0 0.0
        %317 = vmatprep.subr.mxu0 0.0
        %318 = vmatpush1.msra.mxu0 0.0
        %319 = vmatprep.subr.mxu0 0.0
        %320 = vmatpush1.msra.mxu0 0.0
        %321 = vmatprep.subr.mxu0 0.0
        %322 = vmatpush1.msra.mxu0 0.0
        %323 = vmatprep.subr.mxu0 0.0
        %324 = vmatpush1.msra.mxu0 0.0
        %325 = vmatprep.subr.mxu0 0.0
        %326 = vmatpush1.msra.mxu0 0.0
        %327 = vmatprep.subr.mxu0 0.0
        %328 = vmatpush1.msra.mxu0 0.0
        %329 = vmatprep.subr.mxu0 0.0
        %330 = vmatpush1.msra.mxu0 0.0
        %331 = vmatprep.subr.mxu0 0.0
        %332 = vmatpush1.msra.mxu0 0.0
        %333 = vmatprep.subr.mxu0 0.0
        %334 = vmatpush1.msra.mxu0 0.0
        %335 = vmatprep.subr.mxu0 0.0
        %336 = vmatpush1.msra.mxu0 0.0
        %337 = vmatprep.subr.mxu0 0.0
        %338 = vmatpush1.msra.mxu0 0.0
        %339 = vmatprep.subr.mxu0 0.0
        %340 = vmatpush1.msra.mxu0 0.0
        %341 = vmatprep.mubr.f32.mxu0 0.0
        %v342 = vand.u32 %v181, 4294901760
        %v343 = vsub.f32 %v181, %v342
        %v344 = vand.u32 %v343, 4294901760
        %v345 = vsub.f32 %v343, %v344
        %v346 = vand.u32 %v345, 4294901760
        %347 = vmatmul.mubr.f32.gmra.mrb[0].mxu0 %v346
        %v348 = vpop.f32.mrb[0].mxu0
        %v349 = vadd.f32 0.0, %v348
        %v350 = vpop.f32.mrb[0].mxu0
        %v351 = vadd.f32 0.0, %v350
        %352 = vdwg.mxu0
        %v353 = vsub.f32 %v246, %v246
        %v354 = vand.u32 %v353, 4294901760
        %v355 = vsub.f32 %v353, %v354
        %v356 = vand.u32 %v355, 4294901760
        %357 = vmatprep.subr.mxu0 %v356
        %v358 = vsub.f32 %v245, %v245
        %v359 = vand.u32 %v358, 4294901760
        %v360 = vsub.f32 %v358, %v359
        %v361 = vand.u32 %v360, 4294901760
        %362 = vmatpush1.msra.mxu0 %v361
        %v363 = vsub.f32 %v248, %v248
        %v364 = vand.u32 %v363, 4294901760
        %v365 = vsub.f32 %v363, %v364
        %v366 = vand.u32 %v365, 4294901760
        %367 = vmatprep.subr.mxu0 %v366
        %v368 = vsub.f32 %v247, %v247
        %v369 = vand.u32 %v368, 4294901760
        %v370 = vsub.f32 %v368, %v369
        %v371 = vand.u32 %v370, 4294901760
        %372 = vmatpush1.msra.mxu0 %v371
        %v373 = vsub.f32 %v250, %v250
        %v374 = vand.u32 %v373, 4294901760
        %v375 = vsub.f32 %v373, %v374
        %v376 = vand.u32 %v375, 4294901760
        %377 = vmatprep.subr.mxu0 %v376
        %v378 = vsub.f32 %v249, %v249
        %v379 = vand.u32 %v378, 4294901760
        %v380 = vsub.f32 %v378, %v379
        %v381 = vand.u32 %v380, 4294901760
        %382 = vmatpush1.msra.mxu0 %v381
        %v383 = vsub.f32 %v252, %v252
        %v384 = vand.u32 %v383, 4294901760
        %v385 = vsub.f32 %v383, %v384
        %v386 = vand.u32 %v385, 4294901760
        %387 = vmatprep.subr.mxu0 %v386
        %v388 = vsub.f32 %v251, %v251
        %v389 = vand.u32 %v388, 4294901760
        %v390 = vsub.f32 %v388, %v389
        %v391 = vand.u32 %v390, 4294901760
        %392 = vmatpush1.msra.mxu0 %v391
        %v393 = vsub.f32 %v254, %v254
        %v394 = vand.u32 %v393, 4294901760
        %v395 = vsub.f32 %v393, %v394
        %v396 = vand.u32 %v395, 4294901760
        %397 = vmatprep.subr.mxu0 %v396
        %v398 = vsub.f32 %v253, %v253
        %v399 = vand.u32 %v398, 4294901760
        %v400 = vsub.f32 %v398, %v399
        %v401 = vand.u32 %v400, 4294901760
        %402 = vmatpush1.msra.mxu0 %v401
        %v403 = vsub.f32 %v256, %v256
        %v404 = vand.u32 %v403, 4294901760
        %v405 = vsub.f32 %v403, %v404
        %v406 = vand.u32 %v405, 4294901760
        %407 = vmatprep.subr.mxu0 %v406
        %v408 = vsub.f32 %v255, %v255
        %v409 = vand.u32 %v408, 4294901760
        %v410 = vsub.f32 %v408, %v409
        %v411 = vand.u32 %v410, 4294901760
        %412 = vmatpush1.msra.mxu0 %v411
        %v413 = vsub.f32 %v258, %v258
        %v414 = vand.u32 %v413, 4294901760
        %v415 = vsub.f32 %v413, %v414
        %v416 = vand.u32 %v415, 4294901760
        %417 = vmatprep.subr.mxu0 %v416
        %v418 = vsub.f32 %v257, %v257
        %v419 = vand.u32 %v418, 4294901760
        %v420 = vsub.f32 %v418, %v419
        %v421 = vand.u32 %v420, 4294901760
        %422 = vmatpush1.msra.mxu0 %v421
        %v423 = vsub.f32 %v260, %v260
        %v424 = vand.u32 %v423, 4294901760
        %v425 = vsub.f32 %v423, %v424
        %v426 = vand.u32 %v425, 4294901760
        %427 = vmatprep.subr.mxu0 %v426
        %v428 = vsub.f32 %v259, %v259
        %v429 = vand.u32 %v428, 4294901760
        %v430 = vsub.f32 %v428, %v429
        %v431 = vand.u32 %v430, 4294901760
        %432 = vmatpush1.msra.mxu0 %v431
        %v433 = vsub.f32 %v262, %v262
        %v434 = vand.u32 %v433, 4294901760
        %v435 = vsub.f32 %v433, %v434
        %v436 = vand.u32 %v435, 4294901760
        %437 = vmatprep.subr.mxu0 %v436
        %v438 = vsub.f32 %v261, %v261
        %v439 = vand.u32 %v438, 4294901760
        %v440 = vsub.f32 %v438, %v439
        %v441 = vand.u32 %v440, 4294901760
        %442 = vmatpush1.msra.mxu0 %v441
        %v443 = vsub.f32 %v264, %v264
        %v444 = vand.u32 %v443, 4294901760
        %v445 = vsub.f32 %v443, %v444
        %v446 = vand.u32 %v445, 4294901760
        %447 = vmatprep.subr.mxu0 %v446
        %v448 = vsub.f32 %v263, %v263
        %v449 = vand.u32 %v448, 4294901760
        %v450 = vsub.f32 %v448, %v449
        %v451 = vand.u32 %v450, 4294901760
        %452 = vmatpush1.msra.mxu0 %v451
        %v453 = vsub.f32 %v266, %v266
        %v454 = vand.u32 %v453, 4294901760
        %v455 = vsub.f32 %v453, %v454
        %v456 = vand.u32 %v455, 4294901760
        %457 = vmatprep.subr.mxu0 %v456
        %v458 = vsub.f32 %v265, %v265
        %v459 = vand.u32 %v458, 4294901760
        %v460 = vsub.f32 %v458, %v459
        %v461 = vand.u32 %v460, 4294901760
        %462 = vmatpush1.msra.mxu0 %v461
        %v463 = vsub.f32 %v268, %v268
        %v464 = vand.u32 %v463, 4294901760
        %v465 = vsub.f32 %v463, %v464
        %v466 = vand.u32 %v465, 4294901760
        %467 = vmatprep.subr.mxu0 %v466
        %v468 = vsub.f32 %v267, %v267
        %v469 = vand.u32 %v468, 4294901760
        %v470 = vsub.f32 %v468, %v469
        %v471 = vand.u32 %v470, 4294901760
        %472 = vmatpush1.msra.mxu0 %v471
        %v473 = vsub.f32 %v270, %v270
        %v474 = vand.u32 %v473, 4294901760
        %v475 = vsub.f32 %v473, %v474
        %v476 = vand.u32 %v475, 4294901760
        %477 = vmatprep.subr.mxu0 %v476
        %v478 = vsub.f32 %v269, %v269
        %v479 = vand.u32 %v478, 4294901760
        %v480 = vsub.f32 %v478, %v479
        %v481 = vand.u32 %v480, 4294901760
        %482 = vmatpush1.msra.mxu0 %v481
        %v483 = vsub.f32 %v272, %v272
        %v484 = vand.u32 %v483, 4294901760
        %v485 = vsub.f32 %v483, %v484
        %v486 = vand.u32 %v485, 4294901760
        %487 = vmatprep.subr.mxu0 %v486
        %v488 = vsub.f32 %v271, %v271
        %v489 = vand.u32 %v488, 4294901760
        %v490 = vsub.f32 %v488, %v489
        %v491 = vand.u32 %v490, 4294901760
        %492 = vmatpush1.msra.mxu0 %v491
        %v493 = vsub.f32 %v274, %v274
        %v494 = vand.u32 %v493, 4294901760
        %v495 = vsub.f32 %v493, %v494
        %v496 = vand.u32 %v495, 4294901760
        %497 = vmatprep.subr.mxu0 %v496
        %v498 = vsub.f32 %v273, %v273
        %v499 = vand.u32 %v498, 4294901760
        %v500 = vsub.f32 %v498, %v499
        %v501 = vand.u32 %v500, 4294901760
        %502 = vmatpush1.msra.mxu0 %v501
        %v503 = vsub.f32 %v276, %v276
        %v504 = vand.u32 %v503, 4294901760
        %v505 = vsub.f32 %v503, %v504
        %v506 = vand.u32 %v505, 4294901760
        %507 = vmatprep.subr.mxu0 %v506
        %v508 = vsub.f32 %v275, %v275
        %v509 = vand.u32 %v508, 4294901760
        %v510 = vsub.f32 %v508, %v509
        %v511 = vand.u32 %v510, 4294901760
        %512 = vmatpush1.msra.mxu0 %v511
        %513 = vmatprep.subr.mxu0 0.0
        %514 = vmatpush1.msra.mxu0 0.0
        %515 = vmatprep.subr.mxu0 0.0
        %516 = vmatpush1.msra.mxu0 0.0
        %517 = vmatprep.subr.mxu0 0.0
        %518 = vmatpush1.msra.mxu0 0.0
        %519 = vmatprep.subr.mxu0 0.0
        %520 = vmatpush1.msra.mxu0 0.0
        %521 = vmatprep.subr.mxu0 0.0
        %522 = vmatpush1.msra.mxu0 0.0
        %523 = vmatprep.subr.mxu0 0.0
        %524 = vmatpush1.msra.mxu0 0.0
        %525 = vmatprep.subr.mxu0 0.0
        %526 = vmatpush1.msra.mxu0 0.0
        %527 = vmatprep.subr.mxu0 0.0
        %528 = vmatpush1.msra.mxu0 0.0
        %529 = vmatprep.subr.mxu0 0.0
        %530 = vmatpush1.msra.mxu0 0.0
        %531 = vmatprep.subr.mxu0 0.0
        %532 = vmatpush1.msra.mxu0 0.0
        %533 = vmatprep.subr.mxu0 0.0
        %534 = vmatpush1.msra.mxu0 0.0
        %535 = vmatprep.subr.mxu0 0.0
        %536 = vmatpush1.msra.mxu0 0.0
        %537 = vmatprep.subr.mxu0 0.0
        %538 = vmatpush1.msra.mxu0 0.0
        %539 = vmatprep.subr.mxu0 0.0
        %540 = vmatpush1.msra.mxu0 0.0
        %541 = vmatprep.subr.mxu0 0.0
        %542 = vmatpush1.msra.mxu0 0.0
        %543 = vmatprep.subr.mxu0 0.0
        %544 = vmatpush1.msra.mxu0 0.0
        %545 = vmatprep.mubr.f32.mxu0 0.0
        %v546 = vand.u32 %v181, 4294901760
        %547 = vmatmul.mubr.f32.gmra.mrb[0].mxu0 %v546
        %v548 = vpop.f32.mrb[0].mxu0
        %v549 = vadd.f32 %v349, %v548
        %v550 = vpop.f32.mrb[0].mxu0
        %v551 = vadd.f32 %v351, %v550
        %552 = vdwg.mxu0
        %v553 = vsub.f32 %v246, %v246
        %554 = vmatprep.subr.mxu0 %v553
        %v555 = vsub.f32 %v245, %v245
        %556 = vmatpush1.msra.mxu0 %v555
        %v557 = vsub.f32 %v248, %v248
        %558 = vmatprep.subr.mxu0 %v557
        %v559 = vsub.f32 %v247, %v247
        %560 = vmatpush1.msra.mxu0 %v559
        %v561 = vsub.f32 %v250, %v250
        %562 = vmatprep.subr.mxu0 %v561
        %v563 = vsub.f32 %v249, %v249
        %564 = vmatpush1.msra.mxu0 %v563
        %v565 = vsub.f32 %v252, %v252
        %566 = vmatprep.subr.mxu0 %v565
        %v567 = vsub.f32 %v251, %v251
        %568 = vmatpush1.msra.mxu0 %v567
        %v569 = vsub.f32 %v254, %v254
        %570 = vmatprep.subr.mxu0 %v569
        %v571 = vsub.f32 %v253, %v253
        %572 = vmatpush1.msra.mxu0 %v571
        %v573 = vsub.f32 %v256, %v256
        %574 = vmatprep.subr.mxu0 %v573
        %v575 = vsub.f32 %v255, %v255
        %576 = vmatpush1.msra.mxu0 %v575
        %v577 = vsub.f32 %v258, %v258
        %578 = vmatprep.subr.mxu0 %v577
        %v579 = vsub.f32 %v257, %v257
        %580 = vmatpush1.msra.mxu0 %v579
        %v581 = vsub.f32 %v260, %v260
        %582 = vmatprep.subr.mxu0 %v581
        %v583 = vsub.f32 %v259, %v259
        %584 = vmatpush1.msra.mxu0 %v583
        %v585 = vsub.f32 %v262, %v262
        %586 = vmatprep.subr.mxu0 %v585
        %v587 = vsub.f32 %v261, %v261
        %588 = vmatpush1.msra.mxu0 %v587
        %v589 = vsub.f32 %v264, %v264
        %590 = vmatprep.subr.mxu0 %v589
        %v591 = vsub.f32 %v263, %v263
        %592 = vmatpush1.msra.mxu0 %v591
        %v593 = vsub.f32 %v266, %v266
        %594 = vmatprep.subr.mxu0 %v593
        %v595 = vsub.f32 %v265, %v265
        %596 = vmatpush1.msra.mxu0 %v595
        %v597 = vsub.f32 %v268, %v268
        %598 = vmatprep.subr.mxu0 %v597
        %v599 = vsub.f32 %v267, %v267
        %600 = vmatpush1.msra.mxu0 %v599
        %v601 = vsub.f32 %v270, %v270
        %602 = vmatprep.subr.mxu0 %v601
        %v603 = vsub.f32 %v269, %v269
        %604 = vmatpush1.msra.mxu0 %v603
        %v605 = vsub.f32 %v272, %v272
        %606 = vmatprep.subr.mxu0 %v605
        %v607 = vsub.f32 %v271, %v271
        %608 = vmatpush1.msra.mxu0 %v607
        %v609 = vsub.f32 %v274, %v274
        %610 = vmatprep.subr.mxu0 %v609
        %v611 = vsub.f32 %v273, %v273
        %612 = vmatpush1.msra.mxu0 %v611
        %v613 = vsub.f32 %v276, %v276
        %614 = vmatprep.subr.mxu0 %v613
        %v615 = vsub.f32 %v275, %v275
        %616 = vmatpush1.msra.mxu0 %v615
        %617 = vmatprep.subr.mxu0 0.0
        %618 = vmatpush1.msra.mxu0 0.0
        %619 = vmatprep.subr.mxu0 0.0
        %620 = vmatpush1.msra.mxu0 0.0
        %621 = vmatprep.subr.mxu0 0.0
        %622 = vmatpush1.msra.mxu0 0.0
        %623 = vmatprep.subr.mxu0 0.0
        %624 = vmatpush1.msra.mxu0 0.0
        %625 = vmatprep.subr.mxu0 0.0
        %626 = vmatpush1.msra.mxu0 0.0
        %627 = vmatprep.subr.mxu0 0.0
        %628 = vmatpush1.msra.mxu0 0.0
        %629 = vmatprep.subr.mxu0 0.0
        %630 = vmatpush1.msra.mxu0 0.0
        %631 = vmatprep.subr.mxu0 0.0
        %632 = vmatpush1.msra.mxu0 0.0
        %633 = vmatprep.subr.mxu0 0.0
        %634 = vmatpush1.msra.mxu0 0.0
        %635 = vmatprep.subr.mxu0 0.0
        %636 = vmatpush1.msra.mxu0 0.0
        %637 = vmatprep.subr.mxu0 0.0
        %638 = vmatpush1.msra.mxu0 0.0
        %639 = vmatprep.subr.mxu0 0.0
        %640 = vmatpush1.msra.mxu0 0.0
        %641 = vmatprep.subr.mxu0 0.0
        %642 = vmatpush1.msra.mxu0 0.0
        %643 = vmatprep.subr.mxu0 0.0
        %644 = vmatpush1.msra.mxu0 0.0
        %645 = vmatprep.subr.mxu0 0.0
        %646 = vmatpush1.msra.mxu0 0.0
        %647 = vmatprep.subr.mxu0 0.0
        %648 = vmatpush1.msra.mxu0 0.0
        %649 = vmatprep.mubr.f32.mxu0 0.0
        %v650 = vand.u32 %v181, 4294901760
        %v651 = vsub.f32 %v181, %v650
        %652 = vmatmul.mubr.f32.gmra.mrb[0].mxu0 %v651
        %v653 = vpop.f32.mrb[0].mxu0
        %v654 = vadd.f32 %v549, %v653
        %v655 = vpop.f32.mrb[0].mxu0
        %v656 = vadd.f32 %v551, %v655
        %657 = vdwg.mxu0
        %658 = vmatprep.subr.mxu0 %v246
        %659 = vmatpush1.msra.mxu0 %v245
        %660 = vmatprep.subr.mxu0 %v248
        %661 = vmatpush1.msra.mxu0 %v247
        %662 = vmatprep.subr.mxu0 %v250
        %663 = vmatpush1.msra.mxu0 %v249
        %664 = vmatprep.subr.mxu0 %v252
        %665 = vmatpush1.msra.mxu0 %v251
        %666 = vmatprep.subr.mxu0 %v254
        %667 = vmatpush1.msra.mxu0 %v253
        %668 = vmatprep.subr.mxu0 %v256
        %669 = vmatpush1.msra.mxu0 %v255
        %670 = vmatprep.subr.mxu0 %v258
        %671 = vmatpush1.msra.mxu0 %v257
        %672 = vmatprep.subr.mxu0 %v260
        %673 = vmatpush1.msra.mxu0 %v259
        %674 = vmatprep.subr.mxu0 %v262
        %675 = vmatpush1.msra.mxu0 %v261
        %676 = vmatprep.subr.mxu0 %v264
        %677 = vmatpush1.msra.mxu0 %v263
        %678 = vmatprep.subr.mxu0 %v266
        %679 = vmatpush1.msra.mxu0 %v265
        %680 = vmatprep.subr.mxu0 %v268
        %681 = vmatpush1.msra.mxu0 %v267
        %682 = vmatprep.subr.mxu0 %v270
        %683 = vmatpush1.msra.mxu0 %v269
        %684 = vmatprep.subr.mxu0 %v272
        %685 = vmatpush1.msra.mxu0 %v271
        %686 = vmatprep.subr.mxu0 %v274
        %687 = vmatpush1.msra.mxu0 %v273
        %688 = vmatprep.subr.mxu0 %v276
        %689 = vmatpush1.msra.mxu0 %v275
        %690 = vmatprep.subr.mxu0 0.0
        %691 = vmatpush1.msra.mxu0 0.0
        %692 = vmatprep.subr.mxu0 0.0
        %693 = vmatpush1.msra.mxu0 0.0
        %694 = vmatprep.subr.mxu0 0.0
        %695 = vmatpush1.msra.mxu0 0.0
        %696 = vmatprep.subr.mxu0 0.0
        %697 = vmatpush1.msra.mxu0 0.0
        %698 = vmatprep.subr.mxu0 0.0
        %699 = vmatpush1.msra.mxu0 0.0
        %700 = vmatprep.subr.mxu0 0.0
        %701 = vmatpush1.msra.mxu0 0.0
        %702 = vmatprep.subr.mxu0 0.0
        %703 = vmatpush1.msra.mxu0 0.0
        %704 = vmatprep.subr.mxu0 0.0
        %705 = vmatpush1.msra.mxu0 0.0
        %706 = vmatprep.subr.mxu0 0.0
        %707 = vmatpush1.msra.mxu0 0.0
        %708 = vmatprep.subr.mxu0 0.0
        %709 = vmatpush1.msra.mxu0 0.0
        %710 = vmatprep.subr.mxu0 0.0
        %711 = vmatpush1.msra.mxu0 0.0
        %712 = vmatprep.subr.mxu0 0.0
        %713 = vmatpush1.msra.mxu0 0.0
        %714 = vmatprep.subr.mxu0 0.0
        %715 = vmatpush1.msra.mxu0 0.0
        %716 = vmatprep.subr.mxu0 0.0
        %717 = vmatpush1.msra.mxu0 0.0
        %718 = vmatprep.subr.mxu0 0.0
        %719 = vmatpush1.msra.mxu0 0.0
        %720 = vmatprep.subr.mxu0 0.0
        %721 = vmatpush1.msra.mxu0 0.0
        %722 = vmatprep.mubr.f32.mxu0 0.0
        %v723 = vand.u32 %v181, 4294901760
        %v724 = vsub.f32 %v181, %v723
        %v725 = vand.u32 %v724, 4294901760
        %726 = vmatmul.mubr.f32.gmra.mrb[0].mxu0 %v725
        %v727 = vpop.f32.mrb[0].mxu0
        %v728 = vadd.f32 %v654, %v727
        %v729 = vpop.f32.mrb[0].mxu0
        %v730 = vadd.f32 %v656, %v729
        %731 = vdwg.mxu0
        %v732 = vsub.f32 %v246, %v246
        %v733 = vand.u32 %v732, 4294901760
        %734 = vmatprep.subr.mxu0 %v733
        %v735 = vsub.f32 %v245, %v245
        %v736 = vand.u32 %v735, 4294901760
        %737 = vmatpush1.msra.mxu0 %v736
        %v738 = vsub.f32 %v248, %v248
        %v739 = vand.u32 %v738, 4294901760
        %740 = vmatprep.subr.mxu0 %v739
        %v741 = vsub.f32 %v247, %v247
        %v742 = vand.u32 %v741, 4294901760
        %743 = vmatpush1.msra.mxu0 %v742
        %v744 = vsub.f32 %v250, %v250
        %v745 = vand.u32 %v744, 4294901760
        %746 = vmatprep.subr.mxu0 %v745
        %v747 = vsub.f32 %v249, %v249
        %v748 = vand.u32 %v747, 4294901760
        %749 = vmatpush1.msra.mxu0 %v748
        %v750 = vsub.f32 %v252, %v252
        %v751 = vand.u32 %v750, 4294901760
        %752 = vmatprep.subr.mxu0 %v751
        %v753 = vsub.f32 %v251, %v251
        %v754 = vand.u32 %v753, 4294901760
        %755 = vmatpush1.msra.mxu0 %v754
        %v756 = vsub.f32 %v254, %v254
        %v757 = vand.u32 %v756, 4294901760
        %758 = vmatprep.subr.mxu0 %v757
        %v759 = vsub.f32 %v253, %v253
        %v760 = vand.u32 %v759, 4294901760
        %761 = vmatpush1.msra.mxu0 %v760
        %v762 = vsub.f32 %v256, %v256
        %v763 = vand.u32 %v762, 4294901760
        %764 = vmatprep.subr.mxu0 %v763
        %v765 = vsub.f32 %v255, %v255
        %v766 = vand.u32 %v765, 4294901760
        %767 = vmatpush1.msra.mxu0 %v766
        %v768 = vsub.f32 %v258, %v258
        %v769 = vand.u32 %v768, 4294901760
        %770 = vmatprep.subr.mxu0 %v769
        %v771 = vsub.f32 %v257, %v257
        %v772 = vand.u32 %v771, 4294901760
        %773 = vmatpush1.msra.mxu0 %v772
        %v774 = vsub.f32 %v260, %v260
        %v775 = vand.u32 %v774, 4294901760
        %776 = vmatprep.subr.mxu0 %v775
        %v777 = vsub.f32 %v259, %v259
        %v778 = vand.u32 %v777, 4294901760
        %779 = vmatpush1.msra.mxu0 %v778
        %v780 = vsub.f32 %v262, %v262
        %v781 = vand.u32 %v780, 4294901760
        %782 = vmatprep.subr.mxu0 %v781
        %v783 = vsub.f32 %v261, %v261
        %v784 = vand.u32 %v783, 4294901760
        %785 = vmatpush1.msra.mxu0 %v784
        %v786 = vsub.f32 %v264, %v264
        %v787 = vand.u32 %v786, 4294901760
        %788 = vmatprep.subr.mxu0 %v787
        %v789 = vsub.f32 %v263, %v263
        %v790 = vand.u32 %v789, 4294901760
        %791 = vmatpush1.msra.mxu0 %v790
        %v792 = vsub.f32 %v266, %v266
        %v793 = vand.u32 %v792, 4294901760
        %794 = vmatprep.subr.mxu0 %v793
        %v795 = vsub.f32 %v265, %v265
        %v796 = vand.u32 %v795, 4294901760
        %797 = vmatpush1.msra.mxu0 %v796
        %v798 = vsub.f32 %v268, %v268
        %v799 = vand.u32 %v798, 4294901760
        %800 = vmatprep.subr.mxu0 %v799
        %v801 = vsub.f32 %v267, %v267
        %v802 = vand.u32 %v801, 4294901760
        %803 = vmatpush1.msra.mxu0 %v802
        %v804 = vsub.f32 %v270, %v270
        %v805 = vand.u32 %v804, 4294901760
        %806 = vmatprep.subr.mxu0 %v805
        %v807 = vsub.f32 %v269, %v269
        %v808 = vand.u32 %v807, 4294901760
        %809 = vmatpush1.msra.mxu0 %v808
        %v810 = vsub.f32 %v272, %v272
        %v811 = vand.u32 %v810, 4294901760
        %812 = vmatprep.subr.mxu0 %v811
        %v813 = vsub.f32 %v271, %v271
        %v814 = vand.u32 %v813, 4294901760
        %815 = vmatpush1.msra.mxu0 %v814
        %v816 = vsub.f32 %v274, %v274
        %v817 = vand.u32 %v816, 4294901760
        %818 = vmatprep.subr.mxu0 %v817
        %v819 = vsub.f32 %v273, %v273
        %v820 = vand.u32 %v819, 4294901760
        %821 = vmatpush1.msra.mxu0 %v820
        %v822 = vsub.f32 %v276, %v276
        %v823 = vand.u32 %v822, 4294901760
        %824 = vmatprep.subr.mxu0 %v823
        %v825 = vsub.f32 %v275, %v275
        %v826 = vand.u32 %v825, 4294901760
        %827 = vmatpush1.msra.mxu0 %v826
        %828 = vmatprep.subr.mxu0 0.0
        %829 = vmatpush1.msra.mxu0 0.0
        %830 = vmatprep.subr.mxu0 0.0
        %831 = vmatpush1.msra.mxu0 0.0
        %832 = vmatprep.subr.mxu0 0.0
        %833 = vmatpush1.msra.mxu0 0.0
        %834 = vmatprep.subr.mxu0 0.0
        %835 = vmatpush1.msra.mxu0 0.0
        %836 = vmatprep.subr.mxu0 0.0
        %837 = vmatpush1.msra.mxu0 0.0
        %838 = vmatprep.subr.mxu0 0.0
        %839 = vmatpush1.msra.mxu0 0.0
        %840 = vmatprep.subr.mxu0 0.0
        %841 = vmatpush1.msra.mxu0 0.0
        %842 = vmatprep.subr.mxu0 0.0
        %843 = vmatpush1.msra.mxu0 0.0
        %844 = vmatprep.subr.mxu0 0.0
        %845 = vmatpush1.msra.mxu0 0.0
        %846 = vmatprep.subr.mxu0 0.0
        %847 = vmatpush1.msra.mxu0 0.0
        %848 = vmatprep.subr.mxu0 0.0
        %849 = vmatpush1.msra.mxu0 0.0
        %850 = vmatprep.subr.mxu0 0.0
        %851 = vmatpush1.msra.mxu0 0.0
        %852 = vmatprep.subr.mxu0 0.0
        %853 = vmatpush1.msra.mxu0 0.0
        %854 = vmatprep.subr.mxu0 0.0
        %855 = vmatpush1.msra.mxu0 0.0
        %856 = vmatprep.subr.mxu0 0.0
        %857 = vmatpush1.msra.mxu0 0.0
        %858 = vmatprep.subr.mxu0 0.0
        %859 = vmatpush1.msra.mxu0 0.0
        %860 = vmatprep.mubr.f32.mxu0 0.0
        %v861 = vand.u32 %v181, 4294901760
        %862 = vmatmul.mubr.f32.gmra.mrb[0].mxu0 %v861
        %v863 = vpop.f32.mrb[0].mxu0
        %v864 = vadd.f32 %v728, %v863
        %v865 = vpop.f32.mrb[0].mxu0
        %v866 = vadd.f32 %v730, %v865
        %867 = vdwg.mxu0
        %868 = vmatprep.subr.mxu0 %v246
        %869 = vmatpush1.msra.mxu0 %v245
        %870 = vmatprep.subr.mxu0 %v248
        %871 = vmatpush1.msra.mxu0 %v247
        %872 = vmatprep.subr.mxu0 %v250
        %873 = vmatpush1.msra.mxu0 %v249
        %874 = vmatprep.subr.mxu0 %v252
        %875 = vmatpush1.msra.mxu0 %v251
        %876 = vmatprep.subr.mxu0 %v254
        %877 = vmatpush1.msra.mxu0 %v253
        %878 = vmatprep.subr.mxu0 %v256
        %879 = vmatpush1.msra.mxu0 %v255
        %880 = vmatprep.subr.mxu0 %v258
        %881 = vmatpush1.msra.mxu0 %v257
        %882 = vmatprep.subr.mxu0 %v260
        %883 = vmatpush1.msra.mxu0 %v259
        %884 = vmatprep.subr.mxu0 %v262
        %885 = vmatpush1.msra.mxu0 %v261
        %886 = vmatprep.subr.mxu0 %v264
        %887 = vmatpush1.msra.mxu0 %v263
        %888 = vmatprep.subr.mxu0 %v266
        %889 = vmatpush1.msra.mxu0 %v265
        %890 = vmatprep.subr.mxu0 %v268
        %891 = vmatpush1.msra.mxu0 %v267
        %892 = vmatprep.subr.mxu0 %v270
        %893 = vmatpush1.msra.mxu0 %v269
        %894 = vmatprep.subr.mxu0 %v272
        %895 = vmatpush1.msra.mxu0 %v271
        %896 = vmatprep.subr.mxu0 %v274
        %897 = vmatpush1.msra.mxu0 %v273
        %898 = vmatprep.subr.mxu0 %v276
        %899 = vmatpush1.msra.mxu0 %v275
        %900 = vmatprep.subr.mxu0 0.0
        %901 = vmatpush1.msra.mxu0 0.0
        %902 = vmatprep.subr.mxu0 0.0
        %903 = vmatpush1.msra.mxu0 0.0
        %904 = vmatprep.subr.mxu0 0.0
        %905 = vmatpush1.msra.mxu0 0.0
        %906 = vmatprep.subr.mxu0 0.0
        %907 = vmatpush1.msra.mxu0 0.0
        %908 = vmatprep.subr.mxu0 0.0
        %909 = vmatpush1.msra.mxu0 0.0
        %910 = vmatprep.subr.mxu0 0.0
        %911 = vmatpush1.msra.mxu0 0.0
        %912 = vmatprep.subr.mxu0 0.0
        %913 = vmatpush1.msra.mxu0 0.0
        %914 = vmatprep.subr.mxu0 0.0
        %915 = vmatpush1.msra.mxu0 0.0
        %916 = vmatprep.subr.mxu0 0.0
        %917 = vmatpush1.msra.mxu0 0.0
        %918 = vmatprep.subr.mxu0 0.0
        %919 = vmatpush1.msra.mxu0 0.0
        %920 = vmatprep.subr.mxu0 0.0
        %921 = vmatpush1.msra.mxu0 0.0
        %922 = vmatprep.subr.mxu0 0.0
        %923 = vmatpush1.msra.mxu0 0.0
        %924 = vmatprep.subr.mxu0 0.0
        %925 = vmatpush1.msra.mxu0 0.0
        %926 = vmatprep.subr.mxu0 0.0
        %927 = vmatpush1.msra.mxu0 0.0
        %928 = vmatprep.subr.mxu0 0.0
        %929 = vmatpush1.msra.mxu0 0.0
        %930 = vmatprep.subr.mxu0 0.0
        %931 = vmatpush1.msra.mxu0 0.0
        %932 = vmatprep.mubr.f32.mxu0 0.0
        %v933 = vand.u32 %v181, 4294901760
        %934 = vmatmul.mubr.f32.gmra.mrb[0].mxu0 %v933
        %v935 = vpop.f32.mrb[0].mxu0
        %v936 = vadd.f32 %v864, %v935
        %v937 = vpop.f32.mrb[0].mxu0
        %v938 = vadd.f32 %v866, %v937
        %939 = vdwg.mxu0
        %vm940 = vcmp.eq.s32.totalorder %v204, 1
        %v943 = vcombine.low %v936, %v938
        %v945 = vunpack.c.l.s4 1966171168
        %v946 = vunpack.c.0.s8 %v945
        %v947 = vlaneseq
        %v948 = vshrl.u32 %v947, 7
        %v949 = vsub.s32 %v946, %v948
        %v950 = vrot.slane %v943, %v949
        %v951 = vcombine.high %v950, %v950
        %v953 = vunpack.c.l.s4 1966171168
        %v954 = vunpack.c.0.s8 %v953
        %v955 = vlaneseq
        %v956 = vshrl.u32 %v955, 7
        %v957 = vsub.s32 %v954, %v956
        %v958 = vrot.slane %v951, %v957
        %v961 = vunpack.c.l.s4 1966171168
        %v962 = vunpack.c.0.s8 %v961
        %v963 = vlaneseq
        %v964 = vshrl.u32 %v963, 7
        %v965 = vsub.s32 %v962, %v964
        %v966 = vrot.slane %v950, %v965
        %v968 = vsel %vm940, %v958, %v966
        %vm969 = vcmp.eq.s32.totalorder %v204, 2
        %v970 = vcombine.high %v966, %v966
        %v972 = vsel %vm969, %v970, %v968
        %vm973 = vcmp.eq.s32.totalorder %v204, 3
        %v974 = vcombine.high %v958, %v958
        %v976 = vsel %vm973, %v974, %v972
        %vm977 = vcmp.eq.s32.totalorder %v204, 4
        %v978 = vcombine.high %v936, %v938
        %v980 = vunpack.c.l.s4 1966171168
        %v981 = vunpack.c.0.s8 %v980
        %v982 = vlaneseq
        %v983 = vshrl.u32 %v982, 7
        %v984 = vsub.s32 %v981, %v983
        %v985 = vrot.slane %v978, %v984
        %v987 = vunpack.c.l.s4 1966171168
        %v988 = vunpack.c.0.s8 %v987
        %v989 = vlaneseq
        %v990 = vshrl.u32 %v989, 7
        %v991 = vsub.s32 %v988, %v990
        %v992 = vrot.slane %v985, %v991
        %v994 = vsel %vm977, %v992, %v976
        %vm995 = vcmp.eq.s32.totalorder %v204, 5
        %v996 = vcombine.high %v985, %v985
        %v998 = vunpack.c.l.s4 1966171168
        %v999 = vunpack.c.0.s8 %v998
        %v1000 = vlaneseq
        %v1001 = vshrl.u32 %v1000, 7
        %v1002 = vsub.s32 %v999, %v1001
        %v1003 = vrot.slane %v996, %v1002
        %v1005 = vsel %vm995, %v1003, %v994
        %vm1006 = vcmp.eq.s32.totalorder %v204, 6
        %v1007 = vcombine.high %v992, %v992
        %v1009 = vsel %vm1006, %v1007, %v1005
        %vm1010 = vcmp.eq.s32.totalorder %v204, 7
        %v1011 = vcombine.high %v1003, %v1003
        %v1013 = vsel %vm1010, %v1011, %v1009
        %v1014 = vlaneseq
        %vm1015 = vcmp.ge.s32.totalorder %v1014, 0
        %vm1016 = vcmp.lt.s32.totalorder %v1014, 256
        %vm1017 = vmand %vm1015, %vm1016
        %1018 = vst.msk [vmem:[%s177] ss:$4 sm:$0x3] %vm1017, %v1013
        %s1019 = sld [smem:[#allocation3 + $0x1]]
        %v1020 = vstv %s1019
        %v1021 = vmul.u32 %v180, %v1020
        %v1022 = vshrl.u32 %v1021, 22
        %v1023 = vand.u32 %v1022, 127
        %v1024 = vshra.s32 %v1022, 7
        %v1025 = vlaneseq
        %v1026 = vshrl.u32 %v1025, 7
        %v1027 = vsub.s32 0, %v1026
        %v1028 = vrot.slane %v1023, %v1027
        %v1029 = vlaneseq
        %v1030 = vshrl.u32 %v1029, 7
        %v1031 = vsub.s32 1, %v1030
        %v1032 = vrot.slane %v1023, %v1031
        %vm1033 = vcmp.eq.s32.totalorder %v1028, %v183
        %vm1034 = vcmp.eq.s32.totalorder %v1032, %v183
        %vm1035 = vcmp.eq.s32.totalorder %v1028, %v184
        %vm1036 = vcmp.eq.s32.totalorder %v1032, %v184
        %vm1037 = vcmp.eq.s32.totalorder %v1028, %v185
        %vm1038 = vcmp.eq.s32.totalorder %v1032, %v185
        %vm1039 = vcmp.eq.s32.totalorder %v1028, %v186
        %vm1040 = vcmp.eq.s32.totalorder %v1032, %v186
        %vm1041 = vcmp.eq.s32.totalorder %v1028, %v187
        %vm1042 = vcmp.eq.s32.totalorder %v1032, %v187
        %vm1043 = vcmp.eq.s32.totalorder %v1028, %v188
        %vm1044 = vcmp.eq.s32.totalorder %v1032, %v188
        %vm1045 = vcmp.eq.s32.totalorder %v1028, %v189
        %vm1046 = vcmp.eq.s32.totalorder %v1032, %v189
        %vm1047 = vcmp.eq.s32.totalorder %v1028, %v190
        %vm1048 = vcmp.eq.s32.totalorder %v1032, %v190
        %vm1049 = vcmp.eq.s32.totalorder %v1028, %v191
        %vm1050 = vcmp.eq.s32.totalorder %v1032, %v191
        %vm1051 = vcmp.eq.s32.totalorder %v1028, %v192
        %vm1052 = vcmp.eq.s32.totalorder %v1032, %v192
        %vm1053 = vcmp.eq.s32.totalorder %v1028, %v193
        %vm1054 = vcmp.eq.s32.totalorder %v1032, %v193
        %vm1055 = vcmp.eq.s32.totalorder %v1028, %v194
        %vm1056 = vcmp.eq.s32.totalorder %v1032, %v194
        %vm1057 = vcmp.eq.s32.totalorder %v1028, %v195
        %vm1058 = vcmp.eq.s32.totalorder %v1032, %v195
        %vm1059 = vcmp.eq.s32.totalorder %v1028, %v196
        %vm1060 = vcmp.eq.s32.totalorder %v1032, %v196
        %vm1061 = vcmp.eq.s32.totalorder %v1028, %v197
        %vm1062 = vcmp.eq.s32.totalorder %v1032, %v197
        %vm1063 = vcmp.eq.s32.totalorder %v1028, %v198
        %vm1064 = vcmp.eq.s32.totalorder %v1032, %v198
        %v1065 = vsel %vm1033, 1.0, 0.0
        %v1066 = vsel %vm1034, 1.0, 0.0
        %v1067 = vsel %vm1035, 1.0, 0.0
        %v1068 = vsel %vm1036, 1.0, 0.0
        %v1069 = vsel %vm1037, 1.0, 0.0
        %v1070 = vsel %vm1038, 1.0, 0.0
        %v1071 = vsel %vm1039, 1.0, 0.0
        %v1072 = vsel %vm1040, 1.0, 0.0
        %v1073 = vsel %vm1041, 1.0, 0.0
        %v1074 = vsel %vm1042, 1.0, 0.0
        %v1075 = vsel %vm1043, 1.0, 0.0
        %v1076 = vsel %vm1044, 1.0, 0.0
        %v1077 = vsel %vm1045, 1.0, 0.0
        %v1078 = vsel %vm1046, 1.0, 0.0
        %v1079 = vsel %vm1047, 1.0, 0.0
        %v1080 = vsel %vm1048, 1.0, 0.0
        %v1081 = vsel %vm1049, 1.0, 0.0
        %v1082 = vsel %vm1050, 1.0, 0.0
        %v1083 = vsel %vm1051, 1.0, 0.0
        %v1084 = vsel %vm1052, 1.0, 0.0
        %v1085 = vsel %vm1053, 1.0, 0.0
        %v1086 = vsel %vm1054, 1.0, 0.0
        %v1087 = vsel %vm1055, 1.0, 0.0
        %v1088 = vsel %vm1056, 1.0, 0.0
        %v1089 = vsel %vm1057, 1.0, 0.0
        %v1090 = vsel %vm1058, 1.0, 0.0
        %v1091 = vsel %vm1059, 1.0, 0.0
        %v1092 = vsel %vm1060, 1.0, 0.0
        %v1093 = vsel %vm1061, 1.0, 0.0
        %v1094 = vsel %vm1062, 1.0, 0.0
        %v1095 = vsel %vm1063, 1.0, 0.0
        %v1096 = vsel %vm1064, 1.0, 0.0
        %1097 = vmatprep.subr.mxu0 %v1066
        %1098 = vmatpush1.msra.mxu0 %v1065
        %1099 = vmatprep.subr.mxu0 %v1068
        %1100 = vmatpush1.msra.mxu0 %v1067
        %1101 = vmatprep.subr.mxu0 %v1070
        %1102 = vmatpush1.msra.mxu0 %v1069
        %1103 = vmatprep.subr.mxu0 %v1072
        %1104 = vmatpush1.msra.mxu0 %v1071
        %1105 = vmatprep.subr.mxu0 %v1074
        %1106 = vmatpush1.msra.mxu0 %v1073
        %1107 = vmatprep.subr.mxu0 %v1076
        %1108 = vmatpush1.msra.mxu0 %v1075
        %1109 = vmatprep.subr.mxu0 %v1078
        %1110 = vmatpush1.msra.mxu0 %v1077
        %1111 = vmatprep.subr.mxu0 %v1080
        %1112 = vmatpush1.msra.mxu0 %v1079
        %1113 = vmatprep.subr.mxu0 %v1082
        %1114 = vmatpush1.msra.mxu0 %v1081
        %1115 = vmatprep.subr.mxu0 %v1084
        %1116 = vmatpush1.msra.mxu0 %v1083
        %1117 = vmatprep.subr.mxu0 %v1086
        %1118 = vmatpush1.msra.mxu0 %v1085
        %1119 = vmatprep.subr.mxu0 %v1088
        %1120 = vmatpush1.msra.mxu0 %v1087
        %1121 = vmatprep.subr.mxu0 %v1090
        %1122 = vmatpush1.msra.mxu0 %v1089
        %1123 = vmatprep.subr.mxu0 %v1092
        %1124 = vmatpush1.msra.mxu0 %v1091
        %1125 = vmatprep.subr.mxu0 %v1094
        %1126 = vmatpush1.msra.mxu0 %v1093
        %1127 = vmatprep.subr.mxu0 %v1096
        %1128 = vmatpush1.msra.mxu0 %v1095
        %1129 = vmatprep.subr.mxu0 0.0
        %1130 = vmatpush1.msra.mxu0 0.0
        %1131 = vmatprep.subr.mxu0 0.0
        %1132 = vmatpush1.msra.mxu0 0.0
        %1133 = vmatprep.subr.mxu0 0.0
        %1134 = vmatpush1.msra.mxu0 0.0
        %1135 = vmatprep.subr.mxu0 0.0
        %1136 = vmatpush1.msra.mxu0 0.0
        %1137 = vmatprep.subr.mxu0 0.0
        %1138 = vmatpush1.msra.mxu0 0.0
        %1139 = vmatprep.subr.mxu0 0.0
        %1140 = vmatpush1.msra.mxu0 0.0
        %1141 = vmatprep.subr.mxu0 0.0
        %1142 = vmatpush1.msra.mxu0 0.0
        %1143 = vmatprep.subr.mxu0 0.0
        %1144 = vmatpush1.msra.mxu0 0.0
        %1145 = vmatprep.subr.mxu0 0.0
        %1146 = vmatpush1.msra.mxu0 0.0
        %1147 = vmatprep.subr.mxu0 0.0
        %1148 = vmatpush1.msra.mxu0 0.0
        %1149 = vmatprep.subr.mxu0 0.0
        %1150 = vmatpush1.msra.mxu0 0.0
        %1151 = vmatprep.subr.mxu0 0.0
        %1152 = vmatpush1.msra.mxu0 0.0
        %1153 = vmatprep.subr.mxu0 0.0
        %1154 = vmatpush1.msra.mxu0 0.0
        %1155 = vmatprep.subr.mxu0 0.0
        %1156 = vmatpush1.msra.mxu0 0.0
        %1157 = vmatprep.subr.mxu0 0.0
        %1158 = vmatpush1.msra.mxu0 0.0
        %1159 = vmatprep.subr.mxu0 0.0
        %1160 = vmatpush1.msra.mxu0 0.0
        %1161 = vmatprep.mubr.f32.mxu0 0.0
        %v1162 = vand.u32 %v181, 4294901760
        %v1163 = vsub.f32 %v181, %v1162
        %v1164 = vand.u32 %v1163, 4294901760
        %v1165 = vsub.f32 %v1163, %v1164
        %v1166 = vand.u32 %v1165, 4294901760
        %1167 = vmatmul.mubr.f32.gmra.mrb[0].mxu0 %v1166
        %v1168 = vpop.f32.mrb[0].mxu0
        %v1169 = vadd.f32 0.0, %v1168
        %v1170 = vpop.f32.mrb[0].mxu0
        %v1171 = vadd.f32 0.0, %v1170
        %1172 = vdwg.mxu0
        %v1173 = vsub.f32 %v1066, %v1066
        %v1174 = vand.u32 %v1173, 4294901760
        %v1175 = vsub.f32 %v1173, %v1174
        %v1176 = vand.u32 %v1175, 4294901760
        %1177 = vmatprep.subr.mxu0 %v1176
        %v1178 = vsub.f32 %v1065, %v1065
        %v1179 = vand.u32 %v1178, 4294901760
        %v1180 = vsub.f32 %v1178, %v1179
        %v1181 = vand.u32 %v1180, 4294901760
        %1182 = vmatpush1.msra.mxu0 %v1181
        %v1183 = vsub.f32 %v1068, %v1068
        %v1184 = vand.u32 %v1183, 4294901760
        %v1185 = vsub.f32 %v1183, %v1184
        %v1186 = vand.u32 %v1185, 4294901760
        %1187 = vmatprep.subr.mxu0 %v1186
        %v1188 = vsub.f32 %v1067, %v1067
        %v1189 = vand.u32 %v1188, 4294901760
        %v1190 = vsub.f32 %v1188, %v1189
        %v1191 = vand.u32 %v1190, 4294901760
        %1192 = vmatpush1.msra.mxu0 %v1191
        %v1193 = vsub.f32 %v1070, %v1070
        %v1194 = vand.u32 %v1193, 4294901760
        %v1195 = vsub.f32 %v1193, %v1194
        %v1196 = vand.u32 %v1195, 4294901760
        %1197 = vmatprep.subr.mxu0 %v1196
        %v1198 = vsub.f32 %v1069, %v1069
        %v1199 = vand.u32 %v1198, 4294901760
        %v1200 = vsub.f32 %v1198, %v1199
        %v1201 = vand.u32 %v1200, 4294901760
        %1202 = vmatpush1.msra.mxu0 %v1201
        %v1203 = vsub.f32 %v1072, %v1072
        %v1204 = vand.u32 %v1203, 4294901760
        %v1205 = vsub.f32 %v1203, %v1204
        %v1206 = vand.u32 %v1205, 4294901760
        %1207 = vmatprep.subr.mxu0 %v1206
        %v1208 = vsub.f32 %v1071, %v1071
        %v1209 = vand.u32 %v1208, 4294901760
        %v1210 = vsub.f32 %v1208, %v1209
        %v1211 = vand.u32 %v1210, 4294901760
        %1212 = vmatpush1.msra.mxu0 %v1211
        %v1213 = vsub.f32 %v1074, %v1074
        %v1214 = vand.u32 %v1213, 4294901760
        %v1215 = vsub.f32 %v1213, %v1214
        %v1216 = vand.u32 %v1215, 4294901760
        %1217 = vmatprep.subr.mxu0 %v1216
        %v1218 = vsub.f32 %v1073, %v1073
        %v1219 = vand.u32 %v1218, 4294901760
        %v1220 = vsub.f32 %v1218, %v1219
        %v1221 = vand.u32 %v1220, 4294901760
        %1222 = vmatpush1.msra.mxu0 %v1221
        %v1223 = vsub.f32 %v1076, %v1076
        %v1224 = vand.u32 %v1223, 4294901760
        %v1225 = vsub.f32 %v1223, %v1224
        %v1226 = vand.u32 %v1225, 4294901760
        %1227 = vmatprep.subr.mxu0 %v1226
        %v1228 = vsub.f32 %v1075, %v1075
        %v1229 = vand.u32 %v1228, 4294901760
        %v1230 = vsub.f32 %v1228, %v1229
        %v1231 = vand.u32 %v1230, 4294901760
        %1232 = vmatpush1.msra.mxu0 %v1231
        %v1233 = vsub.f32 %v1078, %v1078
        %v1234 = vand.u32 %v1233, 4294901760
        %v1235 = vsub.f32 %v1233, %v1234
        %v1236 = vand.u32 %v1235, 4294901760
        %1237 = vmatprep.subr.mxu0 %v1236
        %v1238 = vsub.f32 %v1077, %v1077
        %v1239 = vand.u32 %v1238, 4294901760
        %v1240 = vsub.f32 %v1238, %v1239
        %v1241 = vand.u32 %v1240, 4294901760
        %1242 = vmatpush1.msra.mxu0 %v1241
        %v1243 = vsub.f32 %v1080, %v1080
        %v1244 = vand.u32 %v1243, 4294901760
        %v1245 = vsub.f32 %v1243, %v1244
        %v1246 = vand.u32 %v1245, 4294901760
        %1247 = vmatprep.subr.mxu0 %v1246
        %v1248 = vsub.f32 %v1079, %v1079
        %v1249 = vand.u32 %v1248, 4294901760
        %v1250 = vsub.f32 %v1248, %v1249
        %v1251 = vand.u32 %v1250, 4294901760
        %1252 = vmatpush1.msra.mxu0 %v1251
        %v1253 = vsub.f32 %v1082, %v1082
        %v1254 = vand.u32 %v1253, 4294901760
        %v1255 = vsub.f32 %v1253, %v1254
        %v1256 = vand.u32 %v1255, 4294901760
        %1257 = vmatprep.subr.mxu0 %v1256
        %v1258 = vsub.f32 %v1081, %v1081
        %v1259 = vand.u32 %v1258, 4294901760
        %v1260 = vsub.f32 %v1258, %v1259
        %v1261 = vand.u32 %v1260, 4294901760
        %1262 = vmatpush1.msra.mxu0 %v1261
        %v1263 = vsub.f32 %v1084, %v1084
        %v1264 = vand.u32 %v1263, 4294901760
        %v1265 = vsub.f32 %v1263, %v1264
        %v1266 = vand.u32 %v1265, 4294901760
        %1267 = vmatprep.subr.mxu0 %v1266
        %v1268 = vsub.f32 %v1083, %v1083
        %v1269 = vand.u32 %v1268, 4294901760
        %v1270 = vsub.f32 %v1268, %v1269
        %v1271 = vand.u32 %v1270, 4294901760
        %1272 = vmatpush1.msra.mxu0 %v1271
        %v1273 = vsub.f32 %v1086, %v1086
        %v1274 = vand.u32 %v1273, 4294901760
        %v1275 = vsub.f32 %v1273, %v1274
        %v1276 = vand.u32 %v1275, 4294901760
        %1277 = vmatprep.subr.mxu0 %v1276
        %v1278 = vsub.f32 %v1085, %v1085
        %v1279 = vand.u32 %v1278, 4294901760
        %v1280 = vsub.f32 %v1278, %v1279
        %v1281 = vand.u32 %v1280, 4294901760
        %1282 = vmatpush1.msra.mxu0 %v1281
        %v1283 = vsub.f32 %v1088, %v1088
        %v1284 = vand.u32 %v1283, 4294901760
        %v1285 = vsub.f32 %v1283, %v1284
        %v1286 = vand.u32 %v1285, 4294901760
        %1287 = vmatprep.subr.mxu0 %v1286
        %v1288 = vsub.f32 %v1087, %v1087
        %v1289 = vand.u32 %v1288, 4294901760
        %v1290 = vsub.f32 %v1288, %v1289
        %v1291 = vand.u32 %v1290, 4294901760
        %1292 = vmatpush1.msra.mxu0 %v1291
        %v1293 = vsub.f32 %v1090, %v1090
        %v1294 = vand.u32 %v1293, 4294901760
        %v1295 = vsub.f32 %v1293, %v1294
        %v1296 = vand.u32 %v1295, 4294901760
        %1297 = vmatprep.subr.mxu0 %v1296
        %v1298 = vsub.f32 %v1089, %v1089
        %v1299 = vand.u32 %v1298, 4294901760
        %v1300 = vsub.f32 %v1298, %v1299
        %v1301 = vand.u32 %v1300, 4294901760
        %1302 = vmatpush1.msra.mxu0 %v1301
        %v1303 = vsub.f32 %v1092, %v1092
        %v1304 = vand.u32 %v1303, 4294901760
        %v1305 = vsub.f32 %v1303, %v1304
        %v1306 = vand.u32 %v1305, 4294901760
        %1307 = vmatprep.subr.mxu0 %v1306
        %v1308 = vsub.f32 %v1091, %v1091
        %v1309 = vand.u32 %v1308, 4294901760
        %v1310 = vsub.f32 %v1308, %v1309
        %v1311 = vand.u32 %v1310, 4294901760
        %1312 = vmatpush1.msra.mxu0 %v1311
        %v1313 = vsub.f32 %v1094, %v1094
        %v1314 = vand.u32 %v1313, 4294901760
        %v1315 = vsub.f32 %v1313, %v1314
        %v1316 = vand.u32 %v1315, 4294901760
        %1317 = vmatprep.subr.mxu0 %v1316
        %v1318 = vsub.f32 %v1093, %v1093
        %v1319 = vand.u32 %v1318, 4294901760
        %v1320 = vsub.f32 %v1318, %v1319
        %v1321 = vand.u32 %v1320, 4294901760
        %1322 = vmatpush1.msra.mxu0 %v1321
        %v1323 = vsub.f32 %v1096, %v1096
        %v1324 = vand.u32 %v1323, 4294901760
        %v1325 = vsub.f32 %v1323, %v1324
        %v1326 = vand.u32 %v1325, 4294901760
        %1327 = vmatprep.subr.mxu0 %v1326
        %v1328 = vsub.f32 %v1095, %v1095
        %v1329 = vand.u32 %v1328, 4294901760
        %v1330 = vsub.f32 %v1328, %v1329
        %v1331 = vand.u32 %v1330, 4294901760
        %1332 = vmatpush1.msra.mxu0 %v1331
        %1333 = vmatprep.subr.mxu0 0.0
        %1334 = vmatpush1.msra.mxu0 0.0
        %1335 = vmatprep.subr.mxu0 0.0
        %1336 = vmatpush1.msra.mxu0 0.0
        %1337 = vmatprep.subr.mxu0 0.0
        %1338 = vmatpush1.msra.mxu0 0.0
        %1339 = vmatprep.subr.mxu0 0.0
        %1340 = vmatpush1.msra.mxu0 0.0
        %1341 = vmatprep.subr.mxu0 0.0
        %1342 = vmatpush1.msra.mxu0 0.0
        %1343 = vmatprep.subr.mxu0 0.0
        %1344 = vmatpush1.msra.mxu0 0.0
        %1345 = vmatprep.subr.mxu0 0.0
        %1346 = vmatpush1.msra.mxu0 0.0
        %1347 = vmatprep.subr.mxu0 0.0
        %1348 = vmatpush1.msra.mxu0 0.0
        %1349 = vmatprep.subr.mxu0 0.0
        %1350 = vmatpush1.msra.mxu0 0.0
        %1351 = vmatprep.subr.mxu0 0.0
        %1352 = vmatpush1.msra.mxu0 0.0
        %1353 = vmatprep.subr.mxu0 0.0
        %1354 = vmatpush1.msra.mxu0 0.0
        %1355 = vmatprep.subr.mxu0 0.0
        %1356 = vmatpush1.msra.mxu0 0.0
        %1357 = vmatprep.subr.mxu0 0.0
        %1358 = vmatpush1.msra.mxu0 0.0
        %1359 = vmatprep.subr.mxu0 0.0
        %1360 = vmatpush1.msra.mxu0 0.0
        %1361 = vmatprep.subr.mxu0 0.0
        %1362 = vmatpush1.msra.mxu0 0.0
        %1363 = vmatprep.subr.mxu0 0.0
        %1364 = vmatpush1.msra.mxu0 0.0
        %1365 = vmatprep.mubr.f32.mxu0 0.0
        %v1366 = vand.u32 %v181, 4294901760
        %1367 = vmatmul.mubr.f32.gmra.mrb[0].mxu0 %v1366
        %v1368 = vpop.f32.mrb[0].mxu0
        %v1369 = vadd.f32 %v1169, %v1368
        %v1370 = vpop.f32.mrb[0].mxu0
        %v1371 = vadd.f32 %v1171, %v1370
        %1372 = vdwg.mxu0
        %v1373 = vsub.f32 %v1066, %v1066
        %1374 = vmatprep.subr.mxu0 %v1373
        %v1375 = vsub.f32 %v1065, %v1065
        %1376 = vmatpush1.msra.mxu0 %v1375
        %v1377 = vsub.f32 %v1068, %v1068
        %1378 = vmatprep.subr.mxu0 %v1377
        %v1379 = vsub.f32 %v1067, %v1067
        %1380 = vmatpush1.msra.mxu0 %v1379
        %v1381 = vsub.f32 %v1070, %v1070
        %1382 = vmatprep.subr.mxu0 %v1381
        %v1383 = vsub.f32 %v1069, %v1069
        %1384 = vmatpush1.msra.mxu0 %v1383
        %v1385 = vsub.f32 %v1072, %v1072
        %1386 = vmatprep.subr.mxu0 %v1385
        %v1387 = vsub.f32 %v1071, %v1071
        %1388 = vmatpush1.msra.mxu0 %v1387
        %v1389 = vsub.f32 %v1074, %v1074
        %1390 = vmatprep.subr.mxu0 %v1389
        %v1391 = vsub.f32 %v1073, %v1073
        %1392 = vmatpush1.msra.mxu0 %v1391
        %v1393 = vsub.f32 %v1076, %v1076
        %1394 = vmatprep.subr.mxu0 %v1393
        %v1395 = vsub.f32 %v1075, %v1075
        %1396 = vmatpush1.msra.mxu0 %v1395
        %v1397 = vsub.f32 %v1078, %v1078
        %1398 = vmatprep.subr.mxu0 %v1397
        %v1399 = vsub.f32 %v1077, %v1077
        %1400 = vmatpush1.msra.mxu0 %v1399
        %v1401 = vsub.f32 %v1080, %v1080
        %1402 = vmatprep.subr.mxu0 %v1401
        %v1403 = vsub.f32 %v1079, %v1079
        %1404 = vmatpush1.msra.mxu0 %v1403
        %v1405 = vsub.f32 %v1082, %v1082
        %1406 = vmatprep.subr.mxu0 %v1405
        %v1407 = vsub.f32 %v1081, %v1081
        %1408 = vmatpush1.msra.mxu0 %v1407
        %v1409 = vsub.f32 %v1084, %v1084
        %1410 = vmatprep.subr.mxu0 %v1409
        %v1411 = vsub.f32 %v1083, %v1083
        %1412 = vmatpush1.msra.mxu0 %v1411
        %v1413 = vsub.f32 %v1086, %v1086
        %1414 = vmatprep.subr.mxu0 %v1413
        %v1415 = vsub.f32 %v1085, %v1085
        %1416 = vmatpush1.msra.mxu0 %v1415
        %v1417 = vsub.f32 %v1088, %v1088
        %1418 = vmatprep.subr.mxu0 %v1417
        %v1419 = vsub.f32 %v1087, %v1087
        %1420 = vmatpush1.msra.mxu0 %v1419
        %v1421 = vsub.f32 %v1090, %v1090
        %1422 = vmatprep.subr.mxu0 %v1421
        %v1423 = vsub.f32 %v1089, %v1089
        %1424 = vmatpush1.msra.mxu0 %v1423
        %v1425 = vsub.f32 %v1092, %v1092
        %1426 = vmatprep.subr.mxu0 %v1425
        %v1427 = vsub.f32 %v1091, %v1091
        %1428 = vmatpush1.msra.mxu0 %v1427
        %v1429 = vsub.f32 %v1094, %v1094
        %1430 = vmatprep.subr.mxu0 %v1429
        %v1431 = vsub.f32 %v1093, %v1093
        %1432 = vmatpush1.msra.mxu0 %v1431
        %v1433 = vsub.f32 %v1096, %v1096
        %1434 = vmatprep.subr.mxu0 %v1433
        %v1435 = vsub.f32 %v1095, %v1095
        %1436 = vmatpush1.msra.mxu0 %v1435
        %1437 = vmatprep.subr.mxu0 0.0
        %1438 = vmatpush1.msra.mxu0 0.0
        %1439 = vmatprep.subr.mxu0 0.0
        %1440 = vmatpush1.msra.mxu0 0.0
        %1441 = vmatprep.subr.mxu0 0.0
        %1442 = vmatpush1.msra.mxu0 0.0
        %1443 = vmatprep.subr.mxu0 0.0
        %1444 = vmatpush1.msra.mxu0 0.0
        %1445 = vmatprep.subr.mxu0 0.0
        %1446 = vmatpush1.msra.mxu0 0.0
        %1447 = vmatprep.subr.mxu0 0.0
        %1448 = vmatpush1.msra.mxu0 0.0
        %1449 = vmatprep.subr.mxu0 0.0
        %1450 = vmatpush1.msra.mxu0 0.0
        %1451 = vmatprep.subr.mxu0 0.0
        %1452 = vmatpush1.msra.mxu0 0.0
        %1453 = vmatprep.subr.mxu0 0.0
        %1454 = vmatpush1.msra.mxu0 0.0
        %1455 = vmatprep.subr.mxu0 0.0
        %1456 = vmatpush1.msra.mxu0 0.0
        %1457 = vmatprep.subr.mxu0 0.0
        %1458 = vmatpush1.msra.mxu0 0.0
        %1459 = vmatprep.subr.mxu0 0.0
        %1460 = vmatpush1.msra.mxu0 0.0
        %1461 = vmatprep.subr.mxu0 0.0
        %1462 = vmatpush1.msra.mxu0 0.0
        %1463 = vmatprep.subr.mxu0 0.0
        %1464 = vmatpush1.msra.mxu0 0.0
        %1465 = vmatprep.subr.mxu0 0.0
        %1466 = vmatpush1.msra.mxu0 0.0
        %1467 = vmatprep.subr.mxu0 0.0
        %1468 = vmatpush1.msra.mxu0 0.0
        %1469 = vmatprep.mubr.f32.mxu0 0.0
        %v1470 = vand.u32 %v181, 4294901760
        %v1471 = vsub.f32 %v181, %v1470
        %1472 = vmatmul.mubr.f32.gmra.mrb[0].mxu0 %v1471
        %v1473 = vpop.f32.mrb[0].mxu0
        %v1474 = vadd.f32 %v1369, %v1473
        %v1475 = vpop.f32.mrb[0].mxu0
        %v1476 = vadd.f32 %v1371, %v1475
        %1477 = vdwg.mxu0
        %1478 = vmatprep.subr.mxu0 %v1066
        %1479 = vmatpush1.msra.mxu0 %v1065
        %1480 = vmatprep.subr.mxu0 %v1068
        %1481 = vmatpush1.msra.mxu0 %v1067
        %1482 = vmatprep.subr.mxu0 %v1070
        %1483 = vmatpush1.msra.mxu0 %v1069
        %1484 = vmatprep.subr.mxu0 %v1072
        %1485 = vmatpush1.msra.mxu0 %v1071
        %1486 = vmatprep.subr.mxu0 %v1074
        %1487 = vmatpush1.msra.mxu0 %v1073
        %1488 = vmatprep.subr.mxu0 %v1076
        %1489 = vmatpush1.msra.mxu0 %v1075
        %1490 = vmatprep.subr.mxu0 %v1078
        %1491 = vmatpush1.msra.mxu0 %v1077
        %1492 = vmatprep.subr.mxu0 %v1080
        %1493 = vmatpush1.msra.mxu0 %v1079
        %1494 = vmatprep.subr.mxu0 %v1082
        %1495 = vmatpush1.msra.mxu0 %v1081
        %1496 = vmatprep.subr.mxu0 %v1084
        %1497 = vmatpush1.msra.mxu0 %v1083
        %1498 = vmatprep.subr.mxu0 %v1086
        %1499 = vmatpush1.msra.mxu0 %v1085
        %1500 = vmatprep.subr.mxu0 %v1088
        %1501 = vmatpush1.msra.mxu0 %v1087
        %1502 = vmatprep.subr.mxu0 %v1090
        %1503 = vmatpush1.msra.mxu0 %v1089
        %1504 = vmatprep.subr.mxu0 %v1092
        %1505 = vmatpush1.msra.mxu0 %v1091
        %1506 = vmatprep.subr.mxu0 %v1094
        %1507 = vmatpush1.msra.mxu0 %v1093
        %1508 = vmatprep.subr.mxu0 %v1096
        %1509 = vmatpush1.msra.mxu0 %v1095
        %1510 = vmatprep.subr.mxu0 0.0
        %1511 = vmatpush1.msra.mxu0 0.0
        %1512 = vmatprep.subr.mxu0 0.0
        %1513 = vmatpush1.msra.mxu0 0.0
        %1514 = vmatprep.subr.mxu0 0.0
        %1515 = vmatpush1.msra.mxu0 0.0
        %1516 = vmatprep.subr.mxu0 0.0
        %1517 = vmatpush1.msra.mxu0 0.0
        %1518 = vmatprep.subr.mxu0 0.0
        %1519 = vmatpush1.msra.mxu0 0.0
        %1520 = vmatprep.subr.mxu0 0.0
        %1521 = vmatpush1.msra.mxu0 0.0
        %1522 = vmatprep.subr.mxu0 0.0
        %1523 = vmatpush1.msra.mxu0 0.0
        %1524 = vmatprep.subr.mxu0 0.0
        %1525 = vmatpush1.msra.mxu0 0.0
        %1526 = vmatprep.subr.mxu0 0.0
        %1527 = vmatpush1.msra.mxu0 0.0
        %1528 = vmatprep.subr.mxu0 0.0
        %1529 = vmatpush1.msra.mxu0 0.0
        %1530 = vmatprep.subr.mxu0 0.0
        %1531 = vmatpush1.msra.mxu0 0.0
        %1532 = vmatprep.subr.mxu0 0.0
        %1533 = vmatpush1.msra.mxu0 0.0
        %1534 = vmatprep.subr.mxu0 0.0
        %1535 = vmatpush1.msra.mxu0 0.0
        %1536 = vmatprep.subr.mxu0 0.0
        %1537 = vmatpush1.msra.mxu0 0.0
        %1538 = vmatprep.subr.mxu0 0.0
        %1539 = vmatpush1.msra.mxu0 0.0
        %1540 = vmatprep.subr.mxu0 0.0
        %1541 = vmatpush1.msra.mxu0 0.0
        %1542 = vmatprep.mubr.f32.mxu0 0.0
        %v1543 = vand.u32 %v181, 4294901760
        %v1544 = vsub.f32 %v181, %v1543
        %v1545 = vand.u32 %v1544, 4294901760
        %1546 = vmatmul.mubr.f32.gmra.mrb[0].mxu0 %v1545
        %v1547 = vpop.f32.mrb[0].mxu0
        %v1548 = vadd.f32 %v1474, %v1547
        %v1549 = vpop.f32.mrb[0].mxu0
        %v1550 = vadd.f32 %v1476, %v1549
        %1551 = vdwg.mxu0
        %v1552 = vsub.f32 %v1066, %v1066
        %v1553 = vand.u32 %v1552, 4294901760
        %1554 = vmatprep.subr.mxu0 %v1553
        %v1555 = vsub.f32 %v1065, %v1065
        %v1556 = vand.u32 %v1555, 4294901760
        %1557 = vmatpush1.msra.mxu0 %v1556
        %v1558 = vsub.f32 %v1068, %v1068
        %v1559 = vand.u32 %v1558, 4294901760
        %1560 = vmatprep.subr.mxu0 %v1559
        %v1561 = vsub.f32 %v1067, %v1067
        %v1562 = vand.u32 %v1561, 4294901760
        %1563 = vmatpush1.msra.mxu0 %v1562
        %v1564 = vsub.f32 %v1070, %v1070
        %v1565 = vand.u32 %v1564, 4294901760
        %1566 = vmatprep.subr.mxu0 %v1565
        %v1567 = vsub.f32 %v1069, %v1069
        %v1568 = vand.u32 %v1567, 4294901760
        %1569 = vmatpush1.msra.mxu0 %v1568
        %v1570 = vsub.f32 %v1072, %v1072
        %v1571 = vand.u32 %v1570, 4294901760
        %1572 = vmatprep.subr.mxu0 %v1571
        %v1573 = vsub.f32 %v1071, %v1071
        %v1574 = vand.u32 %v1573, 4294901760
        %1575 = vmatpush1.msra.mxu0 %v1574
        %v1576 = vsub.f32 %v1074, %v1074
        %v1577 = vand.u32 %v1576, 4294901760
        %1578 = vmatprep.subr.mxu0 %v1577
        %v1579 = vsub.f32 %v1073, %v1073
        %v1580 = vand.u32 %v1579, 4294901760
        %1581 = vmatpush1.msra.mxu0 %v1580
        %v1582 = vsub.f32 %v1076, %v1076
        %v1583 = vand.u32 %v1582, 4294901760
        %1584 = vmatprep.subr.mxu0 %v1583
        %v1585 = vsub.f32 %v1075, %v1075
        %v1586 = vand.u32 %v1585, 4294901760
        %1587 = vmatpush1.msra.mxu0 %v1586
        %v1588 = vsub.f32 %v1078, %v1078
        %v1589 = vand.u32 %v1588, 4294901760
        %1590 = vmatprep.subr.mxu0 %v1589
        %v1591 = vsub.f32 %v1077, %v1077
        %v1592 = vand.u32 %v1591, 4294901760
        %1593 = vmatpush1.msra.mxu0 %v1592
        %v1594 = vsub.f32 %v1080, %v1080
        %v1595 = vand.u32 %v1594, 4294901760
        %1596 = vmatprep.subr.mxu0 %v1595
        %v1597 = vsub.f32 %v1079, %v1079
        %v1598 = vand.u32 %v1597, 4294901760
        %1599 = vmatpush1.msra.mxu0 %v1598
        %v1600 = vsub.f32 %v1082, %v1082
        %v1601 = vand.u32 %v1600, 4294901760
        %1602 = vmatprep.subr.mxu0 %v1601
        %v1603 = vsub.f32 %v1081, %v1081
        %v1604 = vand.u32 %v1603, 4294901760
        %1605 = vmatpush1.msra.mxu0 %v1604
        %v1606 = vsub.f32 %v1084, %v1084
        %v1607 = vand.u32 %v1606, 4294901760
        %1608 = vmatprep.subr.mxu0 %v1607
        %v1609 = vsub.f32 %v1083, %v1083
        %v1610 = vand.u32 %v1609, 4294901760
        %1611 = vmatpush1.msra.mxu0 %v1610
        %v1612 = vsub.f32 %v1086, %v1086
        %v1613 = vand.u32 %v1612, 4294901760
        %1614 = vmatprep.subr.mxu0 %v1613
        %v1615 = vsub.f32 %v1085, %v1085
        %v1616 = vand.u32 %v1615, 4294901760
        %1617 = vmatpush1.msra.mxu0 %v1616
        %v1618 = vsub.f32 %v1088, %v1088
        %v1619 = vand.u32 %v1618, 4294901760
        %1620 = vmatprep.subr.mxu0 %v1619
        %v1621 = vsub.f32 %v1087, %v1087
        %v1622 = vand.u32 %v1621, 4294901760
        %1623 = vmatpush1.msra.mxu0 %v1622
        %v1624 = vsub.f32 %v1090, %v1090
        %v1625 = vand.u32 %v1624, 4294901760
        %1626 = vmatprep.subr.mxu0 %v1625
        %v1627 = vsub.f32 %v1089, %v1089
        %v1628 = vand.u32 %v1627, 4294901760
        %1629 = vmatpush1.msra.mxu0 %v1628
        %v1630 = vsub.f32 %v1092, %v1092
        %v1631 = vand.u32 %v1630, 4294901760
        %1632 = vmatprep.subr.mxu0 %v1631
        %v1633 = vsub.f32 %v1091, %v1091
        %v1634 = vand.u32 %v1633, 4294901760
        %1635 = vmatpush1.msra.mxu0 %v1634
        %v1636 = vsub.f32 %v1094, %v1094
        %v1637 = vand.u32 %v1636, 4294901760
        %1638 = vmatprep.subr.mxu0 %v1637
        %v1639 = vsub.f32 %v1093, %v1093
        %v1640 = vand.u32 %v1639, 4294901760
        %1641 = vmatpush1.msra.mxu0 %v1640
        %v1642 = vsub.f32 %v1096, %v1096
        %v1643 = vand.u32 %v1642, 4294901760
        %1644 = vmatprep.subr.mxu0 %v1643
        %v1645 = vsub.f32 %v1095, %v1095
        %v1646 = vand.u32 %v1645, 4294901760
        %1647 = vmatpush1.msra.mxu0 %v1646
        %1648 = vmatprep.subr.mxu0 0.0
        %1649 = vmatpush1.msra.mxu0 0.0
        %1650 = vmatprep.subr.mxu0 0.0
        %1651 = vmatpush1.msra.mxu0 0.0
        %1652 = vmatprep.subr.mxu0 0.0
        %1653 = vmatpush1.msra.mxu0 0.0
        %1654 = vmatprep.subr.mxu0 0.0
        %1655 = vmatpush1.msra.mxu0 0.0
        %1656 = vmatprep.subr.mxu0 0.0
        %1657 = vmatpush1.msra.mxu0 0.0
        %1658 = vmatprep.subr.mxu0 0.0
        %1659 = vmatpush1.msra.mxu0 0.0
        %1660 = vmatprep.subr.mxu0 0.0
        %1661 = vmatpush1.msra.mxu0 0.0
        %1662 = vmatprep.subr.mxu0 0.0
        %1663 = vmatpush1.msra.mxu0 0.0
        %1664 = vmatprep.subr.mxu0 0.0
        %1665 = vmatpush1.msra.mxu0 0.0
        %1666 = vmatprep.subr.mxu0 0.0
        %1667 = vmatpush1.msra.mxu0 0.0
        %1668 = vmatprep.subr.mxu0 0.0
        %1669 = vmatpush1.msra.mxu0 0.0
        %1670 = vmatprep.subr.mxu0 0.0
        %1671 = vmatpush1.msra.mxu0 0.0
        %1672 = vmatprep.subr.mxu0 0.0
        %1673 = vmatpush1.msra.mxu0 0.0
        %1674 = vmatprep.subr.mxu0 0.0
        %1675 = vmatpush1.msra.mxu0 0.0
        %1676 = vmatprep.subr.mxu0 0.0
        %1677 = vmatpush1.msra.mxu0 0.0
        %1678 = vmatprep.subr.mxu0 0.0
        %1679 = vmatpush1.msra.mxu0 0.0
        %1680 = vmatprep.mubr.f32.mxu0 0.0
        %v1681 = vand.u32 %v181, 4294901760
        %1682 = vmatmul.mubr.f32.gmra.mrb[0].mxu0 %v1681
        %v1683 = vpop.f32.mrb[0].mxu0
        %v1684 = vadd.f32 %v1548, %v1683
        %v1685 = vpop.f32.mrb[0].mxu0
        %v1686 = vadd.f32 %v1550, %v1685
        %1687 = vdwg.mxu0
        %1688 = vmatprep.subr.mxu0 %v1066
        %1689 = vmatpush1.msra.mxu0 %v1065
        %1690 = vmatprep.subr.mxu0 %v1068
        %1691 = vmatpush1.msra.mxu0 %v1067
        %1692 = vmatprep.subr.mxu0 %v1070
        %1693 = vmatpush1.msra.mxu0 %v1069
        %1694 = vmatprep.subr.mxu0 %v1072
        %1695 = vmatpush1.msra.mxu0 %v1071
        %1696 = vmatprep.subr.mxu0 %v1074
        %1697 = vmatpush1.msra.mxu0 %v1073
        %1698 = vmatprep.subr.mxu0 %v1076
        %1699 = vmatpush1.msra.mxu0 %v1075
        %1700 = vmatprep.subr.mxu0 %v1078
        %1701 = vmatpush1.msra.mxu0 %v1077
        %1702 = vmatprep.subr.mxu0 %v1080
        %1703 = vmatpush1.msra.mxu0 %v1079
        %1704 = vmatprep.subr.mxu0 %v1082
        %1705 = vmatpush1.msra.mxu0 %v1081
        %1706 = vmatprep.subr.mxu0 %v1084
        %1707 = vmatpush1.msra.mxu0 %v1083
        %1708 = vmatprep.subr.mxu0 %v1086
        %1709 = vmatpush1.msra.mxu0 %v1085
        %1710 = vmatprep.subr.mxu0 %v1088
        %1711 = vmatpush1.msra.mxu0 %v1087
        %1712 = vmatprep.subr.mxu0 %v1090
        %1713 = vmatpush1.msra.mxu0 %v1089
        %1714 = vmatprep.subr.mxu0 %v1092
        %1715 = vmatpush1.msra.mxu0 %v1091
        %1716 = vmatprep.subr.mxu0 %v1094
        %1717 = vmatpush1.msra.mxu0 %v1093
        %1718 = vmatprep.subr.mxu0 %v1096
        %1719 = vmatpush1.msra.mxu0 %v1095
        %1720 = vmatprep.subr.mxu0 0.0
        %1721 = vmatpush1.msra.mxu0 0.0
        %1722 = vmatprep.subr.mxu0 0.0
        %1723 = vmatpush1.msra.mxu0 0.0
        %1724 = vmatprep.subr.mxu0 0.0
        %1725 = vmatpush1.msra.mxu0 0.0
        %1726 = vmatprep.subr.mxu0 0.0
        %1727 = vmatpush1.msra.mxu0 0.0
        %1728 = vmatprep.subr.mxu0 0.0
        %1729 = vmatpush1.msra.mxu0 0.0
        %1730 = vmatprep.subr.mxu0 0.0
        %1731 = vmatpush1.msra.mxu0 0.0
        %1732 = vmatprep.subr.mxu0 0.0
        %1733 = vmatpush1.msra.mxu0 0.0
        %1734 = vmatprep.subr.mxu0 0.0
        %1735 = vmatpush1.msra.mxu0 0.0
        %1736 = vmatprep.subr.mxu0 0.0
        %1737 = vmatpush1.msra.mxu0 0.0
        %1738 = vmatprep.subr.mxu0 0.0
        %1739 = vmatpush1.msra.mxu0 0.0
        %1740 = vmatprep.subr.mxu0 0.0
        %1741 = vmatpush1.msra.mxu0 0.0
        %1742 = vmatprep.subr.mxu0 0.0
        %1743 = vmatpush1.msra.mxu0 0.0
        %1744 = vmatprep.subr.mxu0 0.0
        %1745 = vmatpush1.msra.mxu0 0.0
        %1746 = vmatprep.subr.mxu0 0.0
        %1747 = vmatpush1.msra.mxu0 0.0
        %1748 = vmatprep.subr.mxu0 0.0
        %1749 = vmatpush1.msra.mxu0 0.0
        %1750 = vmatprep.subr.mxu0 0.0
        %1751 = vmatpush1.msra.mxu0 0.0
        %1752 = vmatprep.mubr.f32.mxu0 0.0
        %v1753 = vand.u32 %v181, 4294901760
        %1754 = vmatmul.mubr.f32.gmra.mrb[0].mxu0 %v1753
        %v1755 = vpop.f32.mrb[0].mxu0
        %v1756 = vadd.f32 %v1684, %v1755
        %v1757 = vpop.f32.mrb[0].mxu0
        %v1758 = vadd.f32 %v1686, %v1757
        %1759 = vdwg.mxu0
        %vm1760 = vcmp.eq.s32.totalorder %v1024, 1
        %v1763 = vcombine.low %v1756, %v1758
        %v1765 = vunpack.c.l.s4 1966171168
        %v1766 = vunpack.c.0.s8 %v1765
        %v1767 = vlaneseq
        %v1768 = vshrl.u32 %v1767, 7
        %v1769 = vsub.s32 %v1766, %v1768
        %v1770 = vrot.slane %v1763, %v1769
        %v1771 = vcombine.high %v1770, %v1770
        %v1773 = vunpack.c.l.s4 1966171168
        %v1774 = vunpack.c.0.s8 %v1773
        %v1775 = vlaneseq
        %v1776 = vshrl.u32 %v1775, 7
        %v1777 = vsub.s32 %v1774, %v1776
        %v1778 = vrot.slane %v1771, %v1777
        %v1781 = vunpack.c.l.s4 1966171168
        %v1782 = vunpack.c.0.s8 %v1781
        %v1783 = vlaneseq
        %v1784 = vshrl.u32 %v1783, 7
        %v1785 = vsub.s32 %v1782, %v1784
        %v1786 = vrot.slane %v1770, %v1785
        %v1788 = vsel %vm1760, %v1778, %v1786
        %vm1789 = vcmp.eq.s32.totalorder %v1024, 2
        %v1790 = vcombine.high %v1786, %v1786
        %v1792 = vsel %vm1789, %v1790, %v1788
        %vm1793 = vcmp.eq.s32.totalorder %v1024, 3
        %v1794 = vcombine.high %v1778, %v1778
        %v1796 = vsel %vm1793, %v1794, %v1792
        %vm1797 = vcmp.eq.s32.totalorder %v1024, 4
        %v1798 = vcombine.high %v1756, %v1758
        %v1800 = vunpack.c.l.s4 1966171168
        %v1801 = vunpack.c.0.s8 %v1800
        %v1802 = vlaneseq
        %v1803 = vshrl.u32 %v1802, 7
        %v1804 = vsub.s32 %v1801, %v1803
        %v1805 = vrot.slane %v1798, %v1804
        %v1807 = vunpack.c.l.s4 1966171168
        %v1808 = vunpack.c.0.s8 %v1807
        %v1809 = vlaneseq
        %v1810 = vshrl.u32 %v1809, 7
        %v1811 = vsub.s32 %v1808, %v1810
        %v1812 = vrot.slane %v1805, %v1811
        %v1814 = vsel %vm1797, %v1812, %v1796
        %vm1815 = vcmp.eq.s32.totalorder %v1024, 5
        %v1816 = vcombine.high %v1805, %v1805
        %v1818 = vunpack.c.l.s4 1966171168
        %v1819 = vunpack.c.0.s8 %v1818
        %v1820 = vlaneseq
        %v1821 = vshrl.u32 %v1820, 7
        %v1822 = vsub.s32 %v1819, %v1821
        %v1823 = vrot.slane %v1816, %v1822
        %v1825 = vsel %vm1815, %v1823, %v1814
        %vm1826 = vcmp.eq.s32.totalorder %v1024, 6
        %v1827 = vcombine.high %v1812, %v1812
        %v1829 = vsel %vm1826, %v1827, %v1825
        %vm1830 = vcmp.eq.s32.totalorder %v1024, 7
        %v1831 = vcombine.high %v1823, %v1823
        %v1833 = vsel %vm1830, %v1831, %v1829
        %s1834 = scalar_lea.vmem %s177, 1 [#allocation9]
        %1835 = vst.msk [vmem:[%s1834] ss:$4 sm:$0x3] %vm1017, %v1833
        %s1836 = sld [smem:[#allocation3 + $0x2]]
        %v1837 = vstv %s1836
        %v1838 = vmul.u32 %v180, %v1837
        %v1839 = vshrl.u32 %v1838, 22
        %v1840 = vand.u32 %v1839, 127
        %v1841 = vshra.s32 %v1839, 7
        %v1842 = vlaneseq
        %v1843 = vshrl.u32 %v1842, 7
        %v1844 = vsub.s32 0, %v1843
        %v1845 = vrot.slane %v1840, %v1844
        %v1846 = vlaneseq
        %v1847 = vshrl.u32 %v1846, 7
        %v1848 = vsub.s32 1, %v1847
        %v1849 = vrot.slane %v1840, %v1848
        %vm1850 = vcmp.eq.s32.totalorder %v1845, %v183
        %vm1851 = vcmp.eq.s32.totalorder %v1849, %v183
        %vm1852 = vcmp.eq.s32.totalorder %v1845, %v184
        %vm1853 = vcmp.eq.s32.totalorder %v1849, %v184
        %vm1854 = vcmp.eq.s32.totalorder %v1845, %v185
        %vm1855 = vcmp.eq.s32.totalorder %v1849, %v185
        %vm1856 = vcmp.eq.s32.totalorder %v1845, %v186
        %vm1857 = vcmp.eq.s32.totalorder %v1849, %v186
        %vm1858 = vcmp.eq.s32.totalorder %v1845, %v187
        %vm1859 = vcmp.eq.s32.totalorder %v1849, %v187
        %vm1860 = vcmp.eq.s32.totalorder %v1845, %v188
        %vm1861 = vcmp.eq.s32.totalorder %v1849, %v188
        %vm1862 = vcmp.eq.s32.totalorder %v1845, %v189
        %vm1863 = vcmp.eq.s32.totalorder %v1849, %v189
        %vm1864 = vcmp.eq.s32.totalorder %v1845, %v190
        %vm1865 = vcmp.eq.s32.totalorder %v1849, %v190
        %vm1866 = vcmp.eq.s32.totalorder %v1845, %v191
        %vm1867 = vcmp.eq.s32.totalorder %v1849, %v191
        %vm1868 = vcmp.eq.s32.totalorder %v1845, %v192
        %vm1869 = vcmp.eq.s32.totalorder %v1849, %v192
        %vm1870 = vcmp.eq.s32.totalorder %v1845, %v193
        %vm1871 = vcmp.eq.s32.totalorder %v1849, %v193
        %vm1872 = vcmp.eq.s32.totalorder %v1845, %v194
        %vm1873 = vcmp.eq.s32.totalorder %v1849, %v194
        %vm1874 = vcmp.eq.s32.totalorder %v1845, %v195
        %vm1875 = vcmp.eq.s32.totalorder %v1849, %v195
        %vm1876 = vcmp.eq.s32.totalorder %v1845, %v196
        %vm1877 = vcmp.eq.s32.totalorder %v1849, %v196
        %vm1878 = vcmp.eq.s32.totalorder %v1845, %v197
        %vm1879 = vcmp.eq.s32.totalorder %v1849, %v197
        %vm1880 = vcmp.eq.s32.totalorder %v1845, %v198
        %vm1881 = vcmp.eq.s32.totalorder %v1849, %v198
        %v1882 = vsel %vm1850, 1.0, 0.0
        %v1883 = vsel %vm1851, 1.0, 0.0
        %v1884 = vsel %vm1852, 1.0, 0.0
        %v1885 = vsel %vm1853, 1.0, 0.0
        %v1886 = vsel %vm1854, 1.0, 0.0
        %v1887 = vsel %vm1855, 1.0, 0.0
        %v1888 = vsel %vm1856, 1.0, 0.0
        %v1889 = vsel %vm1857, 1.0, 0.0
        %v1890 = vsel %vm1858, 1.0, 0.0
        %v1891 = vsel %vm1859, 1.0, 0.0
        %v1892 = vsel %vm1860, 1.0, 0.0
        %v1893 = vsel %vm1861, 1.0, 0.0
        %v1894 = vsel %vm1862, 1.0, 0.0
        %v1895 = vsel %vm1863, 1.0, 0.0
        %v1896 = vsel %vm1864, 1.0, 0.0
        %v1897 = vsel %vm1865, 1.0, 0.0
        %v1898 = vsel %vm1866, 1.0, 0.0
        %v1899 = vsel %vm1867, 1.0, 0.0
        %v1900 = vsel %vm1868, 1.0, 0.0
        %v1901 = vsel %vm1869, 1.0, 0.0
        %v1902 = vsel %vm1870, 1.0, 0.0
        %v1903 = vsel %vm1871, 1.0, 0.0
        %v1904 = vsel %vm1872, 1.0, 0.0
        %v1905 = vsel %vm1873, 1.0, 0.0
        %v1906 = vsel %vm1874, 1.0, 0.0
        %v1907 = vsel %vm1875, 1.0, 0.0
        %v1908 = vsel %vm1876, 1.0, 0.0
        %v1909 = vsel %vm1877, 1.0, 0.0
        %v1910 = vsel %vm1878, 1.0, 0.0
        %v1911 = vsel %vm1879, 1.0, 0.0
        %v1912 = vsel %vm1880, 1.0, 0.0
        %v1913 = vsel %vm1881, 1.0, 0.0
        %1914 = vmatprep.subr.mxu0 %v1883
        %1915 = vmatpush1.msra.mxu0 %v1882
        %1916 = vmatprep.subr.mxu0 %v1885
        %1917 = vmatpush1.msra.mxu0 %v1884
        %1918 = vmatprep.subr.mxu0 %v1887
        %1919 = vmatpush1.msra.mxu0 %v1886
        %1920 = vmatprep.subr.mxu0 %v1889
        %1921 = vmatpush1.msra.mxu0 %v1888
        %1922 = vmatprep.subr.mxu0 %v1891
        %1923 = vmatpush1.msra.mxu0 %v1890
        %1924 = vmatprep.subr.mxu0 %v1893
        %1925 = vmatpush1.msra.mxu0 %v1892
        %1926 = vmatprep.subr.mxu0 %v1895
        %1927 = vmatpush1.msra.mxu0 %v1894
        %1928 = vmatprep.subr.mxu0 %v1897
        %1929 = vmatpush1.msra.mxu0 %v1896
        %1930 = vmatprep.subr.mxu0 %v1899
        %1931 = vmatpush1.msra.mxu0 %v1898
        %1932 = vmatprep.subr.mxu0 %v1901
        %1933 = vmatpush1.msra.mxu0 %v1900
        %1934 = vmatprep.subr.mxu0 %v1903
        %1935 = vmatpush1.msra.mxu0 %v1902
        %1936 = vmatprep.subr.mxu0 %v1905
        %1937 = vmatpush1.msra.mxu0 %v1904
        %1938 = vmatprep.subr.mxu0 %v1907
        %1939 = vmatpush1.msra.mxu0 %v1906
        %1940 = vmatprep.subr.mxu0 %v1909
        %1941 = vmatpush1.msra.mxu0 %v1908
        %1942 = vmatprep.subr.mxu0 %v1911
        %1943 = vmatpush1.msra.mxu0 %v1910
        %1944 = vmatprep.subr.mxu0 %v1913
        %1945 = vmatpush1.msra.mxu0 %v1912
        %1946 = vmatprep.subr.mxu0 0.0
        %1947 = vmatpush1.msra.mxu0 0.0
        %1948 = vmatprep.subr.mxu0 0.0
        %1949 = vmatpush1.msra.mxu0 0.0
        %1950 = vmatprep.subr.mxu0 0.0
        %1951 = vmatpush1.msra.mxu0 0.0
        %1952 = vmatprep.subr.mxu0 0.0
        %1953 = vmatpush1.msra.mxu0 0.0
        %1954 = vmatprep.subr.mxu0 0.0
        %1955 = vmatpush1.msra.mxu0 0.0
        %1956 = vmatprep.subr.mxu0 0.0
        %1957 = vmatpush1.msra.mxu0 0.0
        %1958 = vmatprep.subr.mxu0 0.0
        %1959 = vmatpush1.msra.mxu0 0.0
        %1960 = vmatprep.subr.mxu0 0.0
        %1961 = vmatpush1.msra.mxu0 0.0
        %1962 = vmatprep.subr.mxu0 0.0
        %1963 = vmatpush1.msra.mxu0 0.0
        %1964 = vmatprep.subr.mxu0 0.0
        %1965 = vmatpush1.msra.mxu0 0.0
        %1966 = vmatprep.subr.mxu0 0.0
        %1967 = vmatpush1.msra.mxu0 0.0
        %1968 = vmatprep.subr.mxu0 0.0
        %1969 = vmatpush1.msra.mxu0 0.0
        %1970 = vmatprep.subr.mxu0 0.0
        %1971 = vmatpush1.msra.mxu0 0.0
        %1972 = vmatprep.subr.mxu0 0.0
        %1973 = vmatpush1.msra.mxu0 0.0
        %1974 = vmatprep.subr.mxu0 0.0
        %1975 = vmatpush1.msra.mxu0 0.0
        %1976 = vmatprep.subr.mxu0 0.0
        %1977 = vmatpush1.msra.mxu0 0.0
        %1978 = vmatprep.mubr.f32.mxu0 0.0
        %v1979 = vand.u32 %v181, 4294901760
        %v1980 = vsub.f32 %v181, %v1979
        %v1981 = vand.u32 %v1980, 4294901760
        %v1982 = vsub.f32 %v1980, %v1981
        %v1983 = vand.u32 %v1982, 4294901760
        %1984 = vmatmul.mubr.f32.gmra.mrb[0].mxu0 %v1983
        %v1985 = vpop.f32.mrb[0].mxu0
        %v1986 = vadd.f32 0.0, %v1985
        %v1987 = vpop.f32.mrb[0].mxu0
        %v1988 = vadd.f32 0.0, %v1987
        %1989 = vdwg.mxu0
        %v1990 = vsub.f32 %v1883, %v1883
        %v1991 = vand.u32 %v1990, 4294901760
        %v1992 = vsub.f32 %v1990, %v1991
        %v1993 = vand.u32 %v1992, 4294901760
        %1994 = vmatprep.subr.mxu0 %v1993
        %v1995 = vsub.f32 %v1882, %v1882
        %v1996 = vand.u32 %v1995, 4294901760
        %v1997 = vsub.f32 %v1995, %v1996
        %v1998 = vand.u32 %v1997, 4294901760
        %1999 = vmatpush1.msra.mxu0 %v1998
        %v2000 = vsub.f32 %v1885, %v1885
        %v2001 = vand.u32 %v2000, 4294901760
        %v2002 = vsub.f32 %v2000, %v2001
        %v2003 = vand.u32 %v2002, 4294901760
        %2004 = vmatprep.subr.mxu0 %v2003
        %v2005 = vsub.f32 %v1884, %v1884
        %v2006 = vand.u32 %v2005, 4294901760
        %v2007 = vsub.f32 %v2005, %v2006
        %v2008 = vand.u32 %v2007, 4294901760
        %2009 = vmatpush1.msra.mxu0 %v2008
        %v2010 = vsub.f32 %v1887, %v1887
        %v2011 = vand.u32 %v2010, 4294901760
        %v2012 = vsub.f32 %v2010, %v2011
        %v2013 = vand.u32 %v2012, 4294901760
        %2014 = vmatprep.subr.mxu0 %v2013
        %v2015 = vsub.f32 %v1886, %v1886
        %v2016 = vand.u32 %v2015, 4294901760
        %v2017 = vsub.f32 %v2015, %v2016
        %v2018 = vand.u32 %v2017, 4294901760
        %2019 = vmatpush1.msra.mxu0 %v2018
        %v2020 = vsub.f32 %v1889, %v1889
        %v2021 = vand.u32 %v2020, 4294901760
        %v2022 = vsub.f32 %v2020, %v2021
        %v2023 = vand.u32 %v2022, 4294901760
        %2024 = vmatprep.subr.mxu0 %v2023
        %v2025 = vsub.f32 %v1888, %v1888
        %v2026 = vand.u32 %v2025, 4294901760
        %v2027 = vsub.f32 %v2025, %v2026
        %v2028 = vand.u32 %v2027, 4294901760
        %2029 = vmatpush1.msra.mxu0 %v2028
        %v2030 = vsub.f32 %v1891, %v1891
        %v2031 = vand.u32 %v2030, 4294901760
        %v2032 = vsub.f32 %v2030, %v2031
        %v2033 = vand.u32 %v2032, 4294901760
        %2034 = vmatprep.subr.mxu0 %v2033
        %v2035 = vsub.f32 %v1890, %v1890
        %v2036 = vand.u32 %v2035, 4294901760
        %v2037 = vsub.f32 %v2035, %v2036
        %v2038 = vand.u32 %v2037, 4294901760
        %2039 = vmatpush1.msra.mxu0 %v2038
        %v2040 = vsub.f32 %v1893, %v1893
        %v2041 = vand.u32 %v2040, 4294901760
        %v2042 = vsub.f32 %v2040, %v2041
        %v2043 = vand.u32 %v2042, 4294901760
        %2044 = vmatprep.subr.mxu0 %v2043
        %v2045 = vsub.f32 %v1892, %v1892
        %v2046 = vand.u32 %v2045, 4294901760
        %v2047 = vsub.f32 %v2045, %v2046
        %v2048 = vand.u32 %v2047, 4294901760
        %2049 = vmatpush1.msra.mxu0 %v2048
        %v2050 = vsub.f32 %v1895, %v1895
        %v2051 = vand.u32 %v2050, 4294901760
        %v2052 = vsub.f32 %v2050, %v2051
        %v2053 = vand.u32 %v2052, 4294901760
        %2054 = vmatprep.subr.mxu0 %v2053
        %v2055 = vsub.f32 %v1894, %v1894
        %v2056 = vand.u32 %v2055, 4294901760
        %v2057 = vsub.f32 %v2055, %v2056
        %v2058 = vand.u32 %v2057, 4294901760
        %2059 = vmatpush1.msra.mxu0 %v2058
        %v2060 = vsub.f32 %v1897, %v1897
        %v2061 = vand.u32 %v2060, 4294901760
        %v2062 = vsub.f32 %v2060, %v2061
        %v2063 = vand.u32 %v2062, 4294901760
        %2064 = vmatprep.subr.mxu0 %v2063
        %v2065 = vsub.f32 %v1896, %v1896
        %v2066 = vand.u32 %v2065, 4294901760
        %v2067 = vsub.f32 %v2065, %v2066
        %v2068 = vand.u32 %v2067, 4294901760
        %2069 = vmatpush1.msra.mxu0 %v2068
        %v2070 = vsub.f32 %v1899, %v1899
        %v2071 = vand.u32 %v2070, 4294901760
        %v2072 = vsub.f32 %v2070, %v2071
        %v2073 = vand.u32 %v2072, 4294901760
        %2074 = vmatprep.subr.mxu0 %v2073
        %v2075 = vsub.f32 %v1898, %v1898
        %v2076 = vand.u32 %v2075, 4294901760
        %v2077 = vsub.f32 %v2075, %v2076
        %v2078 = vand.u32 %v2077, 4294901760
        %2079 = vmatpush1.msra.mxu0 %v2078
        %v2080 = vsub.f32 %v1901, %v1901
        %v2081 = vand.u32 %v2080, 4294901760
        %v2082 = vsub.f32 %v2080, %v2081
        %v2083 = vand.u32 %v2082, 4294901760
        %2084 = vmatprep.subr.mxu0 %v2083
        %v2085 = vsub.f32 %v1900, %v1900
        %v2086 = vand.u32 %v2085, 4294901760
        %v2087 = vsub.f32 %v2085, %v2086
        %v2088 = vand.u32 %v2087, 4294901760
        %2089 = vmatpush1.msra.mxu0 %v2088
        %v2090 = vsub.f32 %v1903, %v1903
        %v2091 = vand.u32 %v2090, 4294901760
        %v2092 = vsub.f32 %v2090, %v2091
        %v2093 = vand.u32 %v2092, 4294901760
        %2094 = vmatprep.subr.mxu0 %v2093
        %v2095 = vsub.f32 %v1902, %v1902
        %v2096 = vand.u32 %v2095, 4294901760
        %v2097 = vsub.f32 %v2095, %v2096
        %v2098 = vand.u32 %v2097, 4294901760
        %2099 = vmatpush1.msra.mxu0 %v2098
        %v2100 = vsub.f32 %v1905, %v1905
        %v2101 = vand.u32 %v2100, 4294901760
        %v2102 = vsub.f32 %v2100, %v2101
        %v2103 = vand.u32 %v2102, 4294901760
        %2104 = vmatprep.subr.mxu0 %v2103
        %v2105 = vsub.f32 %v1904, %v1904
        %v2106 = vand.u32 %v2105, 4294901760
        %v2107 = vsub.f32 %v2105, %v2106
        %v2108 = vand.u32 %v2107, 4294901760
        %2109 = vmatpush1.msra.mxu0 %v2108
        %v2110 = vsub.f32 %v1907, %v1907
        %v2111 = vand.u32 %v2110, 4294901760
        %v2112 = vsub.f32 %v2110, %v2111
        %v2113 = vand.u32 %v2112, 4294901760
        %2114 = vmatprep.subr.mxu0 %v2113
        %v2115 = vsub.f32 %v1906, %v1906
        %v2116 = vand.u32 %v2115, 4294901760
        %v2117 = vsub.f32 %v2115, %v2116
        %v2118 = vand.u32 %v2117, 4294901760
        %2119 = vmatpush1.msra.mxu0 %v2118
        %v2120 = vsub.f32 %v1909, %v1909
        %v2121 = vand.u32 %v2120, 4294901760
        %v2122 = vsub.f32 %v2120, %v2121
        %v2123 = vand.u32 %v2122, 4294901760
        %2124 = vmatprep.subr.mxu0 %v2123
        %v2125 = vsub.f32 %v1908, %v1908
        %v2126 = vand.u32 %v2125, 4294901760
        %v2127 = vsub.f32 %v2125, %v2126
        %v2128 = vand.u32 %v2127, 4294901760
        %2129 = vmatpush1.msra.mxu0 %v2128
        %v2130 = vsub.f32 %v1911, %v1911
        %v2131 = vand.u32 %v2130, 4294901760
        %v2132 = vsub.f32 %v2130, %v2131
        %v2133 = vand.u32 %v2132, 4294901760
        %2134 = vmatprep.subr.mxu0 %v2133
        %v2135 = vsub.f32 %v1910, %v1910
        %v2136 = vand.u32 %v2135, 4294901760
        %v2137 = vsub.f32 %v2135, %v2136
        %v2138 = vand.u32 %v2137, 4294901760
        %2139 = vmatpush1.msra.mxu0 %v2138
        %v2140 = vsub.f32 %v1913, %v1913
        %v2141 = vand.u32 %v2140, 4294901760
        %v2142 = vsub.f32 %v2140, %v2141
        %v2143 = vand.u32 %v2142, 4294901760
        %2144 = vmatprep.subr.mxu0 %v2143
        %v2145 = vsub.f32 %v1912, %v1912
        %v2146 = vand.u32 %v2145, 4294901760
        %v2147 = vsub.f32 %v2145, %v2146
        %v2148 = vand.u32 %v2147, 4294901760
        %2149 = vmatpush1.msra.mxu0 %v2148
        %2150 = vmatprep.subr.mxu0 0.0
        %2151 = vmatpush1.msra.mxu0 0.0
        %2152 = vmatprep.subr.mxu0 0.0
        %2153 = vmatpush1.msra.mxu0 0.0
        %2154 = vmatprep.subr.mxu0 0.0
        %2155 = vmatpush1.msra.mxu0 0.0
        %2156 = vmatprep.subr.mxu0 0.0
        %2157 = vmatpush1.msra.mxu0 0.0
        %2158 = vmatprep.subr.mxu0 0.0
        %2159 = vmatpush1.msra.mxu0 0.0
        %2160 = vmatprep.subr.mxu0 0.0
        %2161 = vmatpush1.msra.mxu0 0.0
        %2162 = vmatprep.subr.mxu0 0.0
        %2163 = vmatpush1.msra.mxu0 0.0
        %2164 = vmatprep.subr.mxu0 0.0
        %2165 = vmatpush1.msra.mxu0 0.0
        %2166 = vmatprep.subr.mxu0 0.0
        %2167 = vmatpush1.msra.mxu0 0.0
        %2168 = vmatprep.subr.mxu0 0.0
        %2169 = vmatpush1.msra.mxu0 0.0
        %2170 = vmatprep.subr.mxu0 0.0
        %2171 = vmatpush1.msra.mxu0 0.0
        %2172 = vmatprep.subr.mxu0 0.0
        %2173 = vmatpush1.msra.mxu0 0.0
        %2174 = vmatprep.subr.mxu0 0.0
        %2175 = vmatpush1.msra.mxu0 0.0
        %2176 = vmatprep.subr.mxu0 0.0
        %2177 = vmatpush1.msra.mxu0 0.0
        %2178 = vmatprep.subr.mxu0 0.0
        %2179 = vmatpush1.msra.mxu0 0.0
        %2180 = vmatprep.subr.mxu0 0.0
        %2181 = vmatpush1.msra.mxu0 0.0
        %2182 = vmatprep.mubr.f32.mxu0 0.0
        %v2183 = vand.u32 %v181, 4294901760
        %2184 = vmatmul.mubr.f32.gmra.mrb[0].mxu0 %v2183
        %v2185 = vpop.f32.mrb[0].mxu0
        %v2186 = vadd.f32 %v1986, %v2185
        %v2187 = vpop.f32.mrb[0].mxu0
        %v2188 = vadd.f32 %v1988, %v2187
        %2189 = vdwg.mxu0
        %v2190 = vsub.f32 %v1883, %v1883
        %2191 = vmatprep.subr.mxu0 %v2190
        %v2192 = vsub.f32 %v1882, %v1882
        %2193 = vmatpush1.msra.mxu0 %v2192
        %v2194 = vsub.f32 %v1885, %v1885
        %2195 = vmatprep.subr.mxu0 %v2194
        %v2196 = vsub.f32 %v1884, %v1884
        %2197 = vmatpush1.msra.mxu0 %v2196
        %v2198 = vsub.f32 %v1887, %v1887
        %2199 = vmatprep.subr.mxu0 %v2198
        %v2200 = vsub.f32 %v1886, %v1886
        %2201 = vmatpush1.msra.mxu0 %v2200
        %v2202 = vsub.f32 %v1889, %v1889
        %2203 = vmatprep.subr.mxu0 %v2202
        %v2204 = vsub.f32 %v1888, %v1888
        %2205 = vmatpush1.msra.mxu0 %v2204
        %v2206 = vsub.f32 %v1891, %v1891
        %2207 = vmatprep.subr.mxu0 %v2206
        %v2208 = vsub.f32 %v1890, %v1890
        %2209 = vmatpush1.msra.mxu0 %v2208
        %v2210 = vsub.f32 %v1893, %v1893
        %2211 = vmatprep.subr.mxu0 %v2210
        %v2212 = vsub.f32 %v1892, %v1892
        %2213 = vmatpush1.msra.mxu0 %v2212
        %v2214 = vsub.f32 %v1895, %v1895
        %2215 = vmatprep.subr.mxu0 %v2214
        %v2216 = vsub.f32 %v1894, %v1894
        %2217 = vmatpush1.msra.mxu0 %v2216
        %v2218 = vsub.f32 %v1897, %v1897
        %2219 = vmatprep.subr.mxu0 %v2218
        %v2220 = vsub.f32 %v1896, %v1896
        %2221 = vmatpush1.msra.mxu0 %v2220
        %v2222 = vsub.f32 %v1899, %v1899
        %2223 = vmatprep.subr.mxu0 %v2222
        %v2224 = vsub.f32 %v1898, %v1898
        %2225 = vmatpush1.msra.mxu0 %v2224
        %v2226 = vsub.f32 %v1901, %v1901
        %2227 = vmatprep.subr.mxu0 %v2226
        %v2228 = vsub.f32 %v1900, %v1900
        %2229 = vmatpush1.msra.mxu0 %v2228
        %v2230 = vsub.f32 %v1903, %v1903
        %2231 = vmatprep.subr.mxu0 %v2230
        %v2232 = vsub.f32 %v1902, %v1902
        %2233 = vmatpush1.msra.mxu0 %v2232
        %v2234 = vsub.f32 %v1905, %v1905
        %2235 = vmatprep.subr.mxu0 %v2234
        %v2236 = vsub.f32 %v1904, %v1904
        %2237 = vmatpush1.msra.mxu0 %v2236
        %v2238 = vsub.f32 %v1907, %v1907
        %2239 = vmatprep.subr.mxu0 %v2238
        %v2240 = vsub.f32 %v1906, %v1906
        %2241 = vmatpush1.msra.mxu0 %v2240
        %v2242 = vsub.f32 %v1909, %v1909
        %2243 = vmatprep.subr.mxu0 %v2242
        %v2244 = vsub.f32 %v1908, %v1908
        %2245 = vmatpush1.msra.mxu0 %v2244
        %v2246 = vsub.f32 %v1911, %v1911
        %2247 = vmatprep.subr.mxu0 %v2246
        %v2248 = vsub.f32 %v1910, %v1910
        %2249 = vmatpush1.msra.mxu0 %v2248
        %v2250 = vsub.f32 %v1913, %v1913
        %2251 = vmatprep.subr.mxu0 %v2250
        %v2252 = vsub.f32 %v1912, %v1912
        %2253 = vmatpush1.msra.mxu0 %v2252
        %2254 = vmatprep.subr.mxu0 0.0
        %2255 = vmatpush1.msra.mxu0 0.0
        %2256 = vmatprep.subr.mxu0 0.0
        %2257 = vmatpush1.msra.mxu0 0.0
        %2258 = vmatprep.subr.mxu0 0.0
        %2259 = vmatpush1.msra.mxu0 0.0
        %2260 = vmatprep.subr.mxu0 0.0
        %2261 = vmatpush1.msra.mxu0 0.0
        %2262 = vmatprep.subr.mxu0 0.0
        %2263 = vmatpush1.msra.mxu0 0.0
        %2264 = vmatprep.subr.mxu0 0.0
        %2265 = vmatpush1.msra.mxu0 0.0
        %2266 = vmatprep.subr.mxu0 0.0
        %2267 = vmatpush1.msra.mxu0 0.0
        %2268 = vmatprep.subr.mxu0 0.0
        %2269 = vmatpush1.msra.mxu0 0.0
        %2270 = vmatprep.subr.mxu0 0.0
        %2271 = vmatpush1.msra.mxu0 0.0
        %2272 = vmatprep.subr.mxu0 0.0
        %2273 = vmatpush1.msra.mxu0 0.0
        %2274 = vmatprep.subr.mxu0 0.0
        %2275 = vmatpush1.msra.mxu0 0.0
        %2276 = vmatprep.subr.mxu0 0.0
        %2277 = vmatpush1.msra.mxu0 0.0
        %2278 = vmatprep.subr.mxu0 0.0
        %2279 = vmatpush1.msra.mxu0 0.0
        %2280 = vmatprep.subr.mxu0 0.0
        %2281 = vmatpush1.msra.mxu0 0.0
        %2282 = vmatprep.subr.mxu0 0.0
        %2283 = vmatpush1.msra.mxu0 0.0
        %2284 = vmatprep.subr.mxu0 0.0
        %2285 = vmatpush1.msra.mxu0 0.0
        %2286 = vmatprep.mubr.f32.mxu0 0.0
        %v2287 = vand.u32 %v181, 4294901760
        %v2288 = vsub.f32 %v181, %v2287
        %2289 = vmatmul.mubr.f32.gmra.mrb[0].mxu0 %v2288
        %v2290 = vpop.f32.mrb[0].mxu0
        %v2291 = vadd.f32 %v2186, %v2290
        %v2292 = vpop.f32.mrb[0].mxu0
        %v2293 = vadd.f32 %v2188, %v2292
        %2294 = vdwg.mxu0
        %2295 = vmatprep.subr.mxu0 %v1883
        %2296 = vmatpush1.msra.mxu0 %v1882
        %2297 = vmatprep.subr.mxu0 %v1885
        %2298 = vmatpush1.msra.mxu0 %v1884
        %2299 = vmatprep.subr.mxu0 %v1887
        %2300 = vmatpush1.msra.mxu0 %v1886
        %2301 = vmatprep.subr.mxu0 %v1889
        %2302 = vmatpush1.msra.mxu0 %v1888
        %2303 = vmatprep.subr.mxu0 %v1891
        %2304 = vmatpush1.msra.mxu0 %v1890
        %2305 = vmatprep.subr.mxu0 %v1893
        %2306 = vmatpush1.msra.mxu0 %v1892
        %2307 = vmatprep.subr.mxu0 %v1895
        %2308 = vmatpush1.msra.mxu0 %v1894
        %2309 = vmatprep.subr.mxu0 %v1897
        %2310 = vmatpush1.msra.mxu0 %v1896
        %2311 = vmatprep.subr.mxu0 %v1899
        %2312 = vmatpush1.msra.mxu0 %v1898
        %2313 = vmatprep.subr.mxu0 %v1901
        %2314 = vmatpush1.msra.mxu0 %v1900
        %2315 = vmatprep.subr.mxu0 %v1903
        %2316 = vmatpush1.msra.mxu0 %v1902
        %2317 = vmatprep.subr.mxu0 %v1905
        %2318 = vmatpush1.msra.mxu0 %v1904
        %2319 = vmatprep.subr.mxu0 %v1907
        %2320 = vmatpush1.msra.mxu0 %v1906
        %2321 = vmatprep.subr.mxu0 %v1909
        %2322 = vmatpush1.msra.mxu0 %v1908
        %2323 = vmatprep.subr.mxu0 %v1911
        %2324 = vmatpush1.msra.mxu0 %v1910
        %2325 = vmatprep.subr.mxu0 %v1913
        %2326 = vmatpush1.msra.mxu0 %v1912
        %2327 = vmatprep.subr.mxu0 0.0
        %2328 = vmatpush1.msra.mxu0 0.0
        %2329 = vmatprep.subr.mxu0 0.0
        %2330 = vmatpush1.msra.mxu0 0.0
        %2331 = vmatprep.subr.mxu0 0.0
        %2332 = vmatpush1.msra.mxu0 0.0
        %2333 = vmatprep.subr.mxu0 0.0
        %2334 = vmatpush1.msra.mxu0 0.0
        %2335 = vmatprep.subr.mxu0 0.0
        %2336 = vmatpush1.msra.mxu0 0.0
        %2337 = vmatprep.subr.mxu0 0.0
        %2338 = vmatpush1.msra.mxu0 0.0
        %2339 = vmatprep.subr.mxu0 0.0
        %2340 = vmatpush1.msra.mxu0 0.0
        %2341 = vmatprep.subr.mxu0 0.0
        %2342 = vmatpush1.msra.mxu0 0.0
        %2343 = vmatprep.subr.mxu0 0.0
        %2344 = vmatpush1.msra.mxu0 0.0
        %2345 = vmatprep.subr.mxu0 0.0
        %2346 = vmatpush1.msra.mxu0 0.0
        %2347 = vmatprep.subr.mxu0 0.0
        %2348 = vmatpush1.msra.mxu0 0.0
        %2349 = vmatprep.subr.mxu0 0.0
        %2350 = vmatpush1.msra.mxu0 0.0
        %2351 = vmatprep.subr.mxu0 0.0
        %2352 = vmatpush1.msra.mxu0 0.0
        %2353 = vmatprep.subr.mxu0 0.0
        %2354 = vmatpush1.msra.mxu0 0.0
        %2355 = vmatprep.subr.mxu0 0.0
        %2356 = vmatpush1.msra.mxu0 0.0
        %2357 = vmatprep.subr.mxu0 0.0
        %2358 = vmatpush1.msra.mxu0 0.0
        %2359 = vmatprep.mubr.f32.mxu0 0.0
        %v2360 = vand.u32 %v181, 4294901760
        %v2361 = vsub.f32 %v181, %v2360
        %v2362 = vand.u32 %v2361, 4294901760
        %2363 = vmatmul.mubr.f32.gmra.mrb[0].mxu0 %v2362
        %v2364 = vpop.f32.mrb[0].mxu0
        %v2365 = vadd.f32 %v2291, %v2364
        %v2366 = vpop.f32.mrb[0].mxu0
        %v2367 = vadd.f32 %v2293, %v2366
        %2368 = vdwg.mxu0
        %v2369 = vsub.f32 %v1883, %v1883
        %v2370 = vand.u32 %v2369, 4294901760
        %2371 = vmatprep.subr.mxu0 %v2370
        %v2372 = vsub.f32 %v1882, %v1882
        %v2373 = vand.u32 %v2372, 4294901760
        %2374 = vmatpush1.msra.mxu0 %v2373
        %v2375 = vsub.f32 %v1885, %v1885
        %v2376 = vand.u32 %v2375, 4294901760
        %2377 = vmatprep.subr.mxu0 %v2376
        %v2378 = vsub.f32 %v1884, %v1884
        %v2379 = vand.u32 %v2378, 4294901760
        %2380 = vmatpush1.msra.mxu0 %v2379
        %v2381 = vsub.f32 %v1887, %v1887
        %v2382 = vand.u32 %v2381, 4294901760
        %2383 = vmatprep.subr.mxu0 %v2382
        %v2384 = vsub.f32 %v1886, %v1886
        %v2385 = vand.u32 %v2384, 4294901760
        %2386 = vmatpush1.msra.mxu0 %v2385
        %v2387 = vsub.f32 %v1889, %v1889
        %v2388 = vand.u32 %v2387, 4294901760
        %2389 = vmatprep.subr.mxu0 %v2388
        %v2390 = vsub.f32 %v1888, %v1888
        %v2391 = vand.u32 %v2390, 4294901760
        %2392 = vmatpush1.msra.mxu0 %v2391
        %v2393 = vsub.f32 %v1891, %v1891
        %v2394 = vand.u32 %v2393, 4294901760
        %2395 = vmatprep.subr.mxu0 %v2394
        %v2396 = vsub.f32 %v1890, %v1890
        %v2397 = vand.u32 %v2396, 4294901760
        %2398 = vmatpush1.msra.mxu0 %v2397
        %v2399 = vsub.f32 %v1893, %v1893
        %v2400 = vand.u32 %v2399, 4294901760
        %2401 = vmatprep.subr.mxu0 %v2400
        %v2402 = vsub.f32 %v1892, %v1892
        %v2403 = vand.u32 %v2402, 4294901760
        %2404 = vmatpush1.msra.mxu0 %v2403
        %v2405 = vsub.f32 %v1895, %v1895
        %v2406 = vand.u32 %v2405, 4294901760
        %2407 = vmatprep.subr.mxu0 %v2406
        %v2408 = vsub.f32 %v1894, %v1894
        %v2409 = vand.u32 %v2408, 4294901760
        %2410 = vmatpush1.msra.mxu0 %v2409
        %v2411 = vsub.f32 %v1897, %v1897
        %v2412 = vand.u32 %v2411, 4294901760
        %2413 = vmatprep.subr.mxu0 %v2412
        %v2414 = vsub.f32 %v1896, %v1896
        %v2415 = vand.u32 %v2414, 4294901760
        %2416 = vmatpush1.msra.mxu0 %v2415
        %v2417 = vsub.f32 %v1899, %v1899
        %v2418 = vand.u32 %v2417, 4294901760
        %2419 = vmatprep.subr.mxu0 %v2418
        %v2420 = vsub.f32 %v1898, %v1898
        %v2421 = vand.u32 %v2420, 4294901760
        %2422 = vmatpush1.msra.mxu0 %v2421
        %v2423 = vsub.f32 %v1901, %v1901
        %v2424 = vand.u32 %v2423, 4294901760
        %2425 = vmatprep.subr.mxu0 %v2424
        %v2426 = vsub.f32 %v1900, %v1900
        %v2427 = vand.u32 %v2426, 4294901760
        %2428 = vmatpush1.msra.mxu0 %v2427
        %v2429 = vsub.f32 %v1903, %v1903
        %v2430 = vand.u32 %v2429, 4294901760
        %2431 = vmatprep.subr.mxu0 %v2430
        %v2432 = vsub.f32 %v1902, %v1902
        %v2433 = vand.u32 %v2432, 4294901760
        %2434 = vmatpush1.msra.mxu0 %v2433
        %v2435 = vsub.f32 %v1905, %v1905
        %v2436 = vand.u32 %v2435, 4294901760
        %2437 = vmatprep.subr.mxu0 %v2436
        %v2438 = vsub.f32 %v1904, %v1904
        %v2439 = vand.u32 %v2438, 4294901760
        %2440 = vmatpush1.msra.mxu0 %v2439
        %v2441 = vsub.f32 %v1907, %v1907
        %v2442 = vand.u32 %v2441, 4294901760
        %2443 = vmatprep.subr.mxu0 %v2442
        %v2444 = vsub.f32 %v1906, %v1906
        %v2445 = vand.u32 %v2444, 4294901760
        %2446 = vmatpush1.msra.mxu0 %v2445
        %v2447 = vsub.f32 %v1909, %v1909
        %v2448 = vand.u32 %v2447, 4294901760
        %2449 = vmatprep.subr.mxu0 %v2448
        %v2450 = vsub.f32 %v1908, %v1908
        %v2451 = vand.u32 %v2450, 4294901760
        %2452 = vmatpush1.msra.mxu0 %v2451
        %v2453 = vsub.f32 %v1911, %v1911
        %v2454 = vand.u32 %v2453, 4294901760
        %2455 = vmatprep.subr.mxu0 %v2454
        %v2456 = vsub.f32 %v1910, %v1910
        %v2457 = vand.u32 %v2456, 4294901760
        %2458 = vmatpush1.msra.mxu0 %v2457
        %v2459 = vsub.f32 %v1913, %v1913
        %v2460 = vand.u32 %v2459, 4294901760
        %2461 = vmatprep.subr.mxu0 %v2460
        %v2462 = vsub.f32 %v1912, %v1912
        %v2463 = vand.u32 %v2462, 4294901760
        %2464 = vmatpush1.msra.mxu0 %v2463
        %2465 = vmatprep.subr.mxu0 0.0
        %2466 = vmatpush1.msra.mxu0 0.0
        %2467 = vmatprep.subr.mxu0 0.0
        %2468 = vmatpush1.msra.mxu0 0.0
        %2469 = vmatprep.subr.mxu0 0.0
        %2470 = vmatpush1.msra.mxu0 0.0
        %2471 = vmatprep.subr.mxu0 0.0
        %2472 = vmatpush1.msra.mxu0 0.0
        %2473 = vmatprep.subr.mxu0 0.0
        %2474 = vmatpush1.msra.mxu0 0.0
        %2475 = vmatprep.subr.mxu0 0.0
        %2476 = vmatpush1.msra.mxu0 0.0
        %2477 = vmatprep.subr.mxu0 0.0
        %2478 = vmatpush1.msra.mxu0 0.0
        %2479 = vmatprep.subr.mxu0 0.0
        %2480 = vmatpush1.msra.mxu0 0.0
        %2481 = vmatprep.subr.mxu0 0.0
        %2482 = vmatpush1.msra.mxu0 0.0
        %2483 = vmatprep.subr.mxu0 0.0
        %2484 = vmatpush1.msra.mxu0 0.0
        %2485 = vmatprep.subr.mxu0 0.0
        %2486 = vmatpush1.msra.mxu0 0.0
        %2487 = vmatprep.subr.mxu0 0.0
        %2488 = vmatpush1.msra.mxu0 0.0
        %2489 = vmatprep.subr.mxu0 0.0
        %2490 = vmatpush1.msra.mxu0 0.0
        %2491 = vmatprep.subr.mxu0 0.0
        %2492 = vmatpush1.msra.mxu0 0.0
        %2493 = vmatprep.subr.mxu0 0.0
        %2494 = vmatpush1.msra.mxu0 0.0
        %2495 = vmatprep.subr.mxu0 0.0
        %2496 = vmatpush1.msra.mxu0 0.0
        %2497 = vmatprep.mubr.f32.mxu0 0.0
        %v2498 = vand.u32 %v181, 4294901760
        %2499 = vmatmul.mubr.f32.gmra.mrb[0].mxu0 %v2498
        %v2500 = vpop.f32.mrb[0].mxu0
        %v2501 = vadd.f32 %v2365, %v2500
        %v2502 = vpop.f32.mrb[0].mxu0
        %v2503 = vadd.f32 %v2367, %v2502
        %2504 = vdwg.mxu0
        %2505 = vmatprep.subr.mxu0 %v1883
        %2506 = vmatpush1.msra.mxu0 %v1882
        %2507 = vmatprep.subr.mxu0 %v1885
        %2508 = vmatpush1.msra.mxu0 %v1884
        %2509 = vmatprep.subr.mxu0 %v1887
        %2510 = vmatpush1.msra.mxu0 %v1886
        %2511 = vmatprep.subr.mxu0 %v1889
        %2512 = vmatpush1.msra.mxu0 %v1888
        %2513 = vmatprep.subr.mxu0 %v1891
        %2514 = vmatpush1.msra.mxu0 %v1890
        %2515 = vmatprep.subr.mxu0 %v1893
        %2516 = vmatpush1.msra.mxu0 %v1892
        %2517 = vmatprep.subr.mxu0 %v1895
        %2518 = vmatpush1.msra.mxu0 %v1894
        %2519 = vmatprep.subr.mxu0 %v1897
        %2520 = vmatpush1.msra.mxu0 %v1896
        %2521 = vmatprep.subr.mxu0 %v1899
        %2522 = vmatpush1.msra.mxu0 %v1898
        %2523 = vmatprep.subr.mxu0 %v1901
        %2524 = vmatpush1.msra.mxu0 %v1900
        %2525 = vmatprep.subr.mxu0 %v1903
        %2526 = vmatpush1.msra.mxu0 %v1902
        %2527 = vmatprep.subr.mxu0 %v1905
        %2528 = vmatpush1.msra.mxu0 %v1904
        %2529 = vmatprep.subr.mxu0 %v1907
        %2530 = vmatpush1.msra.mxu0 %v1906
        %2531 = vmatprep.subr.mxu0 %v1909
        %2532 = vmatpush1.msra.mxu0 %v1908
        %2533 = vmatprep.subr.mxu0 %v1911
        %2534 = vmatpush1.msra.mxu0 %v1910
        %2535 = vmatprep.subr.mxu0 %v1913
        %2536 = vmatpush1.msra.mxu0 %v1912
        %2537 = vmatprep.subr.mxu0 0.0
        %2538 = vmatpush1.msra.mxu0 0.0
        %2539 = vmatprep.subr.mxu0 0.0
        %2540 = vmatpush1.msra.mxu0 0.0
        %2541 = vmatprep.subr.mxu0 0.0
        %2542 = vmatpush1.msra.mxu0 0.0
        %2543 = vmatprep.subr.mxu0 0.0
        %2544 = vmatpush1.msra.mxu0 0.0
        %2545 = vmatprep.subr.mxu0 0.0
        %2546 = vmatpush1.msra.mxu0 0.0
        %2547 = vmatprep.subr.mxu0 0.0
        %2548 = vmatpush1.msra.mxu0 0.0
        %2549 = vmatprep.subr.mxu0 0.0
        %2550 = vmatpush1.msra.mxu0 0.0
        %2551 = vmatprep.subr.mxu0 0.0
        %2552 = vmatpush1.msra.mxu0 0.0
        %2553 = vmatprep.subr.mxu0 0.0
        %2554 = vmatpush1.msra.mxu0 0.0
        %2555 = vmatprep.subr.mxu0 0.0
        %2556 = vmatpush1.msra.mxu0 0.0
        %2557 = vmatprep.subr.mxu0 0.0
        %2558 = vmatpush1.msra.mxu0 0.0
        %2559 = vmatprep.subr.mxu0 0.0
        %2560 = vmatpush1.msra.mxu0 0.0
        %2561 = vmatprep.subr.mxu0 0.0
        %2562 = vmatpush1.msra.mxu0 0.0
        %2563 = vmatprep.subr.mxu0 0.0
        %2564 = vmatpush1.msra.mxu0 0.0
        %2565 = vmatprep.subr.mxu0 0.0
        %2566 = vmatpush1.msra.mxu0 0.0
        %2567 = vmatprep.subr.mxu0 0.0
        %2568 = vmatpush1.msra.mxu0 0.0
        %2569 = vmatprep.mubr.f32.mxu0 0.0
        %v2570 = vand.u32 %v181, 4294901760
        %2571 = vmatmul.mubr.f32.gmra.mrb[0].mxu0 %v2570
        %v2572 = vpop.f32.mrb[0].mxu0
        %v2573 = vadd.f32 %v2501, %v2572
        %v2574 = vpop.f32.mrb[0].mxu0
        %v2575 = vadd.f32 %v2503, %v2574
        %2576 = vdwg.mxu0
        %vm2577 = vcmp.eq.s32.totalorder %v1841, 1
        %v2580 = vcombine.low %v2573, %v2575
        %v2582 = vunpack.c.l.s4 1966171168
        %v2583 = vunpack.c.0.s8 %v2582
        %v2584 = vlaneseq
        %v2585 = vshrl.u32 %v2584, 7
        %v2586 = vsub.s32 %v2583, %v2585
        %v2587 = vrot.slane %v2580, %v2586
        %v2588 = vcombine.high %v2587, %v2587
        %v2590 = vunpack.c.l.s4 1966171168
        %v2591 = vunpack.c.0.s8 %v2590
        %v2592 = vlaneseq
        %v2593 = vshrl.u32 %v2592, 7
        %v2594 = vsub.s32 %v2591, %v2593
        %v2595 = vrot.slane %v2588, %v2594
        %v2598 = vunpack.c.l.s4 1966171168
        %v2599 = vunpack.c.0.s8 %v2598
        %v2600 = vlaneseq
        %v2601 = vshrl.u32 %v2600, 7
        %v2602 = vsub.s32 %v2599, %v2601
        %v2603 = vrot.slane %v2587, %v2602
        %v2605 = vsel %vm2577, %v2595, %v2603
        %vm2606 = vcmp.eq.s32.totalorder %v1841, 2
        %v2607 = vcombine.high %v2603, %v2603
        %v2609 = vsel %vm2606, %v2607, %v2605
        %vm2610 = vcmp.eq.s32.totalorder %v1841, 3
        %v2611 = vcombine.high %v2595, %v2595
        %v2613 = vsel %vm2610, %v2611, %v2609
        %vm2614 = vcmp.eq.s32.totalorder %v1841, 4
        %v2615 = vcombine.high %v2573, %v2575
        %v2617 = vunpack.c.l.s4 1966171168
        %v2618 = vunpack.c.0.s8 %v2617
        %v2619 = vlaneseq
        %v2620 = vshrl.u32 %v2619, 7
        %v2621 = vsub.s32 %v2618, %v2620
        %v2622 = vrot.slane %v2615, %v2621
        %v2624 = vunpack.c.l.s4 1966171168
        %v2625 = vunpack.c.0.s8 %v2624
        %v2626 = vlaneseq
        %v2627 = vshrl.u32 %v2626, 7
        %v2628 = vsub.s32 %v2625, %v2627
        %v2629 = vrot.slane %v2622, %v2628
        %v2631 = vsel %vm2614, %v2629, %v2613
        %vm2632 = vcmp.eq.s32.totalorder %v1841, 5
        %v2633 = vcombine.high %v2622, %v2622
        %v2635 = vunpack.c.l.s4 1966171168
        %v2636 = vunpack.c.0.s8 %v2635
        %v2637 = vlaneseq
        %v2638 = vshrl.u32 %v2637, 7
        %v2639 = vsub.s32 %v2636, %v2638
        %v2640 = vrot.slane %v2633, %v2639
        %v2642 = vsel %vm2632, %v2640, %v2631
        %vm2643 = vcmp.eq.s32.totalorder %v1841, 6
        %v2644 = vcombine.high %v2629, %v2629
        %v2646 = vsel %vm2643, %v2644, %v2642
        %vm2647 = vcmp.eq.s32.totalorder %v1841, 7
        %v2648 = vcombine.high %v2640, %v2640
        %v2650 = vsel %vm2647, %v2648, %v2646
        %s2651 = scalar_lea.vmem %s177, 2 [#allocation9]
        %2652 = vst.msk [vmem:[%s2651] ss:$4 sm:$0x3] %vm1017, %v2650
        %s2653 = sld [smem:[#allocation3 + $0x3]]
        %v2654 = vstv %s2653
        %v2655 = vmul.u32 %v180, %v2654
        %v2656 = vshrl.u32 %v2655, 22
        %v2657 = vand.u32 %v2656, 127
        %v2658 = vshra.s32 %v2656, 7
        %v2659 = vlaneseq
        %v2660 = vshrl.u32 %v2659, 7
        %v2661 = vsub.s32 0, %v2660
        %v2662 = vrot.slane %v2657, %v2661
        %v2663 = vlaneseq
        %v2664 = vshrl.u32 %v2663, 7
        %v2665 = vsub.s32 1, %v2664
        %v2666 = vrot.slane %v2657, %v2665
        %vm2667 = vcmp.eq.s32.totalorder %v2662, %v183
        %vm2668 = vcmp.eq.s32.totalorder %v2666, %v183
        %vm2669 = vcmp.eq.s32.totalorder %v2662, %v184
        %vm2670 = vcmp.eq.s32.totalorder %v2666, %v184
        %vm2671 = vcmp.eq.s32.totalorder %v2662, %v185
        %vm2672 = vcmp.eq.s32.totalorder %v2666, %v185
        %vm2673 = vcmp.eq.s32.totalorder %v2662, %v186
        %vm2674 = vcmp.eq.s32.totalorder %v2666, %v186
        %vm2675 = vcmp.eq.s32.totalorder %v2662, %v187
        %vm2676 = vcmp.eq.s32.totalorder %v2666, %v187
        %vm2677 = vcmp.eq.s32.totalorder %v2662, %v188
        %vm2678 = vcmp.eq.s32.totalorder %v2666, %v188
        %vm2679 = vcmp.eq.s32.totalorder %v2662, %v189
        %vm2680 = vcmp.eq.s32.totalorder %v2666, %v189
        %vm2681 = vcmp.eq.s32.totalorder %v2662, %v190
        %vm2682 = vcmp.eq.s32.totalorder %v2666, %v190
        %vm2683 = vcmp.eq.s32.totalorder %v2662, %v191
        %vm2684 = vcmp.eq.s32.totalorder %v2666, %v191
        %vm2685 = vcmp.eq.s32.totalorder %v2662, %v192
        %vm2686 = vcmp.eq.s32.totalorder %v2666, %v192
        %vm2687 = vcmp.eq.s32.totalorder %v2662, %v193
        %vm2688 = vcmp.eq.s32.totalorder %v2666, %v193
        %vm2689 = vcmp.eq.s32.totalorder %v2662, %v194
        %vm2690 = vcmp.eq.s32.totalorder %v2666, %v194
        %vm2691 = vcmp.eq.s32.totalorder %v2662, %v195
        %vm2692 = vcmp.eq.s32.totalorder %v2666, %v195
        %vm2693 = vcmp.eq.s32.totalorder %v2662, %v196
        %vm2694 = vcmp.eq.s32.totalorder %v2666, %v196
        %vm2695 = vcmp.eq.s32.totalorder %v2662, %v197
        %vm2696 = vcmp.eq.s32.totalorder %v2666, %v197
        %vm2697 = vcmp.eq.s32.totalorder %v2662, %v198
        %vm2698 = vcmp.eq.s32.totalorder %v2666, %v198
        %v2699 = vsel %vm2667, 1.0, 0.0
        %v2700 = vsel %vm2668, 1.0, 0.0
        %v2701 = vsel %vm2669, 1.0, 0.0
        %v2702 = vsel %vm2670, 1.0, 0.0
        %v2703 = vsel %vm2671, 1.0, 0.0
        %v2704 = vsel %vm2672, 1.0, 0.0
        %v2705 = vsel %vm2673, 1.0, 0.0
        %v2706 = vsel %vm2674, 1.0, 0.0
        %v2707 = vsel %vm2675, 1.0, 0.0
        %v2708 = vsel %vm2676, 1.0, 0.0
        %v2709 = vsel %vm2677, 1.0, 0.0
        %v2710 = vsel %vm2678, 1.0, 0.0
        %v2711 = vsel %vm2679, 1.0, 0.0
        %v2712 = vsel %vm2680, 1.0, 0.0
        %v2713 = vsel %vm2681, 1.0, 0.0
        %v2714 = vsel %vm2682, 1.0, 0.0
        %v2715 = vsel %vm2683, 1.0, 0.0
        %v2716 = vsel %vm2684, 1.0, 0.0
        %v2717 = vsel %vm2685, 1.0, 0.0
        %v2718 = vsel %vm2686, 1.0, 0.0
        %v2719 = vsel %vm2687, 1.0, 0.0
        %v2720 = vsel %vm2688, 1.0, 0.0
        %v2721 = vsel %vm2689, 1.0, 0.0
        %v2722 = vsel %vm2690, 1.0, 0.0
        %v2723 = vsel %vm2691, 1.0, 0.0
        %v2724 = vsel %vm2692, 1.0, 0.0
        %v2725 = vsel %vm2693, 1.0, 0.0
        %v2726 = vsel %vm2694, 1.0, 0.0
        %v2727 = vsel %vm2695, 1.0, 0.0
        %v2728 = vsel %vm2696, 1.0, 0.0
        %v2729 = vsel %vm2697, 1.0, 0.0
        %v2730 = vsel %vm2698, 1.0, 0.0
        %2731 = vmatprep.subr.mxu0 %v2700
        %2732 = vmatpush1.msra.mxu0 %v2699
        %2733 = vmatprep.subr.mxu0 %v2702
        %2734 = vmatpush1.msra.mxu0 %v2701
        %2735 = vmatprep.subr.mxu0 %v2704
        %2736 = vmatpush1.msra.mxu0 %v2703
        %2737 = vmatprep.subr.mxu0 %v2706
        %2738 = vmatpush1.msra.mxu0 %v2705
        %2739 = vmatprep.subr.mxu0 %v2708
        %2740 = vmatpush1.msra.mxu0 %v2707
        %2741 = vmatprep.subr.mxu0 %v2710
        %2742 = vmatpush1.msra.mxu0 %v2709
        %2743 = vmatprep.subr.mxu0 %v2712
        %2744 = vmatpush1.msra.mxu0 %v2711
        %2745 = vmatprep.subr.mxu0 %v2714
        %2746 = vmatpush1.msra.mxu0 %v2713
        %2747 = vmatprep.subr.mxu0 %v2716
        %2748 = vmatpush1.msra.mxu0 %v2715
        %2749 = vmatprep.subr.mxu0 %v2718
        %2750 = vmatpush1.msra.mxu0 %v2717
        %2751 = vmatprep.subr.mxu0 %v2720
        %2752 = vmatpush1.msra.mxu0 %v2719
        %2753 = vmatprep.subr.mxu0 %v2722
        %2754 = vmatpush1.msra.mxu0 %v2721
        %2755 = vmatprep.subr.mxu0 %v2724
        %2756 = vmatpush1.msra.mxu0 %v2723
        %2757 = vmatprep.subr.mxu0 %v2726
        %2758 = vmatpush1.msra.mxu0 %v2725
        %2759 = vmatprep.subr.mxu0 %v2728
        %2760 = vmatpush1.msra.mxu0 %v2727
        %2761 = vmatprep.subr.mxu0 %v2730
        %2762 = vmatpush1.msra.mxu0 %v2729
        %2763 = vmatprep.subr.mxu0 0.0
        %2764 = vmatpush1.msra.mxu0 0.0
        %2765 = vmatprep.subr.mxu0 0.0
        %2766 = vmatpush1.msra.mxu0 0.0
        %2767 = vmatprep.subr.mxu0 0.0
        %2768 = vmatpush1.msra.mxu0 0.0
        %2769 = vmatprep.subr.mxu0 0.0
        %2770 = vmatpush1.msra.mxu0 0.0
        %2771 = vmatprep.subr.mxu0 0.0
        %2772 = vmatpush1.msra.mxu0 0.0
        %2773 = vmatprep.subr.mxu0 0.0
        %2774 = vmatpush1.msra.mxu0 0.0
        %2775 = vmatprep.subr.mxu0 0.0
        %2776 = vmatpush1.msra.mxu0 0.0
        %2777 = vmatprep.subr.mxu0 0.0
        %2778 = vmatpush1.msra.mxu0 0.0
        %2779 = vmatprep.subr.mxu0 0.0
        %2780 = vmatpush1.msra.mxu0 0.0
        %2781 = vmatprep.subr.mxu0 0.0
        %2782 = vmatpush1.msra.mxu0 0.0
        %2783 = vmatprep.subr.mxu0 0.0
        %2784 = vmatpush1.msra.mxu0 0.0
        %2785 = vmatprep.subr.mxu0 0.0
        %2786 = vmatpush1.msra.mxu0 0.0
        %2787 = vmatprep.subr.mxu0 0.0
        %2788 = vmatpush1.msra.mxu0 0.0
        %2789 = vmatprep.subr.mxu0 0.0
        %2790 = vmatpush1.msra.mxu0 0.0
        %2791 = vmatprep.subr.mxu0 0.0
        %2792 = vmatpush1.msra.mxu0 0.0
        %2793 = vmatprep.subr.mxu0 0.0
        %2794 = vmatpush1.msra.mxu0 0.0
        %2795 = vmatprep.mubr.f32.mxu0 0.0
        %v2796 = vand.u32 %v181, 4294901760
        %v2797 = vsub.f32 %v181, %v2796
        %v2798 = vand.u32 %v2797, 4294901760
        %v2799 = vsub.f32 %v2797, %v2798
        %v2800 = vand.u32 %v2799, 4294901760
        %2801 = vmatmul.mubr.f32.gmra.mrb[0].mxu0 %v2800
        %v2802 = vpop.f32.mrb[0].mxu0
        %v2803 = vadd.f32 0.0, %v2802
        %v2804 = vpop.f32.mrb[0].mxu0
        %v2805 = vadd.f32 0.0, %v2804
        %2806 = vdwg.mxu0
        %v2807 = vsub.f32 %v2700, %v2700
        %v2808 = vand.u32 %v2807, 4294901760
        %v2809 = vsub.f32 %v2807, %v2808
        %v2810 = vand.u32 %v2809, 4294901760
        %2811 = vmatprep.subr.mxu0 %v2810
        %v2812 = vsub.f32 %v2699, %v2699
        %v2813 = vand.u32 %v2812, 4294901760
        %v2814 = vsub.f32 %v2812, %v2813
        %v2815 = vand.u32 %v2814, 4294901760
        %2816 = vmatpush1.msra.mxu0 %v2815
        %v2817 = vsub.f32 %v2702, %v2702
        %v2818 = vand.u32 %v2817, 4294901760
        %v2819 = vsub.f32 %v2817, %v2818
        %v2820 = vand.u32 %v2819, 4294901760
        %2821 = vmatprep.subr.mxu0 %v2820
        %v2822 = vsub.f32 %v2701, %v2701
        %v2823 = vand.u32 %v2822, 4294901760
        %v2824 = vsub.f32 %v2822, %v2823
        %v2825 = vand.u32 %v2824, 4294901760
        %2826 = vmatpush1.msra.mxu0 %v2825
        %v2827 = vsub.f32 %v2704, %v2704
        %v2828 = vand.u32 %v2827, 4294901760
        %v2829 = vsub.f32 %v2827, %v2828
        %v2830 = vand.u32 %v2829, 4294901760
        %2831 = vmatprep.subr.mxu0 %v2830
        %v2832 = vsub.f32 %v2703, %v2703
        %v2833 = vand.u32 %v2832, 4294901760
        %v2834 = vsub.f32 %v2832, %v2833
        %v2835 = vand.u32 %v2834, 4294901760
        %2836 = vmatpush1.msra.mxu0 %v2835
        %v2837 = vsub.f32 %v2706, %v2706
        %v2838 = vand.u32 %v2837, 4294901760
        %v2839 = vsub.f32 %v2837, %v2838
        %v2840 = vand.u32 %v2839, 4294901760
        %2841 = vmatprep.subr.mxu0 %v2840
        %v2842 = vsub.f32 %v2705, %v2705
        %v2843 = vand.u32 %v2842, 4294901760
        %v2844 = vsub.f32 %v2842, %v2843
        %v2845 = vand.u32 %v2844, 4294901760
        %2846 = vmatpush1.msra.mxu0 %v2845
        %v2847 = vsub.f32 %v2708, %v2708
        %v2848 = vand.u32 %v2847, 4294901760
        %v2849 = vsub.f32 %v2847, %v2848
        %v2850 = vand.u32 %v2849, 4294901760
        %2851 = vmatprep.subr.mxu0 %v2850
        %v2852 = vsub.f32 %v2707, %v2707
        %v2853 = vand.u32 %v2852, 4294901760
        %v2854 = vsub.f32 %v2852, %v2853
        %v2855 = vand.u32 %v2854, 4294901760
        %2856 = vmatpush1.msra.mxu0 %v2855
        %v2857 = vsub.f32 %v2710, %v2710
        %v2858 = vand.u32 %v2857, 4294901760
        %v2859 = vsub.f32 %v2857, %v2858
        %v2860 = vand.u32 %v2859, 4294901760
        %2861 = vmatprep.subr.mxu0 %v2860
        %v2862 = vsub.f32 %v2709, %v2709
        %v2863 = vand.u32 %v2862, 4294901760
        %v2864 = vsub.f32 %v2862, %v2863
        %v2865 = vand.u32 %v2864, 4294901760
        %2866 = vmatpush1.msra.mxu0 %v2865
        %v2867 = vsub.f32 %v2712, %v2712
        %v2868 = vand.u32 %v2867, 4294901760
        %v2869 = vsub.f32 %v2867, %v2868
        %v2870 = vand.u32 %v2869, 4294901760
        %2871 = vmatprep.subr.mxu0 %v2870
        %v2872 = vsub.f32 %v2711, %v2711
        %v2873 = vand.u32 %v2872, 4294901760
        %v2874 = vsub.f32 %v2872, %v2873
        %v2875 = vand.u32 %v2874, 4294901760
        %2876 = vmatpush1.msra.mxu0 %v2875
        %v2877 = vsub.f32 %v2714, %v2714
        %v2878 = vand.u32 %v2877, 4294901760
        %v2879 = vsub.f32 %v2877, %v2878
        %v2880 = vand.u32 %v2879, 4294901760
        %2881 = vmatprep.subr.mxu0 %v2880
        %v2882 = vsub.f32 %v2713, %v2713
        %v2883 = vand.u32 %v2882, 4294901760
        %v2884 = vsub.f32 %v2882, %v2883
        %v2885 = vand.u32 %v2884, 4294901760
        %2886 = vmatpush1.msra.mxu0 %v2885
        %v2887 = vsub.f32 %v2716, %v2716
        %v2888 = vand.u32 %v2887, 4294901760
        %v2889 = vsub.f32 %v2887, %v2888
        %v2890 = vand.u32 %v2889, 4294901760
        %2891 = vmatprep.subr.mxu0 %v2890
        %v2892 = vsub.f32 %v2715, %v2715
        %v2893 = vand.u32 %v2892, 4294901760
        %v2894 = vsub.f32 %v2892, %v2893
        %v2895 = vand.u32 %v2894, 4294901760
        %2896 = vmatpush1.msra.mxu0 %v2895
        %v2897 = vsub.f32 %v2718, %v2718
        %v2898 = vand.u32 %v2897, 4294901760
        %v2899 = vsub.f32 %v2897, %v2898
        %v2900 = vand.u32 %v2899, 4294901760
        %2901 = vmatprep.subr.mxu0 %v2900
        %v2902 = vsub.f32 %v2717, %v2717
        %v2903 = vand.u32 %v2902, 4294901760
        %v2904 = vsub.f32 %v2902, %v2903
        %v2905 = vand.u32 %v2904, 4294901760
        %2906 = vmatpush1.msra.mxu0 %v2905
        %v2907 = vsub.f32 %v2720, %v2720
        %v2908 = vand.u32 %v2907, 4294901760
        %v2909 = vsub.f32 %v2907, %v2908
        %v2910 = vand.u32 %v2909, 4294901760
        %2911 = vmatprep.subr.mxu0 %v2910
        %v2912 = vsub.f32 %v2719, %v2719
        %v2913 = vand.u32 %v2912, 4294901760
        %v2914 = vsub.f32 %v2912, %v2913
        %v2915 = vand.u32 %v2914, 4294901760
        %2916 = vmatpush1.msra.mxu0 %v2915
        %v2917 = vsub.f32 %v2722, %v2722
        %v2918 = vand.u32 %v2917, 4294901760
        %v2919 = vsub.f32 %v2917, %v2918
        %v2920 = vand.u32 %v2919, 4294901760
        %2921 = vmatprep.subr.mxu0 %v2920
        %v2922 = vsub.f32 %v2721, %v2721
        %v2923 = vand.u32 %v2922, 4294901760
        %v2924 = vsub.f32 %v2922, %v2923
        %v2925 = vand.u32 %v2924, 4294901760
        %2926 = vmatpush1.msra.mxu0 %v2925
        %v2927 = vsub.f32 %v2724, %v2724
        %v2928 = vand.u32 %v2927, 4294901760
        %v2929 = vsub.f32 %v2927, %v2928
        %v2930 = vand.u32 %v2929, 4294901760
        %2931 = vmatprep.subr.mxu0 %v2930
        %v2932 = vsub.f32 %v2723, %v2723
        %v2933 = vand.u32 %v2932, 4294901760
        %v2934 = vsub.f32 %v2932, %v2933
        %v2935 = vand.u32 %v2934, 4294901760
        %2936 = vmatpush1.msra.mxu0 %v2935
        %v2937 = vsub.f32 %v2726, %v2726
        %v2938 = vand.u32 %v2937, 4294901760
        %v2939 = vsub.f32 %v2937, %v2938
        %v2940 = vand.u32 %v2939, 4294901760
        %2941 = vmatprep.subr.mxu0 %v2940
        %v2942 = vsub.f32 %v2725, %v2725
        %v2943 = vand.u32 %v2942, 4294901760
        %v2944 = vsub.f32 %v2942, %v2943
        %v2945 = vand.u32 %v2944, 4294901760
        %2946 = vmatpush1.msra.mxu0 %v2945
        %v2947 = vsub.f32 %v2728, %v2728
        %v2948 = vand.u32 %v2947, 4294901760
        %v2949 = vsub.f32 %v2947, %v2948
        %v2950 = vand.u32 %v2949, 4294901760
        %2951 = vmatprep.subr.mxu0 %v2950
        %v2952 = vsub.f32 %v2727, %v2727
        %v2953 = vand.u32 %v2952, 4294901760
        %v2954 = vsub.f32 %v2952, %v2953
        %v2955 = vand.u32 %v2954, 4294901760
        %2956 = vmatpush1.msra.mxu0 %v2955
        %v2957 = vsub.f32 %v2730, %v2730
        %v2958 = vand.u32 %v2957, 4294901760
        %v2959 = vsub.f32 %v2957, %v2958
        %v2960 = vand.u32 %v2959, 4294901760
        %2961 = vmatprep.subr.mxu0 %v2960
        %v2962 = vsub.f32 %v2729, %v2729
        %v2963 = vand.u32 %v2962, 4294901760
        %v2964 = vsub.f32 %v2962, %v2963
        %v2965 = vand.u32 %v2964, 4294901760
        %2966 = vmatpush1.msra.mxu0 %v2965
        %2967 = vmatprep.subr.mxu0 0.0
        %2968 = vmatpush1.msra.mxu0 0.0
        %2969 = vmatprep.subr.mxu0 0.0
        %2970 = vmatpush1.msra.mxu0 0.0
        %2971 = vmatprep.subr.mxu0 0.0
        %2972 = vmatpush1.msra.mxu0 0.0
        %2973 = vmatprep.subr.mxu0 0.0
        %2974 = vmatpush1.msra.mxu0 0.0
        %2975 = vmatprep.subr.mxu0 0.0
        %2976 = vmatpush1.msra.mxu0 0.0
        %2977 = vmatprep.subr.mxu0 0.0
        %2978 = vmatpush1.msra.mxu0 0.0
        %2979 = vmatprep.subr.mxu0 0.0
        %2980 = vmatpush1.msra.mxu0 0.0
        %2981 = vmatprep.subr.mxu0 0.0
        %2982 = vmatpush1.msra.mxu0 0.0
        %2983 = vmatprep.subr.mxu0 0.0
        %2984 = vmatpush1.msra.mxu0 0.0
        %2985 = vmatprep.subr.mxu0 0.0
        %2986 = vmatpush1.msra.mxu0 0.0
        %2987 = vmatprep.subr.mxu0 0.0
        %2988 = vmatpush1.msra.mxu0 0.0
        %2989 = vmatprep.subr.mxu0 0.0
        %2990 = vmatpush1.msra.mxu0 0.0
        %2991 = vmatprep.subr.mxu0 0.0
        %2992 = vmatpush1.msra.mxu0 0.0
        %2993 = vmatprep.subr.mxu0 0.0
        %2994 = vmatpush1.msra.mxu0 0.0
        %2995 = vmatprep.subr.mxu0 0.0
        %2996 = vmatpush1.msra.mxu0 0.0
        %2997 = vmatprep.subr.mxu0 0.0
        %2998 = vmatpush1.msra.mxu0 0.0
        %2999 = vmatprep.mubr.f32.mxu0 0.0
        %v3000 = vand.u32 %v181, 4294901760
        %3001 = vmatmul.mubr.f32.gmra.mrb[0].mxu0 %v3000
        %v3002 = vpop.f32.mrb[0].mxu0
        %v3003 = vadd.f32 %v2803, %v3002
        %v3004 = vpop.f32.mrb[0].mxu0
        %v3005 = vadd.f32 %v2805, %v3004
        %3006 = vdwg.mxu0
        %v3007 = vsub.f32 %v2700, %v2700
        %3008 = vmatprep.subr.mxu0 %v3007
        %v3009 = vsub.f32 %v2699, %v2699
        %3010 = vmatpush1.msra.mxu0 %v3009
        %v3011 = vsub.f32 %v2702, %v2702
        %3012 = vmatprep.subr.mxu0 %v3011
        %v3013 = vsub.f32 %v2701, %v2701
        %3014 = vmatpush1.msra.mxu0 %v3013
        %v3015 = vsub.f32 %v2704, %v2704
        %3016 = vmatprep.subr.mxu0 %v3015
        %v3017 = vsub.f32 %v2703, %v2703
        %3018 = vmatpush1.msra.mxu0 %v3017
        %v3019 = vsub.f32 %v2706, %v2706
        %3020 = vmatprep.subr.mxu0 %v3019
        %v3021 = vsub.f32 %v2705, %v2705
        %3022 = vmatpush1.msra.mxu0 %v3021
        %v3023 = vsub.f32 %v2708, %v2708
        %3024 = vmatprep.subr.mxu0 %v3023
        %v3025 = vsub.f32 %v2707, %v2707
        %3026 = vmatpush1.msra.mxu0 %v3025
        %v3027 = vsub.f32 %v2710, %v2710
        %3028 = vmatprep.subr.mxu0 %v3027
        %v3029 = vsub.f32 %v2709, %v2709
        %3030 = vmatpush1.msra.mxu0 %v3029
        %v3031 = vsub.f32 %v2712, %v2712
        %3032 = vmatprep.subr.mxu0 %v3031
        %v3033 = vsub.f32 %v2711, %v2711
        %3034 = vmatpush1.msra.mxu0 %v3033
        %v3035 = vsub.f32 %v2714, %v2714
        %3036 = vmatprep.subr.mxu0 %v3035
        %v3037 = vsub.f32 %v2713, %v2713
        %3038 = vmatpush1.msra.mxu0 %v3037
        %v3039 = vsub.f32 %v2716, %v2716
        %3040 = vmatprep.subr.mxu0 %v3039
        %v3041 = vsub.f32 %v2715, %v2715
        %3042 = vmatpush1.msra.mxu0 %v3041
        %v3043 = vsub.f32 %v2718, %v2718
        %3044 = vmatprep.subr.mxu0 %v3043
        %v3045 = vsub.f32 %v2717, %v2717
        %3046 = vmatpush1.msra.mxu0 %v3045
        %v3047 = vsub.f32 %v2720, %v2720
        %3048 = vmatprep.subr.mxu0 %v3047
        %v3049 = vsub.f32 %v2719, %v2719
        %3050 = vmatpush1.msra.mxu0 %v3049
        %v3051 = vsub.f32 %v2722, %v2722
        %3052 = vmatprep.subr.mxu0 %v3051
        %v3053 = vsub.f32 %v2721, %v2721
        %3054 = vmatpush1.msra.mxu0 %v3053
        %v3055 = vsub.f32 %v2724, %v2724
        %3056 = vmatprep.subr.mxu0 %v3055
        %v3057 = vsub.f32 %v2723, %v2723
        %3058 = vmatpush1.msra.mxu0 %v3057
        %v3059 = vsub.f32 %v2726, %v2726
        %3060 = vmatprep.subr.mxu0 %v3059
        %v3061 = vsub.f32 %v2725, %v2725
        %3062 = vmatpush1.msra.mxu0 %v3061
        %v3063 = vsub.f32 %v2728, %v2728
        %3064 = vmatprep.subr.mxu0 %v3063
        %v3065 = vsub.f32 %v2727, %v2727
        %3066 = vmatpush1.msra.mxu0 %v3065
        %v3067 = vsub.f32 %v2730, %v2730
        %3068 = vmatprep.subr.mxu0 %v3067
        %v3069 = vsub.f32 %v2729, %v2729
        %3070 = vmatpush1.msra.mxu0 %v3069
        %3071 = vmatprep.subr.mxu0 0.0
        %3072 = vmatpush1.msra.mxu0 0.0
        %3073 = vmatprep.subr.mxu0 0.0
        %3074 = vmatpush1.msra.mxu0 0.0
        %3075 = vmatprep.subr.mxu0 0.0
        %3076 = vmatpush1.msra.mxu0 0.0
        %3077 = vmatprep.subr.mxu0 0.0
        %3078 = vmatpush1.msra.mxu0 0.0
        %3079 = vmatprep.subr.mxu0 0.0
        %3080 = vmatpush1.msra.mxu0 0.0
        %3081 = vmatprep.subr.mxu0 0.0
        %3082 = vmatpush1.msra.mxu0 0.0
        %3083 = vmatprep.subr.mxu0 0.0
        %3084 = vmatpush1.msra.mxu0 0.0
        %3085 = vmatprep.subr.mxu0 0.0
        %3086 = vmatpush1.msra.mxu0 0.0
        %3087 = vmatprep.subr.mxu0 0.0
        %3088 = vmatpush1.msra.mxu0 0.0
        %3089 = vmatprep.subr.mxu0 0.0
        %3090 = vmatpush1.msra.mxu0 0.0
        %3091 = vmatprep.subr.mxu0 0.0
        %3092 = vmatpush1.msra.mxu0 0.0
        %3093 = vmatprep.subr.mxu0 0.0
        %3094 = vmatpush1.msra.mxu0 0.0
        %3095 = vmatprep.subr.mxu0 0.0
        %3096 = vmatpush1.msra.mxu0 0.0
        %3097 = vmatprep.subr.mxu0 0.0
        %3098 = vmatpush1.msra.mxu0 0.0
        %3099 = vmatprep.subr.mxu0 0.0
        %3100 = vmatpush1.msra.mxu0 0.0
        %3101 = vmatprep.subr.mxu0 0.0
        %3102 = vmatpush1.msra.mxu0 0.0
        %3103 = vmatprep.mubr.f32.mxu0 0.0
        %v3104 = vand.u32 %v181, 4294901760
        %v3105 = vsub.f32 %v181, %v3104
        %3106 = vmatmul.mubr.f32.gmra.mrb[0].mxu0 %v3105
        %v3107 = vpop.f32.mrb[0].mxu0
        %v3108 = vadd.f32 %v3003, %v3107
        %v3109 = vpop.f32.mrb[0].mxu0
        %v3110 = vadd.f32 %v3005, %v3109
        %3111 = vdwg.mxu0
        %3112 = vmatprep.subr.mxu0 %v2700
        %3113 = vmatpush1.msra.mxu0 %v2699
        %3114 = vmatprep.subr.mxu0 %v2702
        %3115 = vmatpush1.msra.mxu0 %v2701
        %3116 = vmatprep.subr.mxu0 %v2704
        %3117 = vmatpush1.msra.mxu0 %v2703
        %3118 = vmatprep.subr.mxu0 %v2706
        %3119 = vmatpush1.msra.mxu0 %v2705
        %3120 = vmatprep.subr.mxu0 %v2708
        %3121 = vmatpush1.msra.mxu0 %v2707
        %3122 = vmatprep.subr.mxu0 %v2710
        %3123 = vmatpush1.msra.mxu0 %v2709
        %3124 = vmatprep.subr.mxu0 %v2712
        %3125 = vmatpush1.msra.mxu0 %v2711
        %3126 = vmatprep.subr.mxu0 %v2714
        %3127 = vmatpush1.msra.mxu0 %v2713
        %3128 = vmatprep.subr.mxu0 %v2716
        %3129 = vmatpush1.msra.mxu0 %v2715
        %3130 = vmatprep.subr.mxu0 %v2718
        %3131 = vmatpush1.msra.mxu0 %v2717
        %3132 = vmatprep.subr.mxu0 %v2720
        %3133 = vmatpush1.msra.mxu0 %v2719
        %3134 = vmatprep.subr.mxu0 %v2722
        %3135 = vmatpush1.msra.mxu0 %v2721
        %3136 = vmatprep.subr.mxu0 %v2724
        %3137 = vmatpush1.msra.mxu0 %v2723
        %3138 = vmatprep.subr.mxu0 %v2726
        %3139 = vmatpush1.msra.mxu0 %v2725
        %3140 = vmatprep.subr.mxu0 %v2728
        %3141 = vmatpush1.msra.mxu0 %v2727
        %3142 = vmatprep.subr.mxu0 %v2730
        %3143 = vmatpush1.msra.mxu0 %v2729
        %3144 = vmatprep.subr.mxu0 0.0
        %3145 = vmatpush1.msra.mxu0 0.0
        %3146 = vmatprep.subr.mxu0 0.0
        %3147 = vmatpush1.msra.mxu0 0.0
        %3148 = vmatprep.subr.mxu0 0.0
        %3149 = vmatpush1.msra.mxu0 0.0
        %3150 = vmatprep.subr.mxu0 0.0
        %3151 = vmatpush1.msra.mxu0 0.0
        %3152 = vmatprep.subr.mxu0 0.0
        %3153 = vmatpush1.msra.mxu0 0.0
        %3154 = vmatprep.subr.mxu0 0.0
        %3155 = vmatpush1.msra.mxu0 0.0
        %3156 = vmatprep.subr.mxu0 0.0
        %3157 = vmatpush1.msra.mxu0 0.0
        %3158 = vmatprep.subr.mxu0 0.0
        %3159 = vmatpush1.msra.mxu0 0.0
        %3160 = vmatprep.subr.mxu0 0.0
        %3161 = vmatpush1.msra.mxu0 0.0
        %3162 = vmatprep.subr.mxu0 0.0
        %3163 = vmatpush1.msra.mxu0 0.0
        %3164 = vmatprep.subr.mxu0 0.0
        %3165 = vmatpush1.msra.mxu0 0.0
        %3166 = vmatprep.subr.mxu0 0.0
        %3167 = vmatpush1.msra.mxu0 0.0
        %3168 = vmatprep.subr.mxu0 0.0
        %3169 = vmatpush1.msra.mxu0 0.0
        %3170 = vmatprep.subr.mxu0 0.0
        %3171 = vmatpush1.msra.mxu0 0.0
        %3172 = vmatprep.subr.mxu0 0.0
        %3173 = vmatpush1.msra.mxu0 0.0
        %3174 = vmatprep.subr.mxu0 0.0
        %3175 = vmatpush1.msra.mxu0 0.0
        %3176 = vmatprep.mubr.f32.mxu0 0.0
        %v3177 = vand.u32 %v181, 4294901760
        %v3178 = vsub.f32 %v181, %v3177
        %v3179 = vand.u32 %v3178, 4294901760
        %3180 = vmatmul.mubr.f32.gmra.mrb[0].mxu0 %v3179
        %v3181 = vpop.f32.mrb[0].mxu0
        %v3182 = vadd.f32 %v3108, %v3181
        %v3183 = vpop.f32.mrb[0].mxu0
        %v3184 = vadd.f32 %v3110, %v3183
        %3185 = vdwg.mxu0
        %v3186 = vsub.f32 %v2700, %v2700
        %v3187 = vand.u32 %v3186, 4294901760
        %3188 = vmatprep.subr.mxu0 %v3187
        %v3189 = vsub.f32 %v2699, %v2699
        %v3190 = vand.u32 %v3189, 4294901760
        %3191 = vmatpush1.msra.mxu0 %v3190
        %v3192 = vsub.f32 %v2702, %v2702
        %v3193 = vand.u32 %v3192, 4294901760
        %3194 = vmatprep.subr.mxu0 %v3193
        %v3195 = vsub.f32 %v2701, %v2701
        %v3196 = vand.u32 %v3195, 4294901760
        %3197 = vmatpush1.msra.mxu0 %v3196
        %v3198 = vsub.f32 %v2704, %v2704
        %v3199 = vand.u32 %v3198, 4294901760
        %3200 = vmatprep.subr.mxu0 %v3199
        %v3201 = vsub.f32 %v2703, %v2703
        %v3202 = vand.u32 %v3201, 4294901760
        %3203 = vmatpush1.msra.mxu0 %v3202
        %v3204 = vsub.f32 %v2706, %v2706
        %v3205 = vand.u32 %v3204, 4294901760
        %3206 = vmatprep.subr.mxu0 %v3205
        %v3207 = vsub.f32 %v2705, %v2705
        %v3208 = vand.u32 %v3207, 4294901760
        %3209 = vmatpush1.msra.mxu0 %v3208
        %v3210 = vsub.f32 %v2708, %v2708
        %v3211 = vand.u32 %v3210, 4294901760
        %3212 = vmatprep.subr.mxu0 %v3211
        %v3213 = vsub.f32 %v2707, %v2707
        %v3214 = vand.u32 %v3213, 4294901760
        %3215 = vmatpush1.msra.mxu0 %v3214
        %v3216 = vsub.f32 %v2710, %v2710
        %v3217 = vand.u32 %v3216, 4294901760
        %3218 = vmatprep.subr.mxu0 %v3217
        %v3219 = vsub.f32 %v2709, %v2709
        %v3220 = vand.u32 %v3219, 4294901760
        %3221 = vmatpush1.msra.mxu0 %v3220
        %v3222 = vsub.f32 %v2712, %v2712
        %v3223 = vand.u32 %v3222, 4294901760
        %3224 = vmatprep.subr.mxu0 %v3223
        %v3225 = vsub.f32 %v2711, %v2711
        %v3226 = vand.u32 %v3225, 4294901760
        %3227 = vmatpush1.msra.mxu0 %v3226
        %v3228 = vsub.f32 %v2714, %v2714
        %v3229 = vand.u32 %v3228, 4294901760
        %3230 = vmatprep.subr.mxu0 %v3229
        %v3231 = vsub.f32 %v2713, %v2713
        %v3232 = vand.u32 %v3231, 4294901760
        %3233 = vmatpush1.msra.mxu0 %v3232
        %v3234 = vsub.f32 %v2716, %v2716
        %v3235 = vand.u32 %v3234, 4294901760
        %3236 = vmatprep.subr.mxu0 %v3235
        %v3237 = vsub.f32 %v2715, %v2715
        %v3238 = vand.u32 %v3237, 4294901760
        %3239 = vmatpush1.msra.mxu0 %v3238
        %v3240 = vsub.f32 %v2718, %v2718
        %v3241 = vand.u32 %v3240, 4294901760
        %3242 = vmatprep.subr.mxu0 %v3241
        %v3243 = vsub.f32 %v2717, %v2717
        %v3244 = vand.u32 %v3243, 4294901760
        %3245 = vmatpush1.msra.mxu0 %v3244
        %v3246 = vsub.f32 %v2720, %v2720
        %v3247 = vand.u32 %v3246, 4294901760
        %3248 = vmatprep.subr.mxu0 %v3247
        %v3249 = vsub.f32 %v2719, %v2719
        %v3250 = vand.u32 %v3249, 4294901760
        %3251 = vmatpush1.msra.mxu0 %v3250
        %v3252 = vsub.f32 %v2722, %v2722
        %v3253 = vand.u32 %v3252, 4294901760
        %3254 = vmatprep.subr.mxu0 %v3253
        %v3255 = vsub.f32 %v2721, %v2721
        %v3256 = vand.u32 %v3255, 4294901760
        %3257 = vmatpush1.msra.mxu0 %v3256
        %v3258 = vsub.f32 %v2724, %v2724
        %v3259 = vand.u32 %v3258, 4294901760
        %3260 = vmatprep.subr.mxu0 %v3259
        %v3261 = vsub.f32 %v2723, %v2723
        %v3262 = vand.u32 %v3261, 4294901760
        %3263 = vmatpush1.msra.mxu0 %v3262
        %v3264 = vsub.f32 %v2726, %v2726
        %v3265 = vand.u32 %v3264, 4294901760
        %3266 = vmatprep.subr.mxu0 %v3265
        %v3267 = vsub.f32 %v2725, %v2725
        %v3268 = vand.u32 %v3267, 4294901760
        %3269 = vmatpush1.msra.mxu0 %v3268
        %v3270 = vsub.f32 %v2728, %v2728
        %v3271 = vand.u32 %v3270, 4294901760
        %3272 = vmatprep.subr.mxu0 %v3271
        %v3273 = vsub.f32 %v2727, %v2727
        %v3274 = vand.u32 %v3273, 4294901760
        %3275 = vmatpush1.msra.mxu0 %v3274
        %v3276 = vsub.f32 %v2730, %v2730
        %v3277 = vand.u32 %v3276, 4294901760
        %3278 = vmatprep.subr.mxu0 %v3277
        %v3279 = vsub.f32 %v2729, %v2729
        %v3280 = vand.u32 %v3279, 4294901760
        %3281 = vmatpush1.msra.mxu0 %v3280
        %3282 = vmatprep.subr.mxu0 0.0
        %3283 = vmatpush1.msra.mxu0 0.0
        %3284 = vmatprep.subr.mxu0 0.0
        %3285 = vmatpush1.msra.mxu0 0.0
        %3286 = vmatprep.subr.mxu0 0.0
        %3287 = vmatpush1.msra.mxu0 0.0
        %3288 = vmatprep.subr.mxu0 0.0
        %3289 = vmatpush1.msra.mxu0 0.0
        %3290 = vmatprep.subr.mxu0 0.0
        %3291 = vmatpush1.msra.mxu0 0.0
        %3292 = vmatprep.subr.mxu0 0.0
        %3293 = vmatpush1.msra.mxu0 0.0
        %3294 = vmatprep.subr.mxu0 0.0
        %3295 = vmatpush1.msra.mxu0 0.0
        %3296 = vmatprep.subr.mxu0 0.0
        %3297 = vmatpush1.msra.mxu0 0.0
        %3298 = vmatprep.subr.mxu0 0.0
        %3299 = vmatpush1.msra.mxu0 0.0
        %3300 = vmatprep.subr.mxu0 0.0
        %3301 = vmatpush1.msra.mxu0 0.0
        %3302 = vmatprep.subr.mxu0 0.0
        %3303 = vmatpush1.msra.mxu0 0.0
        %3304 = vmatprep.subr.mxu0 0.0
        %3305 = vmatpush1.msra.mxu0 0.0
        %3306 = vmatprep.subr.mxu0 0.0
        %3307 = vmatpush1.msra.mxu0 0.0
        %3308 = vmatprep.subr.mxu0 0.0
        %3309 = vmatpush1.msra.mxu0 0.0
        %3310 = vmatprep.subr.mxu0 0.0
        %3311 = vmatpush1.msra.mxu0 0.0
        %3312 = vmatprep.subr.mxu0 0.0
        %3313 = vmatpush1.msra.mxu0 0.0
        %3314 = vmatprep.mubr.f32.mxu0 0.0
        %v3315 = vand.u32 %v181, 4294901760
        %3316 = vmatmul.mubr.f32.gmra.mrb[0].mxu0 %v3315
        %v3317 = vpop.f32.mrb[0].mxu0
        %v3318 = vadd.f32 %v3182, %v3317
        %v3319 = vpop.f32.mrb[0].mxu0
        %v3320 = vadd.f32 %v3184, %v3319
        %3321 = vdwg.mxu0
        %3322 = vmatprep.subr.mxu0 %v2700
        %3323 = vmatpush1.msra.mxu0 %v2699
        %3324 = vmatprep.subr.mxu0 %v2702
        %3325 = vmatpush1.msra.mxu0 %v2701
        %3326 = vmatprep.subr.mxu0 %v2704
        %3327 = vmatpush1.msra.mxu0 %v2703
        %3328 = vmatprep.subr.mxu0 %v2706
        %3329 = vmatpush1.msra.mxu0 %v2705
        %3330 = vmatprep.subr.mxu0 %v2708
        %3331 = vmatpush1.msra.mxu0 %v2707
        %3332 = vmatprep.subr.mxu0 %v2710
        %3333 = vmatpush1.msra.mxu0 %v2709
        %3334 = vmatprep.subr.mxu0 %v2712
        %3335 = vmatpush1.msra.mxu0 %v2711
        %3336 = vmatprep.subr.mxu0 %v2714
        %3337 = vmatpush1.msra.mxu0 %v2713
        %3338 = vmatprep.subr.mxu0 %v2716
        %3339 = vmatpush1.msra.mxu0 %v2715
        %3340 = vmatprep.subr.mxu0 %v2718
        %3341 = vmatpush1.msra.mxu0 %v2717
        %3342 = vmatprep.subr.mxu0 %v2720
        %3343 = vmatpush1.msra.mxu0 %v2719
        %3344 = vmatprep.subr.mxu0 %v2722
        %3345 = vmatpush1.msra.mxu0 %v2721
        %3346 = vmatprep.subr.mxu0 %v2724
        %3347 = vmatpush1.msra.mxu0 %v2723
        %3348 = vmatprep.subr.mxu0 %v2726
        %3349 = vmatpush1.msra.mxu0 %v2725
        %3350 = vmatprep.subr.mxu0 %v2728
        %3351 = vmatpush1.msra.mxu0 %v2727
        %3352 = vmatprep.subr.mxu0 %v2730
        %3353 = vmatpush1.msra.mxu0 %v2729
        %3354 = vmatprep.subr.mxu0 0.0
        %3355 = vmatpush1.msra.mxu0 0.0
        %3356 = vmatprep.subr.mxu0 0.0
        %3357 = vmatpush1.msra.mxu0 0.0
        %3358 = vmatprep.subr.mxu0 0.0
        %3359 = vmatpush1.msra.mxu0 0.0
        %3360 = vmatprep.subr.mxu0 0.0
        %3361 = vmatpush1.msra.mxu0 0.0
        %3362 = vmatprep.subr.mxu0 0.0
        %3363 = vmatpush1.msra.mxu0 0.0
        %3364 = vmatprep.subr.mxu0 0.0
        %3365 = vmatpush1.msra.mxu0 0.0
        %3366 = vmatprep.subr.mxu0 0.0
        %3367 = vmatpush1.msra.mxu0 0.0
        %3368 = vmatprep.subr.mxu0 0.0
        %3369 = vmatpush1.msra.mxu0 0.0
        %3370 = vmatprep.subr.mxu0 0.0
        %3371 = vmatpush1.msra.mxu0 0.0
        %3372 = vmatprep.subr.mxu0 0.0
        %3373 = vmatpush1.msra.mxu0 0.0
        %3374 = vmatprep.subr.mxu0 0.0
        %3375 = vmatpush1.msra.mxu0 0.0
        %3376 = vmatprep.subr.mxu0 0.0
        %3377 = vmatpush1.msra.mxu0 0.0
        %3378 = vmatprep.subr.mxu0 0.0
        %3379 = vmatpush1.msra.mxu0 0.0
        %3380 = vmatprep.subr.mxu0 0.0
        %3381 = vmatpush1.msra.mxu0 0.0
        %3382 = vmatprep.subr.mxu0 0.0
        %3383 = vmatpush1.msra.mxu0 0.0
        %3384 = vmatprep.subr.mxu0 0.0
        %3385 = vmatpush1.msra.mxu0 0.0
        %3386 = vmatprep.mubr.f32.mxu0 0.0
        %v3387 = vand.u32 %v181, 4294901760
        %3388 = vmatmul.mubr.f32.gmra.mrb[0].mxu0 %v3387
        %v3389 = vpop.f32.mrb[0].mxu0
        %v3390 = vadd.f32 %v3318, %v3389
        %v3391 = vpop.f32.mrb[0].mxu0
        %v3392 = vadd.f32 %v3320, %v3391
        %3393 = vdwg.mxu0
        %vm3394 = vcmp.eq.s32.totalorder %v2658, 1
        %v3397 = vcombine.low %v3390, %v3392
        %v3399 = vunpack.c.l.s4 1966171168
        %v3400 = vunpack.c.0.s8 %v3399
        %v3401 = vlaneseq
        %v3402 = vshrl.u32 %v3401, 7
        %v3403 = vsub.s32 %v3400, %v3402
        %v3404 = vrot.slane %v3397, %v3403
        %v3405 = vcombine.high %v3404, %v3404
        %v3407 = vunpack.c.l.s4 1966171168
        %v3408 = vunpack.c.0.s8 %v3407
        %v3409 = vlaneseq
        %v3410 = vshrl.u32 %v3409, 7
        %v3411 = vsub.s32 %v3408, %v3410
        %v3412 = vrot.slane %v3405, %v3411
        %v3415 = vunpack.c.l.s4 1966171168
        %v3416 = vunpack.c.0.s8 %v3415
        %v3417 = vlaneseq
        %v3418 = vshrl.u32 %v3417, 7
        %v3419 = vsub.s32 %v3416, %v3418
        %v3420 = vrot.slane %v3404, %v3419
        %v3422 = vsel %vm3394, %v3412, %v3420
        %vm3423 = vcmp.eq.s32.totalorder %v2658, 2
        %v3424 = vcombine.high %v3420, %v3420
        %v3426 = vsel %vm3423, %v3424, %v3422
        %vm3427 = vcmp.eq.s32.totalorder %v2658, 3
        %v3428 = vcombine.high %v3412, %v3412
        %v3430 = vsel %vm3427, %v3428, %v3426
        %vm3431 = vcmp.eq.s32.totalorder %v2658, 4
        %v3432 = vcombine.high %v3390, %v3392
        %v3434 = vunpack.c.l.s4 1966171168
        %v3435 = vunpack.c.0.s8 %v3434
        %v3436 = vlaneseq
        %v3437 = vshrl.u32 %v3436, 7
        %v3438 = vsub.s32 %v3435, %v3437
        %v3439 = vrot.slane %v3432, %v3438
        %v3441 = vunpack.c.l.s4 1966171168
        %v3442 = vunpack.c.0.s8 %v3441
        %v3443 = vlaneseq
        %v3444 = vshrl.u32 %v3443, 7
        %v3445 = vsub.s32 %v3442, %v3444
        %v3446 = vrot.slane %v3439, %v3445
        %v3448 = vsel %vm3431, %v3446, %v3430
        %vm3449 = vcmp.eq.s32.totalorder %v2658, 5
        %v3450 = vcombine.high %v3439, %v3439
        %v3452 = vunpack.c.l.s4 1966171168
        %v3453 = vunpack.c.0.s8 %v3452
        %v3454 = vlaneseq
        %v3455 = vshrl.u32 %v3454, 7
        %v3456 = vsub.s32 %v3453, %v3455
        %v3457 = vrot.slane %v3450, %v3456
        %v3459 = vsel %vm3449, %v3457, %v3448
        %vm3460 = vcmp.eq.s32.totalorder %v2658, 6
        %v3461 = vcombine.high %v3446, %v3446
        %v3463 = vsel %vm3460, %v3461, %v3459
        %vm3464 = vcmp.eq.s32.totalorder %v2658, 7
        %v3465 = vcombine.high %v3457, %v3457
        %v3467 = vsel %vm3464, %v3465, %v3463
        %s3468 = scalar_lea.vmem %s177, 3 [#allocation9]
        %3469 = vst.msk [vmem:[%s3468] ss:$4 sm:$0x3] %vm1017, %v3467
        %s3470 = sand.u32 %s80, 1
        %s3471 = scalar_lea.sflag [#allocation6], %s3470
        %s3472 = sand.u32 %s80, 1
        %s3473 = smul.addr %s3472, 8
        %s3474 = scalar_lea.vmem [#allocation9], %s3473
        // Predicated region
        $region37: #{tpu_custom_call.1} parent=27 // pred_check
          %p3475 = pneg %p90
        $region38: #{tpu_custom_call.1} parent=27 // pred_check_branch
          %3477 = sbr.rel (%p3475) target = $region40
        $region39: #{tpu_custom_call.1} parent=27 // pred_region
          %s3478 = smul.u32 2, %s25
          %s3480 = ssub.s32 128, 128
          %3481 = vsyncadd %s3471, %s3480
          %s3482 = smul.addr %s3478, 64
          %s3483 = scalar_lea.hbm %s3, %s3482
          %s3485 = sshll.u32 %s3474, 4
          %s3486 = int_to_ptr.vmem [resolvable:$true] %s3485
          %3488 = dma.vmem_to_hbm [thread:$0]  %s3486, 128, %s3483, %s3471
        $region40: #{tpu_custom_call.1} parent=27 // pred_fallthru
          _
      $region28: #{tpu_custom_call.1} parent=5 // pred_fallthru
        _
      %p3489 = scmp.le.s32.totalorder 2, %s20
      // Predicated region
      $region41: #{tpu_custom_call.1} parent=5 // pred_check
        %p3490 = pneg %p3489
      $region42: #{tpu_custom_call.1} parent=5 // pred_check_branch
        %3492 = sbr.rel (%p3490) target = $region44
      $region43: #{tpu_custom_call.1} parent=5 // pred_region
        %s3493 = ssub.s32 %s20, 2
        // Predicated region
        $region45: #{tpu_custom_call.1} parent=43 // pred_check
          %p3494 = pneg %p96
        $region46: #{tpu_custom_call.1} parent=43 // pred_check_branch
          %3496 = sbr.rel (%p3494) target = $region48
        $region47: #{tpu_custom_call.1} parent=43 // pred_region
          %s3497 = sand.u32 %s81, 1
          %s3498 = scalar_lea.sflag [#allocation6], %s3497
          %s3499 = sand.u32 %s81, 1
          %s3500 = smul.addr %s3499, 8
          %s3501 = scalar_lea.vmem [#allocation9], %s3500
          %3502 = dma.done %s3498, 128
        $region48: #{tpu_custom_call.1} parent=43 // pred_fallthru
          _
      $region44: #{tpu_custom_call.1} parent=5 // pred_fallthru
        _
    $region6: #{tpu_custom_call.1} parent=1 // loop_footer
      %s24 = sadd.s32 1, %s20
    $region7: #{tpu_custom_call.1} parent=1 // loop_footer_branch
      %19 = sbr.rel target = $region3
    $region8: #{tpu_custom_call.1} parent=1 // loop_exit
      _
    %3503 = vsyncpa [#allocation5], 1
    %s3504 = scalar_lea.sflag [#allocation5], 1
    %3505 = vsyncpa %s3504, 1
    %3506 = vsyncpa [#allocation8], 1
    %3507 = vsyncpa [#allocation6], 1
    %s3508 = scalar_lea.sflag [#allocation6], 1
    %3509 = vsyncpa %s3508, 1

</llo_original>
